<compile_context>
chip_gen: v6e
topology: v6e:2x2x1
jax: 0.10.0
libtpu: 0.0.40
codegen_flags: <defaults>
</compile_context>

<pallas_src>
import functools

import jax
import jax.numpy as jnp
from jax import lax
from jax.experimental import pallas as pl
from jax.experimental.pallas import tpu as pltpu

BN_EPS = 1e-5


def _pick_tile_rows(n):
    for t in (2048, 1024, 512, 256, 128, 64, 32, 16, 8):
        if n % t == 0:
            return t
    raise ValueError("num_points must be a multiple of 8")


def _pointnetfeat_kernel(B, N, tm, tpb,
                         x_ref,
                         w1_ref, g1_ref, be1_ref,
                         w2_ref, g2_ref, be2_ref,
                         w3_ref, g3_ref, be3_ref,
                         out_ref,
                         s1, q1, cs1, G1, cs2, G2,
                         sc1, sh1, sc2, sh2, mx3):
    M = B * N
    inv_m = 1.0 / float(M)

    p = pl.program_id(0)      # phase
    b = pl.program_id(1)      # batch
    j = pl.program_id(2)      # row tile within batch
    first = jnp.logical_and(b == 0, j == 0)
    last = jnp.logical_and(b == B - 1, j == tpb - 1)

    def y1_of_x():
        # Layer 1 conv1d(3->64, k=1): 3 broadcasted FMAs on the VPU (avoids a K=3 matmul).
        x = x_ref[...]                                   # (tm, 3) f32
        w1 = w1_ref[...]                                 # (3, 64) f32
        return (x[:, 0:1] * w1[0:1, :]
                + x[:, 1:2] * w1[1:2, :]
                + x[:, 2:3] * w1[2:3, :])                # (tm, 64) f32

    # ---- one-time init of all carried accumulators -------------------------
    @pl.when(jnp.logical_and(p == 0, first))
    def _init():
        s1[...] = jnp.zeros_like(s1)
        q1[...] = jnp.zeros_like(q1)
        cs1[...] = jnp.zeros_like(cs1)
        G1[...] = jnp.zeros_like(G1)
        cs2[...] = jnp.zeros_like(cs2)
        G2[...] = jnp.zeros_like(G2)
        mx3[...] = jnp.full(mx3.shape, -jnp.inf, jnp.float32)

    # ---- phase 0: BN1 statistics of raw y1 = x @ w1 -------------------------
    @pl.when(p == 0)
    def _phase0():
        y1 = y1_of_x()
        s1[...] += jnp.sum(y1, axis=0, keepdims=True)
        q1[...] += jnp.sum(y1 * y1, axis=0, keepdims=True)

    # ---- phase 1: h1 = relu(BN1(y1)); accumulate colsum(h1) and Gram(h1) ----
    @pl.when(p == 1)
    def _phase1():
        @pl.when(first)
        def _():                                           # hoist BN1 scale/shift
            mean1 = s1[...] * inv_m
            var1 = jnp.maximum(q1[...] * inv_m - mean1 * mean1, 0.0)
            sc = g1_ref[...] * lax.rsqrt(var1 + BN_EPS)
            sc1[...] = sc
            sh1[...] = be1_ref[...] - mean1 * sc

        h1 = jnp.maximum(y1_of_x() * sc1[...] + sh1[...], 0.0).astype(jnp.bfloat16)
        cs1[...] += jnp.sum(h1.astype(jnp.float32), axis=0, keepdims=True)
        G1[...] += lax.dot_general(h1, h1, (((0,), (0,)), ((), ())),
                                   preferred_element_type=jnp.float32)     # (64, 64)

    # ---- phase 2: h2 = relu(BN2(y2)); y3 = h2 @ w3 fused with per-batch max --
    @pl.when(p == 2)
    def _phase2():
        @pl.when(first)
        def _():                                           # derive + hoist BN2 scale/shift
            w2f = w2_ref[...].astype(jnp.float32)                          # (64, 128)
            mh1 = jnp.broadcast_to(cs1[...] * inv_m, (8, 64))              # avoid M=1 matmul
            mean2 = jnp.dot(mh1, w2f, preferred_element_type=jnp.float32)[0:1, :]
            ey2sq = jnp.sum(
                w2f * jnp.dot(G1[...], w2f, preferred_element_type=jnp.float32),
                axis=0, keepdims=True) * inv_m
            var2 = jnp.maximum(ey2sq - mean2 * mean2, 0.0)
            sc = g2_ref[...] * lax.rsqrt(var2 + BN_EPS)
            sc2[...] = sc
            sh2[...] = be2_ref[...] - mean2 * sc

        h1 = jnp.maximum(y1_of_x() * sc1[...] + sh1[...], 0.0).astype(jnp.bfloat16)
        y2 = jnp.dot(h1, w2_ref[...], preferred_element_type=jnp.float32)  # (tm, 128)
        h2 = jnp.maximum(y2 * sc2[...] + sh2[...], 0.0).astype(jnp.bfloat16)
        y3 = jnp.dot(h2, w3_ref[...], preferred_element_type=jnp.float32)  # (tm, 1024)

        cs2[...] += jnp.sum(h2.astype(jnp.float32), axis=0, keepdims=True)
        G2[...] += lax.dot_general(h2, h2, (((0,), (0,)), ((), ())),
                                   preferred_element_type=jnp.float32)     # (128, 128)
        row = pl.ds(b, 1)
        mx3[row, :] = jnp.maximum(mx3[row, :], jnp.max(y3, axis=0, keepdims=True))

    # ---- finalize: BN3 affine (gamma3 >= 0 after sign folding) on the max ----
    @pl.when(jnp.logical_and(p == 2, last))
    def _finalize():
        w3f = w3_ref[...].astype(jnp.float32)                              # (128, 1024)
        mh2 = jnp.broadcast_to(cs2[...] * inv_m, (8, 128))
        mean3 = jnp.dot(mh2, w3f, preferred_element_type=jnp.float32)[0:1, :]
        ey3sq = jnp.sum(
            w3f * jnp.dot(G2[...], w3f, preferred_element_type=jnp.float32),
            axis=0, keepdims=True) * inv_m
        var3 = jnp.maximum(ey3sq - mean3 * mean3, 0.0)
        scale3 = g3_ref[...] * lax.rsqrt(var3 + BN_EPS)    # g3_ref holds |gamma3| >= 0
        shift3 = be3_ref[...] - mean3 * scale3
        out_ref[...] = mx3[...] * scale3 + shift3          # (B, 1024)


def pointnetfeat_forward(x, params, tile_rows=None):
    """x: (B, 3, N) float32 (PyTorch NCW).  Returns (B, 1024) float32."""
    B, C_in, N = x.shape
    assert C_in == 3
    (w1, b1, g1, be1, w2, b2, g2, be2, w3, b3, g3, be3) = params
    del b1, b2, b3   # conv biases cancel exactly under training-mode BatchNorm

    if tile_rows is None:
        tile_rows = _pick_tile_rows(N)
    assert N % tile_rows == 0 and tile_rows % 8 == 0
    M = B * N
    tpb = N // tile_rows

    # Glue: NCW -> (B*N, 3) point-feature rows.
    x2d = jnp.transpose(x, (0, 2, 1)).reshape(M, C_in)

    # Fold sign(gamma3) into w3 so BN3's per-channel affine is non-decreasing
    # (exact: the sign commutes through the matmul and the batch normalization).
    sgn3 = jnp.where(g3 >= 0.0, 1.0, -1.0)
    w3s = (w3 * sgn3).astype(jnp.bfloat16)
    g3a = jnp.abs(g3)
    w2b = w2.astype(jnp.bfloat16)

    kernel = functools.partial(_pointnetfeat_kernel, B, N, tile_rows, tpb)

    def fixed2(r, c):
        return pl.BlockSpec((r, c), lambda p, b, j: (0, 0))

    grid_spec = pltpu.PrefetchScalarGridSpec(
        num_scalar_prefetch=0,
        grid=(3, B, tpb),                                  # (phase, batch, tile) sequential
        in_specs=[
            pl.BlockSpec((tile_rows, 3), lambda p, b, j: (b * tpb + j, 0)),  # x (streamed)
            fixed2(3, 64), fixed2(1, 64), fixed2(1, 64),           # w1, g1, be1
            fixed2(64, 128), fixed2(1, 128), fixed2(1, 128),       # w2, g2, be2
            fixed2(128, 1024), fixed2(1, 1024), fixed2(1, 1024),   # w3(signed), |g3|, be3
        ],
        out_specs=pl.BlockSpec((B, 1024), lambda p, b, j: (0, 0)),
        scratch_shapes=[
            pltpu.VMEM((1, 64), jnp.float32),     # s1   (sum y1)
            pltpu.VMEM((1, 64), jnp.float32),     # q1   (sumsq y1)
            pltpu.VMEM((1, 64), jnp.float32),     # cs1  (colsum h1)
            pltpu.VMEM((64, 64), jnp.float32),    # G1   (h1^T h1)
            pltpu.VMEM((1, 128), jnp.float32),    # cs2  (colsum h2)
            pltpu.VMEM((128, 128), jnp.float32),  # G2   (h2^T h2)
            pltpu.VMEM((1, 64), jnp.float32),     # scale1 (hoisted)
            pltpu.VMEM((1, 64), jnp.float32),     # shift1
            pltpu.VMEM((1, 128), jnp.float32),    # scale2
            pltpu.VMEM((1, 128), jnp.float32),    # shift2
            pltpu.VMEM((B, 1024), jnp.float32),   # per-batch running max of raw y3
        ],
    )

    flops = 2 * M * (3 * (3 * 64)       # y1 recomputed in each phase
                     + 64 * 64          # Gram(h1)
                     + 64 * 128         # y2
                     + 128 * 128        # Gram(h2)
                     + 128 * 1024)      # y3
    bytes_accessed = (3 * M * 3 * 4                       # x streamed once per phase
                      + (3 * 64) * 4 + (64 * 128) * 2 + (128 * 1024) * 2
                      + (2 * 64 + 2 * 128 + 2 * 1024) * 4
                      + B * 1024 * 4)

    # VMEM: footprint is tile-size bound (no M-scaled residents).  Keep the cap v7x-safe.
    vmem_est = (2 * tile_rows * 128 * 4          # double-buffered x tile (lane-padded)
                + tile_rows * 1024 * 4           # y3 f32 temp
                + tile_rows * 128 * 4            # y2 f32 temp
                + tile_rows * (64 * 4 + 64 * 2 + 128 * 2)   # y1 / h1 / h2 temps
                + 2 * (128 * 1024 + 64 * 128) * 2 + 2 * 3 * 64 * 4   # weights (dbl-buffered)
                + (128 * 128 + 64 * 64) * 4      # Gram scratch
                + B * 1024 * 4 + 64 * 1024)      # max scratch + small vectors
    vmem_limit = int(min(48 * 2**20, max(32 * 2**20, vmem_est + (16 << 20))))

    out = pl.pallas_call(
        kernel,
        out_shape=jax.ShapeDtypeStruct((B, 1024), jnp.float32),
        grid_spec=grid_spec,
        compiler_params=pltpu.CompilerParams(
            dimension_semantics=("arbitrary", "arbitrary", "arbitrary"),
            vmem_limit_bytes=vmem_limit),
        cost_estimate=pl.CostEstimate(
            flops=flops, transcendentals=0, bytes_accessed=bytes_accessed),
    )(x2d, w1, g1, be1, w2b, g2, be2, w3s, g3a, be3)
    return out


def make_params(key):
    """Synthetic parameters matching PointNetfeat_ shapes.

    Conv1d(Cin, Cout, 1) weight stored as (Cin, Cout); per-channel vectors as (1, C).
    The last layer's gamma has mixed signs so the sign-folding path is exercised.
    """
    ks = jax.random.split(key, 12)
    dims = [(3, 64), (64, 128), (128, 1024)]
    params = []
    for i, (cin, cout) in enumerate(dims):
        w = jax.random.normal(ks[4 * i + 0], (cin, cout), jnp.float32) * 0.1
        b = jax.random.normal(ks[4 * i + 1], (1, cout), jnp.float32) * 0.1
        if i < 2:
            gamma = 1.0 + 0.1 * jax.random.normal(ks[4 * i + 2], (1, cout), jnp.float32)
        else:
            gamma = jax.random.normal(ks[4 * i + 2], (1, cout), jnp.float32)
        beta = 0.1 * jax.random.normal(ks[4 * i + 3], (1, cout), jnp.float32)
        params += [w, b, gamma, beta]
    return tuple(params)


def reference_forward(x, params):
    """Plain-JAX f32 reference matching the PyTorch module (training-mode BN, with biases)."""
    B, _, N = x.shape
    h = jnp.transpose(x, (0, 2, 1)).reshape(B * N, 3)
    (w1, b1, g1, be1, w2, b2, g2, be2, w3, b3, g3, be3) = params

    def blk(h, w, b, g, be, relu):
        y = h @ w + b
        mu = jnp.mean(y, axis=0, keepdims=True)
        var = jnp.mean((y - mu) ** 2, axis=0, keepdims=True)
        y = g * (y - mu) / jnp.sqrt(var + BN_EPS) + be
        return jnp.maximum(y, 0.0) if relu else y

    h = blk(h, w1, b1, g1, be1, True)
    h = blk(h, w2, b2, g2, be2, True)
    h = blk(h, w3, b3, g3, be3, False)
    return jnp.max(h.reshape(B, N, 1024), axis=1)


if __name__ == "__main__":
    key = jax.random.PRNGKey(0)
    k_x, k_p = jax.random.split(key)

    # Small shapes (module default num_points is 40*256=10240; same code path).
    B, N = 2, 512
    x = jax.random.normal(k_x, (B, 3, N), jnp.float32)
    params = make_params(k_p)

    # tile_rows=128 -> 4 tiles per batch: exercises cross-tile stats & per-batch max.
    out = jax.block_until_ready(pointnetfeat_forward(x, params, tile_rows=128))
    ref = jax.block_until_ready(reference_forward(x, params))

    assert out.shape == (B, 1024)
    assert bool(jnp.all(jnp.isfinite(out)))
    # bf16 MXU operands vs f32 reference -> modest tolerance.
    assert jnp.allclose(out, ref, atol=5e-2, rtol=5e-2), (
        f"max abs err {float(jnp.max(jnp.abs(out - ref)))}")

    print("KERNEL_OK")
</pallas_src>

<mosaic_0001>
module attributes {stable_mosaic.version = 11 : i64} {
  func.func @_pointnetfeat_kernel(%arg0: i32, %arg1: i32, %arg2: i32, %arg3: memref<128x3xf32, #tpu.memory_space<vmem>>, %arg4: memref<3x64xf32, #tpu.memory_space<vmem>>, %arg5: memref<1x64xf32, #tpu.memory_space<vmem>>, %arg6: memref<1x64xf32, #tpu.memory_space<vmem>>, %arg7: memref<64x128xbf16, #tpu.memory_space<vmem>>, %arg8: memref<1x128xf32, #tpu.memory_space<vmem>>, %arg9: memref<1x128xf32, #tpu.memory_space<vmem>>, %arg10: memref<128x1024xbf16, #tpu.memory_space<vmem>>, %arg11: memref<1x1024xf32, #tpu.memory_space<vmem>>, %arg12: memref<1x1024xf32, #tpu.memory_space<vmem>>, %arg13: memref<2x1024xf32, #tpu.memory_space<vmem>>, %arg14: memref<1x64xf32, #tpu.memory_space<vmem>>, %arg15: memref<1x64xf32, #tpu.memory_space<vmem>>, %arg16: memref<1x64xf32, #tpu.memory_space<vmem>>, %arg17: memref<64x64xf32, #tpu.memory_space<vmem>>, %arg18: memref<1x128xf32, #tpu.memory_space<vmem>>, %arg19: memref<128x128xf32, #tpu.memory_space<vmem>>, %arg20: memref<1x64xf32, #tpu.memory_space<vmem>>, %arg21: memref<1x64xf32, #tpu.memory_space<vmem>>, %arg22: memref<1x128xf32, #tpu.memory_space<vmem>>, %arg23: memref<1x128xf32, #tpu.memory_space<vmem>>, %arg24: memref<2x1024xf32, #tpu.memory_space<vmem>>) attributes {dimension_semantics = [#tpu.dimension_semantics<arbitrary>, #tpu.dimension_semantics<arbitrary>, #tpu.dimension_semantics<arbitrary>], iteration_bounds = array<i64: 3, 2, 4>, scalar_prefetch = 0 : i64, scratch_operands = 11 : i64, tpu.core_type = #tpu.core_type<tc>, window_params = [{transform_indices = @transform_0, window_bounds = array<i64: 128, 3>}, {pipeline_mode = #tpu.pipeline_mode<synchronous>, transform_indices = @transform_1, window_bounds = array<i64: 3, 64>}, {pipeline_mode = #tpu.pipeline_mode<synchronous>, transform_indices = @transform_2, window_bounds = array<i64: 1, 64>}, {pipeline_mode = #tpu.pipeline_mode<synchronous>, transform_indices = @transform_3, window_bounds = array<i64: 1, 64>}, {pipeline_mode = #tpu.pipeline_mode<synchronous>, transform_indices = @transform_4, window_bounds = array<i64: 64, 128>}, {pipeline_mode = #tpu.pipeline_mode<synchronous>, transform_indices = @transform_5, window_bounds = array<i64: 1, 128>}, {pipeline_mode = #tpu.pipeline_mode<synchronous>, transform_indices = @transform_6, window_bounds = array<i64: 1, 128>}, {pipeline_mode = #tpu.pipeline_mode<synchronous>, transform_indices = @transform_7, window_bounds = array<i64: 128, 1024>}, {pipeline_mode = #tpu.pipeline_mode<synchronous>, transform_indices = @transform_8, window_bounds = array<i64: 1, 1024>}, {pipeline_mode = #tpu.pipeline_mode<synchronous>, transform_indices = @transform_9, window_bounds = array<i64: 1, 1024>}, {pipeline_mode = #tpu.pipeline_mode<synchronous>, transform_indices = @transform_10, window_bounds = array<i64: 2, 1024>}]} {
    %c0_i32 = arith.constant 0 : i32
    %0 = arith.cmpi eq, %arg1, %c0_i32 : i32
    %c0_i32_0 = arith.constant 0 : i32
    %1 = arith.cmpi eq, %arg2, %c0_i32_0 : i32
    %2 = arith.andi %0, %1 : i1
    %c1_i32 = arith.constant 1 : i32
    %3 = arith.cmpi eq, %arg1, %c1_i32 : i32
    %c3_i32 = arith.constant 3 : i32
    %4 = arith.cmpi eq, %arg2, %c3_i32 : i32
    %5 = arith.andi %3, %4 : i1
    %c0_i32_1 = arith.constant 0 : i32
    %6 = arith.cmpi eq, %arg0, %c0_i32_1 : i32
    %7 = arith.andi %6, %2 : i1
    %8 = arith.extui %7 : i1 to i32
    %c0_i32_2 = arith.constant 0 : i32
    %9 = arith.cmpi ne, %8, %c0_i32_2 : i32
    scf.if %9 {
      %cst = arith.constant 0.000000e+00 : f32
      %23 = vector.broadcast %cst : f32 to vector<1x64xf32>
      %c0 = arith.constant 0 : index
      %c0_10 = arith.constant 0 : index
      %24 = vector.load %arg14[%c0, %c0_10] : memref<1x64xf32, #tpu.memory_space<vmem>>, vector<1x64xf32>
      tpu.vector_store %arg14[%c0, %c0_10], %23 {strides = array<i32>} : memref<1x64xf32, #tpu.memory_space<vmem>>, vector<1x64xf32>,
      %cst_11 = arith.constant 0.000000e+00 : f32
      %25 = vector.broadcast %cst_11 : f32 to vector<1x64xf32>
      %c0_12 = arith.constant 0 : index
      %c0_13 = arith.constant 0 : index
      %26 = vector.load %arg15[%c0_12, %c0_13] : memref<1x64xf32, #tpu.memory_space<vmem>>, vector<1x64xf32>
      tpu.vector_store %arg15[%c0_12, %c0_13], %25 {strides = array<i32>} : memref<1x64xf32, #tpu.memory_space<vmem>>, vector<1x64xf32>,
      %cst_14 = arith.constant 0.000000e+00 : f32
      %27 = vector.broadcast %cst_14 : f32 to vector<1x64xf32>
      %c0_15 = arith.constant 0 : index
      %c0_16 = arith.constant 0 : index
      %28 = vector.load %arg16[%c0_15, %c0_16] : memref<1x64xf32, #tpu.memory_space<vmem>>, vector<1x64xf32>
      tpu.vector_store %arg16[%c0_15, %c0_16], %27 {strides = array<i32>} : memref<1x64xf32, #tpu.memory_space<vmem>>, vector<1x64xf32>,
      %cst_17 = arith.constant 0.000000e+00 : f32
      %29 = vector.broadcast %cst_17 : f32 to vector<64x64xf32>
      %c0_18 = arith.constant 0 : index
      %c0_19 = arith.constant 0 : index
      %30 = vector.load %arg17[%c0_18, %c0_19] : memref<64x64xf32, #tpu.memory_space<vmem>>, vector<64x64xf32>
      tpu.vector_store %arg17[%c0_18, %c0_19], %29 {strides = array<i32>} : memref<64x64xf32, #tpu.memory_space<vmem>>, vector<64x64xf32>,
      %cst_20 = arith.constant 0.000000e+00 : f32
      %31 = vector.broadcast %cst_20 : f32 to vector<1x128xf32>
      %c0_21 = arith.constant 0 : index
      %c0_22 = arith.constant 0 : index
      %32 = vector.load %arg18[%c0_21, %c0_22] : memref<1x128xf32, #tpu.memory_space<vmem>>, vector<1x128xf32>
      tpu.vector_store %arg18[%c0_21, %c0_22], %31 {strides = array<i32>} : memref<1x128xf32, #tpu.memory_space<vmem>>, vector<1x128xf32>,
      %cst_23 = arith.constant 0.000000e+00 : f32
      %33 = vector.broadcast %cst_23 : f32 to vector<128x128xf32>
      %c0_24 = arith.constant 0 : index
      %c0_25 = arith.constant 0 : index
      %34 = vector.load %arg19[%c0_24, %c0_25] : memref<128x128xf32, #tpu.memory_space<vmem>>, vector<128x128xf32>
      tpu.vector_store %arg19[%c0_24, %c0_25], %33 {strides = array<i32>} : memref<128x128xf32, #tpu.memory_space<vmem>>, vector<128x128xf32>,
      %cst_26 = arith.constant 0xFF800000 : f32
      %35 = vector.broadcast %cst_26 : f32 to vector<2x1024xf32>
      %c0_27 = arith.constant 0 : index
      %c0_28 = arith.constant 0 : index
      %36 = vector.load %arg24[%c0_27, %c0_28] : memref<2x1024xf32, #tpu.memory_space<vmem>>, vector<2x1024xf32>
      tpu.vector_store %arg24[%c0_27, %c0_28], %35 {strides = array<i32>} : memref<2x1024xf32, #tpu.memory_space<vmem>>, vector<2x1024xf32>,
    } else {
    }
    %c0_i32_3 = arith.constant 0 : i32
    %10 = arith.cmpi eq, %arg0, %c0_i32_3 : i32
    %11 = arith.extui %10 : i1 to i32
    %c0_i32_4 = arith.constant 0 : i32
    %12 = arith.cmpi ne, %11, %c0_i32_4 : i32
    scf.if %12 {
      %c0 = arith.constant 0 : index
      %c0_10 = arith.constant 0 : index
      %23 = vector.load %arg3[%c0, %c0_10] : memref<128x3xf32, #tpu.memory_space<vmem>>, vector<128x3xf32>
      %c0_11 = arith.constant 0 : index
      %c0_12 = arith.constant 0 : index
      %24 = vector.load %arg4[%c0_11, %c0_12] : memref<3x64xf32, #tpu.memory_space<vmem>>, vector<3x64xf32>
      %25 = vector.extract_strided_slice %23 {offsets = [0, 0], sizes = [128, 1], strides = [1, 1]} : vector<128x3xf32> to vector<128x1xf32>
      %26 = vector.extract_strided_slice %24 {offsets = [0, 0], sizes = [1, 64], strides = [1, 1]} : vector<3x64xf32> to vector<1x64xf32>
      %27 = vector.broadcast %25 : vector<128x1xf32> to vector<128x64xf32>
      %28 = vector.broadcast %26 : vector<1x64xf32> to vector<128x64xf32>
      %29 = arith.mulf %27, %28 : vector<128x64xf32>
      %30 = vector.extract_strided_slice %23 {offsets = [0, 1], sizes = [128, 1], strides = [1, 1]} : vector<128x3xf32> to vector<128x1xf32>
      %31 = vector.extract_strided_slice %24 {offsets = [1, 0], sizes = [1, 64], strides = [1, 1]} : vector<3x64xf32> to vector<1x64xf32>
      %32 = vector.broadcast %30 : vector<128x1xf32> to vector<128x64xf32>
      %33 = vector.broadcast %31 : vector<1x64xf32> to vector<128x64xf32>
      %34 = arith.mulf %32, %33 : vector<128x64xf32>
      %35 = arith.addf %29, %34 : vector<128x64xf32>
      %36 = vector.extract_strided_slice %23 {offsets = [0, 2], sizes = [128, 1], strides = [1, 1]} : vector<128x3xf32> to vector<128x1xf32>
      %37 = vector.extract_strided_slice %24 {offsets = [2, 0], sizes = [1, 64], strides = [1, 1]} : vector<3x64xf32> to vector<1x64xf32>
      %38 = vector.broadcast %36 : vector<128x1xf32> to vector<128x64xf32>
      %39 = vector.broadcast %37 : vector<1x64xf32> to vector<128x64xf32>
      %40 = arith.mulf %38, %39 : vector<128x64xf32>
      %41 = arith.addf %35, %40 : vector<128x64xf32>
      %c0_13 = arith.constant 0 : index
      %c0_14 = arith.constant 0 : index
      %42 = vector.load %arg14[%c0_13, %c0_14] : memref<1x64xf32, #tpu.memory_space<vmem>>, vector<1x64xf32>
      %cst = arith.constant dense<0.000000e+00> : vector<64xf32>
      %43 = vector.multi_reduction <add>, %41, %cst [0] : vector<128x64xf32> to vector<64xf32>
      %44 = vector.shape_cast %43 : vector<64xf32> to vector<1x64xf32>
      %45 = arith.addf %42, %44 : vector<1x64xf32>
      %c0_15 = arith.constant 0 : index
      %c0_16 = arith.constant 0 : index
      %46 = vector.load %arg14[%c0_15, %c0_16] : memref<1x64xf32, #tpu.memory_space<vmem>>, vector<1x64xf32>
      tpu.vector_store %arg14[%c0_15, %c0_16], %45 {strides = array<i32>} : memref<1x64xf32, #tpu.memory_space<vmem>>, vector<1x64xf32>,
      %c0_17 = arith.constant 0 : index
      %c0_18 = arith.constant 0 : index
      %47 = vector.load %arg15[%c0_17, %c0_18] : memref<1x64xf32, #tpu.memory_space<vmem>>, vector<1x64xf32>
      %48 = arith.mulf %41, %41 : vector<128x64xf32>
      %cst_19 = arith.constant dense<0.000000e+00> : vector<64xf32>
      %49 = vector.multi_reduction <add>, %48, %cst_19 [0] : vector<128x64xf32> to vector<64xf32>
      %50 = vector.shape_cast %49 : vector<64xf32> to vector<1x64xf32>
      %51 = arith.addf %47, %50 : vector<1x64xf32>
      %c0_20 = arith.constant 0 : index
      %c0_21 = arith.constant 0 : index
      %52 = vector.load %arg15[%c0_20, %c0_21] : memref<1x64xf32, #tpu.memory_space<vmem>>, vector<1x64xf32>
      tpu.vector_store %arg15[%c0_20, %c0_21], %51 {strides = array<i32>} : memref<1x64xf32, #tpu.memory_space<vmem>>, vector<1x64xf32>,
    } else {
    }
    %c1_i32_5 = arith.constant 1 : i32
    %13 = arith.cmpi eq, %arg0, %c1_i32_5 : i32
    %14 = arith.extui %13 : i1 to i32
    %c0_i32_6 = arith.constant 0 : i32
    %15 = arith.cmpi ne, %14, %c0_i32_6 : i32
    scf.if %15 {
      %23 = arith.extui %2 : i1 to i32
      %c0_i32_10 = arith.constant 0 : i32
      %24 = arith.cmpi ne, %23, %c0_i32_10 : i32
      scf.if %24 {
        %c0_28 = arith.constant 0 : index
        %c0_29 = arith.constant 0 : index
        %63 = vector.load %arg14[%c0_28, %c0_29] : memref<1x64xf32, #tpu.memory_space<vmem>>, vector<1x64xf32>
        %cst_30 = arith.constant 9.765625E-4 : f32
        %64 = vector.broadcast %cst_30 : f32 to vector<1x64xf32>
        %65 = arith.mulf %63, %64 : vector<1x64xf32>
        %c0_31 = arith.constant 0 : index
        %c0_32 = arith.constant 0 : index
        %66 = vector.load %arg15[%c0_31, %c0_32] : memref<1x64xf32, #tpu.memory_space<vmem>>, vector<1x64xf32>
        %cst_33 = arith.constant 9.765625E-4 : f32
        %67 = vector.broadcast %cst_33 : f32 to vector<1x64xf32>
        %68 = arith.mulf %66, %67 : vector<1x64xf32>
        %69 = arith.mulf %65, %65 : vector<1x64xf32>
        %70 = arith.subf %68, %69 : vector<1x64xf32>
        %cst_34 = arith.constant 0.000000e+00 : f32
        %71 = vector.broadcast %cst_34 : f32 to vector<1x64xf32>
        %72 = arith.maximumf %70, %71 : vector<1x64xf32>
        %c0_35 = arith.constant 0 : index
        %c0_36 = arith.constant 0 : index
        %73 = vector.load %arg5[%c0_35, %c0_36] : memref<1x64xf32, #tpu.memory_space<vmem>>, vector<1x64xf32>
        %cst_37 = arith.constant 9.99999974E-6 : f32
        %74 = vector.broadcast %cst_37 : f32 to vector<1x64xf32>
        %75 = arith.addf %72, %74 : vector<1x64xf32>
        %76 = math.rsqrt %75 : vector<1x64xf32>
        %77 = arith.mulf %73, %76 : vector<1x64xf32>
        %c0_38 = arith.constant 0 : index
        %c0_39 = arith.constant 0 : index
        %78 = vector.load %arg20[%c0_38, %c0_39] : memref<1x64xf32, #tpu.memory_space<vmem>>, vector<1x64xf32>
        tpu.vector_store %arg20[%c0_38, %c0_39], %77 {strides = array<i32>} : memref<1x64xf32, #tpu.memory_space<vmem>>, vector<1x64xf32>,
        %c0_40 = arith.constant 0 : index
        %c0_41 = arith.constant 0 : index
        %79 = vector.load %arg6[%c0_40, %c0_41] : memref<1x64xf32, #tpu.memory_space<vmem>>, vector<1x64xf32>
        %80 = arith.mulf %65, %77 : vector<1x64xf32>
        %81 = arith.subf %79, %80 : vector<1x64xf32>
        %c0_42 = arith.constant 0 : index
        %c0_43 = arith.constant 0 : index
        %82 = vector.load %arg21[%c0_42, %c0_43] : memref<1x64xf32, #tpu.memory_space<vmem>>, vector<1x64xf32>
        tpu.vector_store %arg21[%c0_42, %c0_43], %81 {strides = array<i32>} : memref<1x64xf32, #tpu.memory_space<vmem>>, vector<1x64xf32>,
      } else {
      }
      %c0 = arith.constant 0 : index
      %c0_11 = arith.constant 0 : index
      %25 = vector.load %arg3[%c0, %c0_11] : memref<128x3xf32, #tpu.memory_space<vmem>>, vector<128x3xf32>
      %c0_12 = arith.constant 0 : index
      %c0_13 = arith.constant 0 : index
      %26 = vector.load %arg4[%c0_12, %c0_13] : memref<3x64xf32, #tpu.memory_space<vmem>>, vector<3x64xf32>
      %27 = vector.extract_strided_slice %25 {offsets = [0, 0], sizes = [128, 1], strides = [1, 1]} : vector<128x3xf32> to vector<128x1xf32>
      %28 = vector.extract_strided_slice %26 {offsets = [0, 0], sizes = [1, 64], strides = [1, 1]} : vector<3x64xf32> to vector<1x64xf32>
      %29 = vector.broadcast %27 : vector<128x1xf32> to vector<128x64xf32>
      %30 = vector.broadcast %28 : vector<1x64xf32> to vector<128x64xf32>
      %31 = arith.mulf %29, %30 : vector<128x64xf32>
      %32 = vector.extract_strided_slice %25 {offsets = [0, 1], sizes = [128, 1], strides = [1, 1]} : vector<128x3xf32> to vector<128x1xf32>
      %33 = vector.extract_strided_slice %26 {offsets = [1, 0], sizes = [1, 64], strides = [1, 1]} : vector<3x64xf32> to vector<1x64xf32>
      %34 = vector.broadcast %32 : vector<128x1xf32> to vector<128x64xf32>
      %35 = vector.broadcast %33 : vector<1x64xf32> to vector<128x64xf32>
      %36 = arith.mulf %34, %35 : vector<128x64xf32>
      %37 = arith.addf %31, %36 : vector<128x64xf32>
      %38 = vector.extract_strided_slice %25 {offsets = [0, 2], sizes = [128, 1], strides = [1, 1]} : vector<128x3xf32> to vector<128x1xf32>
      %39 = vector.extract_strided_slice %26 {offsets = [2, 0], sizes = [1, 64], strides = [1, 1]} : vector<3x64xf32> to vector<1x64xf32>
      %40 = vector.broadcast %38 : vector<128x1xf32> to vector<128x64xf32>
      %41 = vector.broadcast %39 : vector<1x64xf32> to vector<128x64xf32>
      %42 = arith.mulf %40, %41 : vector<128x64xf32>
      %43 = arith.addf %37, %42 : vector<128x64xf32>
      %c0_14 = arith.constant 0 : index
      %c0_15 = arith.constant 0 : index
      %44 = vector.load %arg20[%c0_14, %c0_15] : memref<1x64xf32, #tpu.memory_space<vmem>>, vector<1x64xf32>
      %45 = vector.broadcast %44 : vector<1x64xf32> to vector<128x64xf32>
      %46 = arith.mulf %43, %45 : vector<128x64xf32>
      %c0_16 = arith.constant 0 : index
      %c0_17 = arith.constant 0 : index
      %47 = vector.load %arg21[%c0_16, %c0_17] : memref<1x64xf32, #tpu.memory_space<vmem>>, vector<1x64xf32>
      %48 = vector.broadcast %47 : vector<1x64xf32> to vector<128x64xf32>
      %49 = arith.addf %46, %48 : vector<128x64xf32>
      %cst = arith.constant 0.000000e+00 : f32
      %50 = vector.broadcast %cst : f32 to vector<128x64xf32>
      %51 = arith.maximumf %49, %50 : vector<128x64xf32>
      %52 = arith.truncf %51 : vector<128x64xf32> to vector<128x64xbf16>
      %c0_18 = arith.constant 0 : index
      %c0_19 = arith.constant 0 : index
      %53 = vector.load %arg16[%c0_18, %c0_19] : memref<1x64xf32, #tpu.memory_space<vmem>>, vector<1x64xf32>
      %54 = arith.extf %52 : vector<128x64xbf16> to vector<128x64xf32>
      %cst_20 = arith.constant dense<0.000000e+00> : vector<64xf32>
      %55 = vector.multi_reduction <add>, %54, %cst_20 [0] : vector<128x64xf32> to vector<64xf32>
      %56 = vector.shape_cast %55 : vector<64xf32> to vector<1x64xf32>
      %57 = arith.addf %53, %56 : vector<1x64xf32>
      %c0_21 = arith.constant 0 : index
      %c0_22 = arith.constant 0 : index
      %58 = vector.load %arg16[%c0_21, %c0_22] : memref<1x64xf32, #tpu.memory_space<vmem>>, vector<1x64xf32>
      tpu.vector_store %arg16[%c0_21, %c0_22], %57 {strides = array<i32>} : memref<1x64xf32, #tpu.memory_space<vmem>>, vector<1x64xf32>,
      %c0_23 = arith.constant 0 : index
      %c0_24 = arith.constant 0 : index
      %59 = vector.load %arg17[%c0_23, %c0_24] : memref<64x64xf32, #tpu.memory_space<vmem>>, vector<64x64xf32>
      %cst_25 = arith.constant dense<0.000000e+00> : vector<64x64xf32>
      %60 = tpu.matmul %52, %52, %cst_25 {dimension_numbers = #tpu.dot_dimension_numbers<[0], [0], [1], [1], [0, 1, 1, 1], [], []>} : vector<128x64xbf16>, vector<128x64xbf16>, vector<64x64xf32> -> vector<64x64xf32>
      %61 = arith.addf %59, %60 : vector<64x64xf32>
      %c0_26 = arith.constant 0 : index
      %c0_27 = arith.constant 0 : index
      %62 = vector.load %arg17[%c0_26, %c0_27] : memref<64x64xf32, #tpu.memory_space<vmem>>, vector<64x64xf32>
      tpu.vector_store %arg17[%c0_26, %c0_27], %61 {strides = array<i32>} : memref<64x64xf32, #tpu.memory_space<vmem>>, vector<64x64xf32>,
    } else {
    }
    %c2_i32 = arith.constant 2 : i32
    %16 = arith.cmpi eq, %arg0, %c2_i32 : i32
    %17 = arith.extui %16 : i1 to i32
    %c0_i32_7 = arith.constant 0 : i32
    %18 = arith.cmpi ne, %17, %c0_i32_7 : i32
    scf.if %18 {
      %23 = arith.extui %2 : i1 to i32
      %c0_i32_10 = arith.constant 0 : i32
      %24 = arith.cmpi ne, %23, %c0_i32_10 : i32
      scf.if %24 {
        %c0_42 = arith.constant 0 : index
        %c0_43 = arith.constant 0 : index
        %83 = vector.load %arg7[%c0_42, %c0_43] : memref<64x128xbf16, #tpu.memory_space<vmem>>, vector<64x128xbf16>
        %84 = arith.extf %83 : vector<64x128xbf16> to vector<64x128xf32>
        %c0_44 = arith.constant 0 : index
        %c0_45 = arith.constant 0 : index
        %85 = vector.load %arg16[%c0_44, %c0_45] : memref<1x64xf32, #tpu.memory_space<vmem>>, vector<1x64xf32>
        %cst_46 = arith.constant 9.765625E-4 : f32
        %86 = vector.broadcast %cst_46 : f32 to vector<1x64xf32>
        %87 = arith.mulf %85, %86 : vector<1x64xf32>
        %88 = vector.shape_cast %87 : vector<1x64xf32> to vector<1x64xf32>
        %89 = vector.broadcast %88 : vector<1x64xf32> to vector<8x64xf32>
        %cst_47 = arith.constant dense<0.000000e+00> : vector<8x128xf32>
        %90 = tpu.matmul %89, %84, %cst_47 {dimension_numbers = #tpu.dot_dimension_numbers<[1], [0], [0], [1], [0, 0, 1, 1], [], []>} : vector<8x64xf32>, vector<64x128xf32>, vector<8x128xf32> -> vector<8x128xf32>
        %91 = vector.extract_strided_slice %90 {offsets = [0, 0], sizes = [1, 128], strides = [1, 1]} : vector<8x128xf32> to vector<1x128xf32>
        %c0_48 = arith.constant 0 : index
        %c0_49 = arith.constant 0 : index
        %92 = vector.load %arg17[%c0_48, %c0_49] : memref<64x64xf32, #tpu.memory_space<vmem>>, vector<64x64xf32>
        %cst_50 = arith.constant dense<0.000000e+00> : vector<64x128xf32>
        %93 = tpu.matmul %92, %84, %cst_50 {dimension_numbers = #tpu.dot_dimension_numbers<[1], [0], [0], [1], [0, 0, 1, 1], [], []>} : vector<64x64xf32>, vector<64x128xf32>, vector<64x128xf32> -> vector<64x128xf32>
        %94 = arith.mulf %84, %93 : vector<64x128xf32>
        %cst_51 = arith.constant dense<0.000000e+00> : vector<128xf32>
        %95 = vector.multi_reduction <add>, %94, %cst_51 [0] : vector<64x128xf32> to vector<128xf32>
        %96 = vector.shape_cast %95 : vector<128xf32> to vector<1x128xf32>
        %cst_52 = arith.constant 9.765625E-4 : f32
        %97 = vector.broadcast %cst_52 : f32 to vector<1x128xf32>
        %98 = arith.mulf %96, %97 : vector<1x128xf32>
        %99 = arith.mulf %91, %91 : vector<1x128xf32>
        %100 = arith.subf %98, %99 : vector<1x128xf32>
        %cst_53 = arith.constant 0.000000e+00 : f32
        %101 = vector.broadcast %cst_53 : f32 to vector<1x128xf32>
        %102 = arith.maximumf %100, %101 : vector<1x128xf32>
        %c0_54 = arith.constant 0 : index
        %c0_55 = arith.constant 0 : index
        %103 = vector.load %arg8[%c0_54, %c0_55] : memref<1x128xf32, #tpu.memory_space<vmem>>, vector<1x128xf32>
        %cst_56 = arith.constant 9.99999974E-6 : f32
        %104 = vector.broadcast %cst_56 : f32 to vector<1x128xf32>
        %105 = arith.addf %102, %104 : vector<1x128xf32>
        %106 = math.rsqrt %105 : vector<1x128xf32>
        %107 = arith.mulf %103, %106 : vector<1x128xf32>
        %c0_57 = arith.constant 0 : index
        %c0_58 = arith.constant 0 : index
        %108 = vector.load %arg22[%c0_57, %c0_58] : memref<1x128xf32, #tpu.memory_space<vmem>>, vector<1x128xf32>
        tpu.vector_store %arg22[%c0_57, %c0_58], %107 {strides = array<i32>} : memref<1x128xf32, #tpu.memory_space<vmem>>, vector<1x128xf32>,
        %c0_59 = arith.constant 0 : index
        %c0_60 = arith.constant 0 : index
        %109 = vector.load %arg9[%c0_59, %c0_60] : memref<1x128xf32, #tpu.memory_space<vmem>>, vector<1x128xf32>
        %110 = arith.mulf %91, %107 : vector<1x128xf32>
        %111 = arith.subf %109, %110 : vector<1x128xf32>
        %c0_61 = arith.constant 0 : index
        %c0_62 = arith.constant 0 : index
        %112 = vector.load %arg23[%c0_61, %c0_62] : memref<1x128xf32, #tpu.memory_space<vmem>>, vector<1x128xf32>
        tpu.vector_store %arg23[%c0_61, %c0_62], %111 {strides = array<i32>} : memref<1x128xf32, #tpu.memory_space<vmem>>, vector<1x128xf32>,
      } else {
      }
      %c0 = arith.constant 0 : index
      %c0_11 = arith.constant 0 : index
      %25 = vector.load %arg3[%c0, %c0_11] : memref<128x3xf32, #tpu.memory_space<vmem>>, vector<128x3xf32>
      %c0_12 = arith.constant 0 : index
      %c0_13 = arith.constant 0 : index
      %26 = vector.load %arg4[%c0_12, %c0_13] : memref<3x64xf32, #tpu.memory_space<vmem>>, vector<3x64xf32>
      %27 = vector.extract_strided_slice %25 {offsets = [0, 0], sizes = [128, 1], strides = [1, 1]} : vector<128x3xf32> to vector<128x1xf32>
      %28 = vector.extract_strided_slice %26 {offsets = [0, 0], sizes = [1, 64], strides = [1, 1]} : vector<3x64xf32> to vector<1x64xf32>
      %29 = vector.broadcast %27 : vector<128x1xf32> to vector<128x64xf32>
      %30 = vector.broadcast %28 : vector<1x64xf32> to vector<128x64xf32>
      %31 = arith.mulf %29, %30 : vector<128x64xf32>
      %32 = vector.extract_strided_slice %25 {offsets = [0, 1], sizes = [128, 1], strides = [1, 1]} : vector<128x3xf32> to vector<128x1xf32>
      %33 = vector.extract_strided_slice %26 {offsets = [1, 0], sizes = [1, 64], strides = [1, 1]} : vector<3x64xf32> to vector<1x64xf32>
      %34 = vector.broadcast %32 : vector<128x1xf32> to vector<128x64xf32>
      %35 = vector.broadcast %33 : vector<1x64xf32> to vector<128x64xf32>
      %36 = arith.mulf %34, %35 : vector<128x64xf32>
      %37 = arith.addf %31, %36 : vector<128x64xf32>
      %38 = vector.extract_strided_slice %25 {offsets = [0, 2], sizes = [128, 1], strides = [1, 1]} : vector<128x3xf32> to vector<128x1xf32>
      %39 = vector.extract_strided_slice %26 {offsets = [2, 0], sizes = [1, 64], strides = [1, 1]} : vector<3x64xf32> to vector<1x64xf32>
      %40 = vector.broadcast %38 : vector<128x1xf32> to vector<128x64xf32>
      %41 = vector.broadcast %39 : vector<1x64xf32> to vector<128x64xf32>
      %42 = arith.mulf %40, %41 : vector<128x64xf32>
      %43 = arith.addf %37, %42 : vector<128x64xf32>
      %c0_14 = arith.constant 0 : index
      %c0_15 = arith.constant 0 : index
      %44 = vector.load %arg20[%c0_14, %c0_15] : memref<1x64xf32, #tpu.memory_space<vmem>>, vector<1x64xf32>
      %45 = vector.broadcast %44 : vector<1x64xf32> to vector<128x64xf32>
      %46 = arith.mulf %43, %45 : vector<128x64xf32>
      %c0_16 = arith.constant 0 : index
      %c0_17 = arith.constant 0 : index
      %47 = vector.load %arg21[%c0_16, %c0_17] : memref<1x64xf32, #tpu.memory_space<vmem>>, vector<1x64xf32>
      %48 = vector.broadcast %47 : vector<1x64xf32> to vector<128x64xf32>
      %49 = arith.addf %46, %48 : vector<128x64xf32>
      %cst = arith.constant 0.000000e+00 : f32
      %50 = vector.broadcast %cst : f32 to vector<128x64xf32>
      %51 = arith.maximumf %49, %50 : vector<128x64xf32>
      %52 = arith.truncf %51 : vector<128x64xf32> to vector<128x64xbf16>
      %c0_18 = arith.constant 0 : index
      %c0_19 = arith.constant 0 : index
      %53 = vector.load %arg7[%c0_18, %c0_19] : memref<64x128xbf16, #tpu.memory_space<vmem>>, vector<64x128xbf16>
      %cst_20 = arith.constant dense<0.000000e+00> : vector<128x128xf32>
      %54 = tpu.matmul %52, %53, %cst_20 {dimension_numbers = #tpu.dot_dimension_numbers<[1], [0], [0], [1], [0, 0, 1, 1], [], []>} : vector<128x64xbf16>, vector<64x128xbf16>, vector<128x128xf32> -> vector<128x128xf32>
      %c0_21 = arith.constant 0 : index
      %c0_22 = arith.constant 0 : index
      %55 = vector.load %arg22[%c0_21, %c0_22] : memref<1x128xf32, #tpu.memory_space<vmem>>, vector<1x128xf32>
      %56 = vector.broadcast %55 : vector<1x128xf32> to vector<128x128xf32>
      %57 = arith.mulf %54, %56 : vector<128x128xf32>
      %c0_23 = arith.constant 0 : index
      %c0_24 = arith.constant 0 : index
      %58 = vector.load %arg23[%c0_23, %c0_24] : memref<1x128xf32, #tpu.memory_space<vmem>>, vector<1x128xf32>
      %59 = vector.broadcast %58 : vector<1x128xf32> to vector<128x128xf32>
      %60 = arith.addf %57, %59 : vector<128x128xf32>
      %cst_25 = arith.constant 0.000000e+00 : f32
      %61 = vector.broadcast %cst_25 : f32 to vector<128x128xf32>
      %62 = arith.maximumf %60, %61 : vector<128x128xf32>
      %63 = arith.truncf %62 : vector<128x128xf32> to vector<128x128xbf16>
      %c0_26 = arith.constant 0 : index
      %c0_27 = arith.constant 0 : index
      %64 = vector.load %arg10[%c0_26, %c0_27] : memref<128x1024xbf16, #tpu.memory_space<vmem>>, vector<128x1024xbf16>
      %cst_28 = arith.constant dense<0.000000e+00> : vector<128x1024xf32>
      %65 = tpu.matmul %63, %64, %cst_28 {dimension_numbers = #tpu.dot_dimension_numbers<[1], [0], [0], [1], [0, 0, 1, 1], [], []>} : vector<128x128xbf16>, vector<128x1024xbf16>, vector<128x1024xf32> -> vector<128x1024xf32>
      %c0_29 = arith.constant 0 : index
      %c0_30 = arith.constant 0 : index
      %66 = vector.load %arg18[%c0_29, %c0_30] : memref<1x128xf32, #tpu.memory_space<vmem>>, vector<1x128xf32>
      %67 = arith.extf %63 : vector<128x128xbf16> to vector<128x128xf32>
      %cst_31 = arith.constant dense<0.000000e+00> : vector<128xf32>
      %68 = vector.multi_reduction <add>, %67, %cst_31 [0] : vector<128x128xf32> to vector<128xf32>
      %69 = vector.shape_cast %68 : vector<128xf32> to vector<1x128xf32>
      %70 = arith.addf %66, %69 : vector<1x128xf32>
      %c0_32 = arith.constant 0 : index
      %c0_33 = arith.constant 0 : index
      %71 = vector.load %arg18[%c0_32, %c0_33] : memref<1x128xf32, #tpu.memory_space<vmem>>, vector<1x128xf32>
      tpu.vector_store %arg18[%c0_32, %c0_33], %70 {strides = array<i32>} : memref<1x128xf32, #tpu.memory_space<vmem>>, vector<1x128xf32>,
      %c0_34 = arith.constant 0 : index
      %c0_35 = arith.constant 0 : index
      %72 = vector.load %arg19[%c0_34, %c0_35] : memref<128x128xf32, #tpu.memory_space<vmem>>, vector<128x128xf32>
      %cst_36 = arith.constant dense<0.000000e+00> : vector<128x128xf32>
      %73 = tpu.matmul %63, %63, %cst_36 {dimension_numbers = #tpu.dot_dimension_numbers<[0], [0], [1], [1], [0, 1, 1, 1], [], []>} : vector<128x128xbf16>, vector<128x128xbf16>, vector<128x128xf32> -> vector<128x128xf32>
      %74 = arith.addf %72, %73 : vector<128x128xf32>
      %c0_37 = arith.constant 0 : index
      %c0_38 = arith.constant 0 : index
      %75 = vector.load %arg19[%c0_37, %c0_38] : memref<128x128xf32, #tpu.memory_space<vmem>>, vector<128x128xf32>
      tpu.vector_store %arg19[%c0_37, %c0_38], %74 {strides = array<i32>} : memref<128x128xf32, #tpu.memory_space<vmem>>, vector<128x128xf32>,
      %76 = arith.index_cast %arg1 : i32 to index
      %c0_39 = arith.constant 0 : index
      %77 = vector.load %arg24[%76, %c0_39] : memref<2x1024xf32, #tpu.memory_space<vmem>>, vector<1x1024xf32>
      %cst_40 = arith.constant dense<0xFF800000> : vector<1024xf32>
      %78 = vector.multi_reduction <maximumf>, %65, %cst_40 [0] : vector<128x1024xf32> to vector<1024xf32>
      %79 = vector.shape_cast %78 : vector<1024xf32> to vector<1x1024xf32>
      %80 = arith.maximumf %77, %79 : vector<1x1024xf32>
      %81 = arith.index_cast %arg1 : i32 to index
      %c0_41 = arith.constant 0 : index
      %82 = vector.load %arg24[%81, %c0_41] : memref<2x1024xf32, #tpu.memory_space<vmem>>, vector<1x1024xf32>
      tpu.vector_store %arg24[%81, %c0_41], %80 {strides = array<i32>} : memref<2x1024xf32, #tpu.memory_space<vmem>>, vector<1x1024xf32>,
    } else {
    }
    %c2_i32_8 = arith.constant 2 : i32
    %19 = arith.cmpi eq, %arg0, %c2_i32_8 : i32
    %20 = arith.andi %19, %5 : i1
    %21 = arith.extui %20 : i1 to i32
    %c0_i32_9 = arith.constant 0 : i32
    %22 = arith.cmpi ne, %21, %c0_i32_9 : i32
    scf.if %22 {
      %c0 = arith.constant 0 : index
      %c0_10 = arith.constant 0 : index
      %23 = vector.load %arg10[%c0, %c0_10] : memref<128x1024xbf16, #tpu.memory_space<vmem>>, vector<128x1024xbf16>
      %24 = arith.extf %23 : vector<128x1024xbf16> to vector<128x1024xf32>
      %c0_11 = arith.constant 0 : index
      %c0_12 = arith.constant 0 : index
      %25 = vector.load %arg18[%c0_11, %c0_12] : memref<1x128xf32, #tpu.memory_space<vmem>>, vector<1x128xf32>
      %cst = arith.constant 9.765625E-4 : f32
      %26 = vector.broadcast %cst : f32 to vector<1x128xf32>
      %27 = arith.mulf %25, %26 : vector<1x128xf32>
      %28 = vector.shape_cast %27 : vector<1x128xf32> to vector<1x128xf32>
      %29 = vector.broadcast %28 : vector<1x128xf32> to vector<8x128xf32>
      %cst_13 = arith.constant dense<0.000000e+00> : vector<8x1024xf32>
      %30 = tpu.matmul %29, %24, %cst_13 {dimension_numbers = #tpu.dot_dimension_numbers<[1], [0], [0], [1], [0, 0, 1, 1], [], []>} : vector<8x128xf32>, vector<128x1024xf32>, vector<8x1024xf32> -> vector<8x1024xf32>
      %31 = vector.extract_strided_slice %30 {offsets = [0, 0], sizes = [1, 1024], strides = [1, 1]} : vector<8x1024xf32> to vector<1x1024xf32>
      %c0_14 = arith.constant 0 : index
      %c0_15 = arith.constant 0 : index
      %32 = vector.load %arg19[%c0_14, %c0_15] : memref<128x128xf32, #tpu.memory_space<vmem>>, vector<128x128xf32>
      %cst_16 = arith.constant dense<0.000000e+00> : vector<128x1024xf32>
      %33 = tpu.matmul %32, %24, %cst_16 {dimension_numbers = #tpu.dot_dimension_numbers<[1], [0], [0], [1], [0, 0, 1, 1], [], []>} : vector<128x128xf32>, vector<128x1024xf32>, vector<128x1024xf32> -> vector<128x1024xf32>
      %34 = arith.mulf %24, %33 : vector<128x1024xf32>
      %cst_17 = arith.constant dense<0.000000e+00> : vector<1024xf32>
      %35 = vector.multi_reduction <add>, %34, %cst_17 [0] : vector<128x1024xf32> to vector<1024xf32>
      %36 = vector.shape_cast %35 : vector<1024xf32> to vector<1x1024xf32>
      %cst_18 = arith.constant 9.765625E-4 : f32
      %37 = vector.broadcast %cst_18 : f32 to vector<1x1024xf32>
      %38 = arith.mulf %36, %37 : vector<1x1024xf32>
      %39 = arith.mulf %31, %31 : vector<1x1024xf32>
      %40 = arith.subf %38, %39 : vector<1x1024xf32>
      %cst_19 = arith.constant 0.000000e+00 : f32
      %41 = vector.broadcast %cst_19 : f32 to vector<1x1024xf32>
      %42 = arith.maximumf %40, %41 : vector<1x1024xf32>
      %c0_20 = arith.constant 0 : index
      %c0_21 = arith.constant 0 : index
      %43 = vector.load %arg11[%c0_20, %c0_21] : memref<1x1024xf32, #tpu.memory_space<vmem>>, vector<1x1024xf32>
      %cst_22 = arith.constant 9.99999974E-6 : f32
      %44 = vector.broadcast %cst_22 : f32 to vector<1x1024xf32>
      %45 = arith.addf %42, %44 : vector<1x1024xf32>
      %46 = math.rsqrt %45 : vector<1x1024xf32>
      %47 = arith.mulf %43, %46 : vector<1x1024xf32>
      %c0_23 = arith.constant 0 : index
      %c0_24 = arith.constant 0 : index
      %48 = vector.load %arg12[%c0_23, %c0_24] : memref<1x1024xf32, #tpu.memory_space<vmem>>, vector<1x1024xf32>
      %49 = arith.mulf %31, %47 : vector<1x1024xf32>
      %50 = arith.subf %48, %49 : vector<1x1024xf32>
      %c0_25 = arith.constant 0 : index
      %c0_26 = arith.constant 0 : index
      %51 = vector.load %arg24[%c0_25, %c0_26] : memref<2x1024xf32, #tpu.memory_space<vmem>>, vector<2x1024xf32>
      %52 = vector.broadcast %47 : vector<1x1024xf32> to vector<2x1024xf32>
      %53 = arith.mulf %51, %52 : vector<2x1024xf32>
      %54 = vector.broadcast %50 : vector<1x1024xf32> to vector<2x1024xf32>
      %55 = arith.addf %53, %54 : vector<2x1024xf32>
      %c0_27 = arith.constant 0 : index
      %c0_28 = arith.constant 0 : index
      %56 = vector.load %arg13[%c0_27, %c0_28] : memref<2x1024xf32, #tpu.memory_space<vmem>>, vector<2x1024xf32>
      tpu.vector_store %arg13[%c0_27, %c0_28], %55 {strides = array<i32>} : memref<2x1024xf32, #tpu.memory_space<vmem>>, vector<2x1024xf32>,
    } else {
    }
    return
  }
  func.func @transform_0(%arg0: i32, %arg1: i32, %arg2: i32) -> (i32, i32) {
    %c4_i32 = arith.constant 4 : i32
    %0 = arith.muli %arg1, %c4_i32 : i32
    %1 = arith.addi %0, %arg2 : i32
    %c0_i32 = arith.constant 0 : i32
    %c0_i32_0 = arith.constant 0 : i32
    return %1, %c0_i32 : i32, i32
  }
  func.func @transform_1(%arg0: i32, %arg1: i32, %arg2: i32) -> (i32, i32) {
    %c0_i32 = arith.constant 0 : i32
    %c0_i32_0 = arith.constant 0 : i32
    %c0_i32_1 = arith.constant 0 : i32
    return %c0_i32, %c0_i32_0 : i32, i32
  }
  func.func @transform_2(%arg0: i32, %arg1: i32, %arg2: i32) -> (i32, i32) {
    %c0_i32 = arith.constant 0 : i32
    %c0_i32_0 = arith.constant 0 : i32
    %c0_i32_1 = arith.constant 0 : i32
    return %c0_i32, %c0_i32_0 : i32, i32
  }
  func.func @transform_3(%arg0: i32, %arg1: i32, %arg2: i32) -> (i32, i32) {
    %c0_i32 = arith.constant 0 : i32
    %c0_i32_0 = arith.constant 0 : i32
    %c0_i32_1 = arith.constant 0 : i32
    return %c0_i32, %c0_i32_0 : i32, i32
  }
  func.func @transform_4(%arg0: i32, %arg1: i32, %arg2: i32) -> (i32, i32) {
    %c0_i32 = arith.constant 0 : i32
    %c0_i32_0 = arith.constant 0 : i32
    %c0_i32_1 = arith.constant 0 : i32
    return %c0_i32, %c0_i32_0 : i32, i32
  }
  func.func @transform_5(%arg0: i32, %arg1: i32, %arg2: i32) -> (i32, i32) {
    %c0_i32 = arith.constant 0 : i32
    %c0_i32_0 = arith.constant 0 : i32
    %c0_i32_1 = arith.constant 0 : i32
    return %c0_i32, %c0_i32_0 : i32, i32
  }
  func.func @transform_6(%arg0: i32, %arg1: i32, %arg2: i32) -> (i32, i32) {
    %c0_i32 = arith.constant 0 : i32
    %c0_i32_0 = arith.constant 0 : i32
    %c0_i32_1 = arith.constant 0 : i32
    return %c0_i32, %c0_i32_0 : i32, i32
  }
  func.func @transform_7(%arg0: i32, %arg1: i32, %arg2: i32) -> (i32, i32) {
    %c0_i32 = arith.constant 0 : i32
    %c0_i32_0 = arith.constant 0 : i32
    %c0_i32_1 = arith.constant 0 : i32
    return %c0_i32, %c0_i32_0 : i32, i32
  }
  func.func @transform_8(%arg0: i32, %arg1: i32, %arg2: i32) -> (i32, i32) {
    %c0_i32 = arith.constant 0 : i32
    %c0_i32_0 = arith.constant 0 : i32
    %c0_i32_1 = arith.constant 0 : i32
    return %c0_i32, %c0_i32_0 : i32, i32
  }
  func.func @transform_9(%arg0: i32, %arg1: i32, %arg2: i32) -> (i32, i32) {
    %c0_i32 = arith.constant 0 : i32
    %c0_i32_0 = arith.constant 0 : i32
    %c0_i32_1 = arith.constant 0 : i32
    return %c0_i32, %c0_i32_0 : i32, i32
  }
  func.func @transform_10(%arg0: i32, %arg1: i32, %arg2: i32) -> (i32, i32) {
    %c0_i32 = arith.constant 0 : i32
    %c0_i32_0 = arith.constant 0 : i32
    %c0_i32_1 = arith.constant 0 : i32
    return %c0_i32, %c0_i32_0 : i32, i32
  }
}

</mosaic_0001>

<llo_original>
// kernel: tpu_custom_call.1
$region0: #{tpu_custom_call.1}
  #allocation0 [shape = 'u32[]', space=smem, size = 0x4, offset = 0x4, fixed_abs, tag = 'smem constant byte address 0x4 - core index']
  #allocation1 [shape = 'u32[144,128]{1,0:T(1,128)}', space=vmem, size = 0x12000, scoped, tag = 'internal scratch']
  #allocation2 [shape = 'f32[1,64]{1,0:T(1,128)}', space=vmem, size = 0x200, scoped, tag = 'scratch operand']
  #allocation3 [shape = 'f32[1,64]{1,0:T(1,128)}', space=vmem, size = 0x200, scoped, tag = 'scratch operand']
  #allocation4 [shape = 'f32[1,64]{1,0:T(1,128)}', space=vmem, size = 0x200, scoped, tag = 'scratch operand']
  #allocation5 [shape = 'f32[64,64]{1,0:T(8,128)}', space=vmem, size = 0x8000, scoped, tag = 'scratch operand']
  #allocation6 [shape = 'f32[1,128]{1,0:T(1,128)}', space=vmem, size = 0x200, scoped, tag = 'scratch operand']
  #allocation7 [shape = 'f32[128,128]{1,0:T(8,128)}', space=vmem, size = 0x10000, scoped, tag = 'scratch operand']
  #allocation8 [shape = 'f32[1,64]{1,0:T(1,128)}', space=vmem, size = 0x200, scoped, tag = 'scratch operand']
  #allocation9 [shape = 'f32[1,64]{1,0:T(1,128)}', space=vmem, size = 0x200, scoped, tag = 'scratch operand']
  #allocation10 [shape = 'f32[1,128]{1,0:T(1,128)}', space=vmem, size = 0x200, scoped, tag = 'scratch operand']
  #allocation11 [shape = 'f32[1,128]{1,0:T(1,128)}', space=vmem, size = 0x200, scoped, tag = 'scratch operand']
  #allocation12 [shape = 'f32[2,1024]{1,0:T(2,128)}', space=vmem, size = 0x2000, scoped, tag = 'scratch operand']
  %s0 = inlined_call_operand.vmem [shape: f32[1024,3], index: 0, kind: input, shape index: {}]
  %s1 = inlined_call_operand.vmem [shape: f32[3,64], index: 1, kind: input, shape index: {}]
  %s2 = inlined_call_operand.vmem [shape: f32[1,64], index: 2, kind: input, shape index: {}]
  %s3 = inlined_call_operand.vmem [shape: f32[1,64], index: 3, kind: input, shape index: {}]
  %s4 = inlined_call_operand.vmem [shape: bf16[64,128], index: 4, kind: input, shape index: {}]
  %s5 = inlined_call_operand.vmem [shape: f32[1,128], index: 5, kind: input, shape index: {}]
  %s6 = inlined_call_operand.vmem [shape: f32[1,128], index: 6, kind: input, shape index: {}]
  %s7 = inlined_call_operand.vmem [shape: bf16[128,1024], index: 7, kind: input, shape index: {}]
  %s8 = inlined_call_operand.vmem [shape: f32[1,1024], index: 8, kind: input, shape index: {}]
  %s9 = inlined_call_operand.vmem [shape: f32[1,1024], index: 9, kind: input, shape index: {}]
  %s10 = inlined_call_operand.hbm [shape: f32[2,1024], index: 10, kind: output, shape index: {}]
  %s11 = sld [smem:[#allocation0]]
  $region101: #{tpu_custom_call.1} parent=0
    _
  %s13 = ssub.s32 1, %s11
  %s14 = scalar_select 0, %s13, %s11
  $region1: #{tpu_custom_call.1} parent=0
    #allocation13 [shape = 'u8[8192]{0}', space=vmem, size = 0x2000, scoped, tag = 'output window, operand 0, single buffered']
    #allocation14 [shape = 's32[2]{0}', space=sflag, size = 0x8, scoped, tag = 'scoped memory for tpu_custom_call.1']
    %15 = vsyncpa [#allocation14], 0
    loop: start=0, step=1, limit=26
    $region2: #{tpu_custom_call.1} parent=1 // loop_pre_header
      _
    $region3: #{tpu_custom_call.1} parent=1 // loop_header
      %s17 = sphi 0, %s21
      %p18 = scmp.ge.s32.totalorder %s17, 26
      %s24 = sphi 0, %s43
      %s25 = sphi 0, %s39
      %s26 = sphi 0, %s35
      %s27 = sphi 0, %s24
      %s28 = sphi 0, %s25
      %s29 = sphi 0, %s26
      %s30 = sphi 0, %s27
      %s31 = sphi 0, %s28
      %s32 = sphi 0, %s29
      %s50 = sphi 0, %s52
      %s53 = sphi 0, %s50
      %s54 = sphi 0, %s53
      %s70 = sphi 0, %s54
      %s74 = sphi 0, %s74
      %s76 = sphi 0, %s74
      %s77 = sphi 0, %s76
      %s91 = sphi 0, %s77
      %s95 = sphi 0, %s95
      %s97 = sphi 0, %s95
      %s98 = sphi 0, %s97
      %s112 = sphi 0, %s98
      %s116 = sphi 0, %s116
      %s118 = sphi 0, %s116
      %s119 = sphi 0, %s118
      %s133 = sphi 0, %s119
      %s137 = sphi 0, %s137
      %s139 = sphi 0, %s137
      %s140 = sphi 0, %s139
      %s154 = sphi 0, %s140
      %s158 = sphi 0, %s158
      %s160 = sphi 0, %s158
      %s161 = sphi 0, %s160
      %s175 = sphi 0, %s161
      %s179 = sphi 0, %s179
      %s181 = sphi 0, %s179
      %s182 = sphi 0, %s181
      %s196 = sphi 0, %s182
      %s200 = sphi 0, %s200
      %s202 = sphi 0, %s200
      %s203 = sphi 0, %s202
      %s217 = sphi 0, %s203
      %s221 = sphi 0, %s221
      %s223 = sphi 0, %s221
      %s224 = sphi 0, %s223
      %s238 = sphi 0, %s224
      %s242 = sphi 0, %s242
      %s244 = sphi 0, %s242
      %s245 = sphi 0, %s244
      %s259 = sphi 0, %s245
      %s263 = sphi 0, %s263
      %s265 = sphi 0, %s263
      %s266 = sphi 0, %s265
      %s280 = sphi 0, %s266
    $region4: #{tpu_custom_call.1} parent=1 // loop_header_branch
      %20 = sbr.rel (%p18) target = $region8
    $region5: #{tpu_custom_call.1} parent=1 // loop_body
      %s22 = ssub.s32 %s17, 1
      %s23 = ssub.s32 %s17, 2
      %s33 = sadd.s32 1, %s26
      %p34 = scmp.ge.s32.totalorder %s33, 4
      %s35 = scalar_select %p34, 0, %s33
      %s36 = sadd.s32 1, %s25
      %s37 = scalar_select %p34, %s36, %s25
      %p38 = scmp.ge.s32.totalorder %s37, 2
      %s39 = scalar_select %p38, 0, %s37
      %s40 = sadd.s32 1, %s24
      %s41 = scalar_select %p38, %s40, %s24
      %p42 = scmp.ge.s32.totalorder %s41, 3
      %s43 = scalar_select %p42, 0, %s41
      %s44 = smul.u32 %s25, 4
      %s45 = sadd.s32 %s44, %s26
      %s46 = smul.u32 %s39, 4
      %s47 = sadd.s32 %s46, %s35
      %s48 = ssub.s32 %s45, %s47
      %p49 = scmp.eq.s32.totalorder %s48, 0
      %s51 = sadd.s32 %s50, 1
      %s52 = scalar_select %p49, %s50, %s51
      %p55 = pneg %p49
      %p56 = scmp.eq.s32.totalorder %s17, 23
      %p57 = por %p55, %p56
      %p58 = scmp.ne.s32.totalorder %s50, %s53
      %p59 = scmp.eq.s32.totalorder %s17, 0
      %p60 = por %p58, %p59
      %p61 = scmp.ne.s32.totalorder %s50, %s53
      %p62 = scmp.eq.s32.totalorder %s22, 23
      %p63 = por %p61, %p62
      %p64 = scmp.ne.s32.totalorder %s53, %s54
      %p65 = scmp.eq.s32.totalorder %s22, 0
      %p66 = por %p64, %p65
      %p67 = scmp.ne.s32.totalorder %s53, %s54
      %p68 = scmp.eq.s32.totalorder %s23, 23
      %p69 = por %p67, %p68
      %p71 = scmp.ne.s32.totalorder %s54, %s70
      %p72 = scmp.eq.s32.totalorder %s23, 0
      %p73 = por %p71, %p72
      %s75 = sadd.s32 %s74, 1
      %p78 = scmp.eq.s32.totalorder %s17, 23
      %p79 = scmp.ne.s32.totalorder %s74, %s76
      %p80 = scmp.eq.s32.totalorder %s17, 0
      %p81 = por %p79, %p80
      %p82 = scmp.ne.s32.totalorder %s74, %s76
      %p83 = scmp.eq.s32.totalorder %s22, 23
      %p84 = por %p82, %p83
      %p85 = scmp.ne.s32.totalorder %s76, %s77
      %p86 = scmp.eq.s32.totalorder %s22, 0
      %p87 = por %p85, %p86
      %p88 = scmp.ne.s32.totalorder %s76, %s77
      %p89 = scmp.eq.s32.totalorder %s23, 23
      %p90 = por %p88, %p89
      %p92 = scmp.ne.s32.totalorder %s77, %s91
      %p93 = scmp.eq.s32.totalorder %s23, 0
      %p94 = por %p92, %p93
      %s96 = sadd.s32 %s95, 1
      %p99 = scmp.eq.s32.totalorder %s17, 23
      %p100 = scmp.ne.s32.totalorder %s95, %s97
      %p101 = scmp.eq.s32.totalorder %s17, 0
      %p102 = por %p100, %p101
      %p103 = scmp.ne.s32.totalorder %s95, %s97
      %p104 = scmp.eq.s32.totalorder %s22, 23
      %p105 = por %p103, %p104
      %p106 = scmp.ne.s32.totalorder %s97, %s98
      %p107 = scmp.eq.s32.totalorder %s22, 0
      %p108 = por %p106, %p107
      %p109 = scmp.ne.s32.totalorder %s97, %s98
      %p110 = scmp.eq.s32.totalorder %s23, 23
      %p111 = por %p109, %p110
      %p113 = scmp.ne.s32.totalorder %s98, %s112
      %p114 = scmp.eq.s32.totalorder %s23, 0
      %p115 = por %p113, %p114
      %s117 = sadd.s32 %s116, 1
      %p120 = scmp.eq.s32.totalorder %s17, 23
      %p121 = scmp.ne.s32.totalorder %s116, %s118
      %p122 = scmp.eq.s32.totalorder %s17, 0
      %p123 = por %p121, %p122
      %p124 = scmp.ne.s32.totalorder %s116, %s118
      %p125 = scmp.eq.s32.totalorder %s22, 23
      %p126 = por %p124, %p125
      %p127 = scmp.ne.s32.totalorder %s118, %s119
      %p128 = scmp.eq.s32.totalorder %s22, 0
      %p129 = por %p127, %p128
      %p130 = scmp.ne.s32.totalorder %s118, %s119
      %p131 = scmp.eq.s32.totalorder %s23, 23
      %p132 = por %p130, %p131
      %p134 = scmp.ne.s32.totalorder %s119, %s133
      %p135 = scmp.eq.s32.totalorder %s23, 0
      %p136 = por %p134, %p135
      %s138 = sadd.s32 %s137, 1
      %p141 = scmp.eq.s32.totalorder %s17, 23
      %p142 = scmp.ne.s32.totalorder %s137, %s139
      %p143 = scmp.eq.s32.totalorder %s17, 0
      %p144 = por %p142, %p143
      %p145 = scmp.ne.s32.totalorder %s137, %s139
      %p146 = scmp.eq.s32.totalorder %s22, 23
      %p147 = por %p145, %p146
      %p148 = scmp.ne.s32.totalorder %s139, %s140
      %p149 = scmp.eq.s32.totalorder %s22, 0
      %p150 = por %p148, %p149
      %p151 = scmp.ne.s32.totalorder %s139, %s140
      %p152 = scmp.eq.s32.totalorder %s23, 23
      %p153 = por %p151, %p152
      %p155 = scmp.ne.s32.totalorder %s140, %s154
      %p156 = scmp.eq.s32.totalorder %s23, 0
      %p157 = por %p155, %p156
      %s159 = sadd.s32 %s158, 1
      %p162 = scmp.eq.s32.totalorder %s17, 23
      %p163 = scmp.ne.s32.totalorder %s158, %s160
      %p164 = scmp.eq.s32.totalorder %s17, 0
      %p165 = por %p163, %p164
      %p166 = scmp.ne.s32.totalorder %s158, %s160
      %p167 = scmp.eq.s32.totalorder %s22, 23
      %p168 = por %p166, %p167
      %p169 = scmp.ne.s32.totalorder %s160, %s161
      %p170 = scmp.eq.s32.totalorder %s22, 0
      %p171 = por %p169, %p170
      %p172 = scmp.ne.s32.totalorder %s160, %s161
      %p173 = scmp.eq.s32.totalorder %s23, 23
      %p174 = por %p172, %p173
      %p176 = scmp.ne.s32.totalorder %s161, %s175
      %p177 = scmp.eq.s32.totalorder %s23, 0
      %p178 = por %p176, %p177
      %s180 = sadd.s32 %s179, 1
      %p183 = scmp.eq.s32.totalorder %s17, 23
      %p184 = scmp.ne.s32.totalorder %s179, %s181
      %p185 = scmp.eq.s32.totalorder %s17, 0
      %p186 = por %p184, %p185
      %p187 = scmp.ne.s32.totalorder %s179, %s181
      %p188 = scmp.eq.s32.totalorder %s22, 23
      %p189 = por %p187, %p188
      %p190 = scmp.ne.s32.totalorder %s181, %s182
      %p191 = scmp.eq.s32.totalorder %s22, 0
      %p192 = por %p190, %p191
      %p193 = scmp.ne.s32.totalorder %s181, %s182
      %p194 = scmp.eq.s32.totalorder %s23, 23
      %p195 = por %p193, %p194
      %p197 = scmp.ne.s32.totalorder %s182, %s196
      %p198 = scmp.eq.s32.totalorder %s23, 0
      %p199 = por %p197, %p198
      %s201 = sadd.s32 %s200, 1
      %p204 = scmp.eq.s32.totalorder %s17, 23
      %p205 = scmp.ne.s32.totalorder %s200, %s202
      %p206 = scmp.eq.s32.totalorder %s17, 0
      %p207 = por %p205, %p206
      %p208 = scmp.ne.s32.totalorder %s200, %s202
      %p209 = scmp.eq.s32.totalorder %s22, 23
      %p210 = por %p208, %p209
      %p211 = scmp.ne.s32.totalorder %s202, %s203
      %p212 = scmp.eq.s32.totalorder %s22, 0
      %p213 = por %p211, %p212
      %p214 = scmp.ne.s32.totalorder %s202, %s203
      %p215 = scmp.eq.s32.totalorder %s23, 23
      %p216 = por %p214, %p215
      %p218 = scmp.ne.s32.totalorder %s203, %s217
      %p219 = scmp.eq.s32.totalorder %s23, 0
      %p220 = por %p218, %p219
      %s222 = sadd.s32 %s221, 1
      %p225 = scmp.eq.s32.totalorder %s17, 23
      %p226 = scmp.ne.s32.totalorder %s221, %s223
      %p227 = scmp.eq.s32.totalorder %s17, 0
      %p228 = por %p226, %p227
      %p229 = scmp.ne.s32.totalorder %s221, %s223
      %p230 = scmp.eq.s32.totalorder %s22, 23
      %p231 = por %p229, %p230
      %p232 = scmp.ne.s32.totalorder %s223, %s224
      %p233 = scmp.eq.s32.totalorder %s22, 0
      %p234 = por %p232, %p233
      %p235 = scmp.ne.s32.totalorder %s223, %s224
      %p236 = scmp.eq.s32.totalorder %s23, 23
      %p237 = por %p235, %p236
      %p239 = scmp.ne.s32.totalorder %s224, %s238
      %p240 = scmp.eq.s32.totalorder %s23, 0
      %p241 = por %p239, %p240
      %s243 = sadd.s32 %s242, 1
      %p246 = scmp.eq.s32.totalorder %s17, 23
      %p247 = scmp.ne.s32.totalorder %s242, %s244
      %p248 = scmp.eq.s32.totalorder %s17, 0
      %p249 = por %p247, %p248
      %p250 = scmp.ne.s32.totalorder %s242, %s244
      %p251 = scmp.eq.s32.totalorder %s22, 23
      %p252 = por %p250, %p251
      %p253 = scmp.ne.s32.totalorder %s244, %s245
      %p254 = scmp.eq.s32.totalorder %s22, 0
      %p255 = por %p253, %p254
      %p256 = scmp.ne.s32.totalorder %s244, %s245
      %p257 = scmp.eq.s32.totalorder %s23, 23
      %p258 = por %p256, %p257
      %p260 = scmp.ne.s32.totalorder %s245, %s259
      %p261 = scmp.eq.s32.totalorder %s23, 0
      %p262 = por %p260, %p261
      %s264 = sadd.s32 %s263, 1
      %p267 = scmp.eq.s32.totalorder %s17, 23
      %p268 = scmp.ne.s32.totalorder %s263, %s265
      %p269 = scmp.eq.s32.totalorder %s17, 0
      %p270 = por %p268, %p269
      %p271 = scmp.ne.s32.totalorder %s263, %s265
      %p272 = scmp.eq.s32.totalorder %s22, 23
      %p273 = por %p271, %p272
      %p274 = scmp.ne.s32.totalorder %s265, %s266
      %p275 = scmp.eq.s32.totalorder %s22, 0
      %p276 = por %p274, %p275
      %p277 = scmp.ne.s32.totalorder %s265, %s266
      %p278 = scmp.eq.s32.totalorder %s23, 23
      %p279 = por %p277, %p278
      %p281 = scmp.ne.s32.totalorder %s266, %s280
      %p282 = scmp.eq.s32.totalorder %s23, 0
      %p283 = por %p281, %p282
      %p284 = scmp.le.s32.totalorder 1, %s17
      %p285 = scmp.lt.s32.totalorder %s17, 25
      %p286 = pnand %p284, %p285
      %p287 = pneg %p286
      // Predicated region
      $region9: #{tpu_custom_call.1} parent=5 // pred_check
        _
      $region10: #{tpu_custom_call.1} parent=5 // pred_check_branch
        %289 = sbr.rel (%p286) target = $region12
      $region11: #{tpu_custom_call.1} parent=5 // pred_region
        %s290 = ssub.s32 %s17, 1
        // Predicated region
        $region13: #{tpu_custom_call.1} parent=11 // pred_check
          %p291 = pneg %p87
        $region14: #{tpu_custom_call.1} parent=11 // pred_check_branch
          %293 = sbr.rel (%p291) target = $region16
        $region15: #{tpu_custom_call.1} parent=11 // pred_region
          _
        $region16: #{tpu_custom_call.1} parent=11 // pred_fallthru
          _
        // Predicated region
        $region17: #{tpu_custom_call.1} parent=11 // pred_check
          %p294 = pneg %p108
        $region18: #{tpu_custom_call.1} parent=11 // pred_check_branch
          %296 = sbr.rel (%p294) target = $region20
        $region19: #{tpu_custom_call.1} parent=11 // pred_region
          _
        $region20: #{tpu_custom_call.1} parent=11 // pred_fallthru
          _
        // Predicated region
        $region21: #{tpu_custom_call.1} parent=11 // pred_check
          %p297 = pneg %p129
        $region22: #{tpu_custom_call.1} parent=11 // pred_check_branch
          %299 = sbr.rel (%p297) target = $region24
        $region23: #{tpu_custom_call.1} parent=11 // pred_region
          _
        $region24: #{tpu_custom_call.1} parent=11 // pred_fallthru
          _
        // Predicated region
        $region25: #{tpu_custom_call.1} parent=11 // pred_check
          %p300 = pneg %p150
        $region26: #{tpu_custom_call.1} parent=11 // pred_check_branch
          %302 = sbr.rel (%p300) target = $region28
        $region27: #{tpu_custom_call.1} parent=11 // pred_region
          _
        $region28: #{tpu_custom_call.1} parent=11 // pred_fallthru
          _
        // Predicated region
        $region29: #{tpu_custom_call.1} parent=11 // pred_check
          %p303 = pneg %p171
        $region30: #{tpu_custom_call.1} parent=11 // pred_check_branch
          %305 = sbr.rel (%p303) target = $region32
        $region31: #{tpu_custom_call.1} parent=11 // pred_region
          _
        $region32: #{tpu_custom_call.1} parent=11 // pred_fallthru
          _
        // Predicated region
        $region33: #{tpu_custom_call.1} parent=11 // pred_check
          %p306 = pneg %p192
        $region34: #{tpu_custom_call.1} parent=11 // pred_check_branch
          %308 = sbr.rel (%p306) target = $region36
        $region35: #{tpu_custom_call.1} parent=11 // pred_region
          _
        $region36: #{tpu_custom_call.1} parent=11 // pred_fallthru
          _
        // Predicated region
        $region37: #{tpu_custom_call.1} parent=11 // pred_check
          %p309 = pneg %p213
        $region38: #{tpu_custom_call.1} parent=11 // pred_check_branch
          %311 = sbr.rel (%p309) target = $region40
        $region39: #{tpu_custom_call.1} parent=11 // pred_region
          _
        $region40: #{tpu_custom_call.1} parent=11 // pred_fallthru
          _
        // Predicated region
        $region41: #{tpu_custom_call.1} parent=11 // pred_check
          %p312 = pneg %p234
        $region42: #{tpu_custom_call.1} parent=11 // pred_check_branch
          %314 = sbr.rel (%p312) target = $region44
        $region43: #{tpu_custom_call.1} parent=11 // pred_region
          _
        $region44: #{tpu_custom_call.1} parent=11 // pred_fallthru
          _
        // Predicated region
        $region45: #{tpu_custom_call.1} parent=11 // pred_check
          %p315 = pneg %p255
        $region46: #{tpu_custom_call.1} parent=11 // pred_check_branch
          %317 = sbr.rel (%p315) target = $region48
        $region47: #{tpu_custom_call.1} parent=11 // pred_region
          _
        $region48: #{tpu_custom_call.1} parent=11 // pred_fallthru
          _
      $region12: #{tpu_custom_call.1} parent=5 // pred_fallthru
        _
      %p318 = scmp.lt.s32.totalorder %s17, 24
      // Predicated region
      $region49: #{tpu_custom_call.1} parent=5 // pred_check
        %p319 = pneg %p318
      $region50: #{tpu_custom_call.1} parent=5 // pred_check_branch
        %321 = sbr.rel (%p319) target = $region52
      $region51: #{tpu_custom_call.1} parent=5 // pred_region
        // Predicated region
        $region53: #{tpu_custom_call.1} parent=51 // pred_check
          %p322 = pneg %p60
        $region54: #{tpu_custom_call.1} parent=51 // pred_check_branch
          %324 = sbr.rel (%p322) target = $region56
        $region55: #{tpu_custom_call.1} parent=51 // pred_region
          %s325 = smul.u32 %s25, 4
          %s326 = sadd.s32 %s325, %s26
          %s327 = smul.u32 16, %s326
          %p328 = scmp.lt.s32.totalorder %s327, 127
          %s329 = scalar_select %p328, %s327, 127
          %s330 = smul.addr %s329, 8
          %s331 = scalar_lea.vmem %s0, %s330
          %s332 = smul.u32 %s25, 4
          %s333 = sadd.s32 %s332, %s26
          %s334 = smul.u32 16, %s333
        $region56: #{tpu_custom_call.1} parent=51 // pred_fallthru
          _
      $region52: #{tpu_custom_call.1} parent=5 // pred_fallthru
        _
      %p335 = scmp.le.s32.totalorder 1, %s17
      %p336 = scmp.lt.s32.totalorder %s17, 25
      %p337 = pnand %p335, %p336
      %p338 = pneg %p337
      // Predicated region
      $region57: #{tpu_custom_call.1} parent=5 // pred_check
        _
      $region58: #{tpu_custom_call.1} parent=5 // pred_check_branch
        %340 = sbr.rel (%p337) target = $region60
      $region59: #{tpu_custom_call.1} parent=5 // pred_region
        %s341 = ssub.s32 %s17, 1
        %s342 = smul.u32 %s28, 4
        %s343 = sadd.s32 %s342, %s29
        %s344 = smul.u32 16, %s343
        %p345 = scmp.lt.s32.totalorder %s344, 127
        %s346 = scalar_select %p345, %s344, 127
        %s347 = smul.addr %s346, 8
        %s348 = scalar_lea.vmem %s0, %s347
        %p349 = pneg %p66
        %p350 = pneg %p63
        %p351 = pneg %p87
        %p352 = pneg %p84
        %p353 = pneg %p108
        %p354 = pneg %p105
        %p355 = pneg %p129
        %p356 = pneg %p126
        %p357 = pneg %p150
        %p358 = pneg %p147
        %p359 = pneg %p171
        %p360 = pneg %p168
        %p361 = pneg %p192
        %p362 = pneg %p189
        %p363 = pneg %p213
        %p364 = pneg %p210
        %p365 = pneg %p234
        %p366 = pneg %p231
        %p367 = pneg %p255
        %p368 = pneg %p252
        %p369 = pneg %p276
        %p370 = pneg %p273
        %s371 = smul.u32 %s28, 4
        %s372 = sadd.s32 %s371, %s29
        %s373 = smul.u32 16, %s372
        %p374 = scmp.lt.s32.totalorder %s373, 127
        %s375 = scalar_select %p374, %s373, 127
        %s376 = smul.addr %s375, 8
        %s377 = scalar_lea.vmem %s0, %s376
        %s378 = smul.u32 %s28, 4
        %s379 = sadd.s32 %s378, %s29
        %s380 = smul.u32 16, %s379
        %p382 = scmp.eq.s32.totalorder %s28, 0
        %p383 = scmp.eq.s32.totalorder %s29, 0
        %p384 = pnand %p382, %p383
        %p385 = pneg %p384
        %p386 = scmp.eq.s32.totalorder %s28, 1
        %p387 = scmp.eq.s32.totalorder %s29, 3
        %p388 = pnand %p386, %p387
        %p389 = pneg %p388
        %p390 = scmp.eq.s32.totalorder %s27, 0
        %p391 = pnand %p390, %p385
        %p392 = pneg %p391
        // Predicated region
        $region61: #{tpu_custom_call.1} parent=59 // pred_check
          _
        $region62: #{tpu_custom_call.1} parent=59 // pred_check_branch
          %394 = sbr.rel (%p391) target = $region64
        $region63: #{tpu_custom_call.1} parent=59 // pred_region
          %vm395 = vcmask 516096
          %396 = vst.msk [vmem:[#allocation2] sm:$0x1] %vm395, 0.0
          %397 = vst.msk [vmem:[#allocation3] sm:$0x1] %vm395, 0.0
          %398 = vst.msk [vmem:[#allocation4] sm:$0x1] %vm395, 0.0
          %vm399 = vcmask 523264
          %400 = vst.msk [vmem:[#allocation5] sm:$0xff] %vm399, 0.0
          %401 = vst.msk [vmem:[#allocation5 + $0x8] sm:$0xff] %vm399, 0.0
          %402 = vst.msk [vmem:[#allocation5 + $0x10] sm:$0xff] %vm399, 0.0
          %403 = vst.msk [vmem:[#allocation5 + $0x18] sm:$0xff] %vm399, 0.0
          %404 = vst.msk [vmem:[#allocation5 + $0x20] sm:$0xff] %vm399, 0.0
          %405 = vst.msk [vmem:[#allocation5 + $0x28] sm:$0xff] %vm399, 0.0
          %406 = vst.msk [vmem:[#allocation5 + $0x30] sm:$0xff] %vm399, 0.0
          %407 = vst.msk [vmem:[#allocation5 + $0x38] sm:$0xff] %vm399, 0.0
          %408 = vst [vmem:[#allocation6] sm:$0x1] 0.0
          %409 = vst [vmem:[#allocation7] sm:$0xff] 0.0
          %410 = vst [vmem:[#allocation7 + $0x8] sm:$0xff] 0.0
          %411 = vst [vmem:[#allocation7 + $0x10] sm:$0xff] 0.0
          %412 = vst [vmem:[#allocation7 + $0x18] sm:$0xff] 0.0
          %413 = vst [vmem:[#allocation7 + $0x20] sm:$0xff] 0.0
          %414 = vst [vmem:[#allocation7 + $0x28] sm:$0xff] 0.0
          %415 = vst [vmem:[#allocation7 + $0x30] sm:$0xff] 0.0
          %416 = vst [vmem:[#allocation7 + $0x38] sm:$0xff] 0.0
          %417 = vst [vmem:[#allocation7 + $0x40] sm:$0xff] 0.0
          %418 = vst [vmem:[#allocation7 + $0x48] sm:$0xff] 0.0
          %419 = vst [vmem:[#allocation7 + $0x50] sm:$0xff] 0.0
          %420 = vst [vmem:[#allocation7 + $0x58] sm:$0xff] 0.0
          %421 = vst [vmem:[#allocation7 + $0x60] sm:$0xff] 0.0
          %422 = vst [vmem:[#allocation7 + $0x68] sm:$0xff] 0.0
          %423 = vst [vmem:[#allocation7 + $0x70] sm:$0xff] 0.0
          %424 = vst [vmem:[#allocation7 + $0x78] sm:$0xff] 0.0
          %425 = vst [vmem:[#allocation12] sm:$0xff] -inf
          %426 = vst [vmem:[#allocation12 + $0x8] sm:$0xff] -inf
        $region64: #{tpu_custom_call.1} parent=59 // pred_fallthru
          _
        // Predicated region
        $region65: #{tpu_custom_call.1} parent=59 // pred_check
          %p427 = pneg %p390
        $region66: #{tpu_custom_call.1} parent=59 // pred_check_branch
          %429 = sbr.rel (%p427) target = $region68
        $region67: #{tpu_custom_call.1} parent=59 // pred_region
          %v430 = vld [vmem:[%s377] sm:$0xff]
          %v431 = vld [vmem:[%s377 + $0x8] sm:$0xff]
          %v432 = vld [vmem:[%s377 + $0x10] sm:$0xff]
          %v433 = vld [vmem:[%s377 + $0x18] sm:$0xff]
          %v434 = vld [vmem:[%s377 + $0x20] sm:$0xff]
          %v435 = vld [vmem:[%s377 + $0x28] sm:$0xff]
          %v436 = vld [vmem:[%s377 + $0x30] sm:$0xff]
          %v437 = vld [vmem:[%s377 + $0x38] sm:$0xff]
          %v438 = vld [vmem:[%s377 + $0x40] sm:$0xff]
          %v439 = vld [vmem:[%s377 + $0x48] sm:$0xff]
          %v440 = vld [vmem:[%s377 + $0x50] sm:$0xff]
          %v441 = vld [vmem:[%s377 + $0x58] sm:$0xff]
          %v442 = vld [vmem:[%s377 + $0x60] sm:$0xff]
          %v443 = vld [vmem:[%s377 + $0x68] sm:$0xff]
          %v444 = vld [vmem:[%s377 + $0x70] sm:$0xff]
          %v445 = vld [vmem:[%s377 + $0x78] sm:$0xff]
          %v446 = vld [vmem:[%s1] sm:$0x7]
          %448 = vset.pattern.permute.xlu0 0
          %449 = vperm.xlu0 %448, %v430
          %v450 = vpop.permute.xlu0 %449
          %453 = vset.pattern.permute.xlu0 0
          %454 = vperm.xlu0 %453, %v431
          %v455 = vpop.permute.xlu0 %454
          %458 = vset.pattern.permute.xlu0 0
          %459 = vperm.xlu0 %458, %v432
          %v460 = vpop.permute.xlu0 %459
          %463 = vset.pattern.permute.xlu0 0
          %464 = vperm.xlu0 %463, %v433
          %v465 = vpop.permute.xlu0 %464
          %468 = vset.pattern.permute.xlu0 0
          %469 = vperm.xlu0 %468, %v434
          %v470 = vpop.permute.xlu0 %469
          %473 = vset.pattern.permute.xlu0 0
          %474 = vperm.xlu0 %473, %v435
          %v475 = vpop.permute.xlu0 %474
          %478 = vset.pattern.permute.xlu0 0
          %479 = vperm.xlu0 %478, %v436
          %v480 = vpop.permute.xlu0 %479
          %483 = vset.pattern.permute.xlu0 0
          %484 = vperm.xlu0 %483, %v437
          %v485 = vpop.permute.xlu0 %484
          %488 = vset.pattern.permute.xlu0 0
          %489 = vperm.xlu0 %488, %v438
          %v490 = vpop.permute.xlu0 %489
          %493 = vset.pattern.permute.xlu0 0
          %494 = vperm.xlu0 %493, %v439
          %v495 = vpop.permute.xlu0 %494
          %498 = vset.pattern.permute.xlu0 0
          %499 = vperm.xlu0 %498, %v440
          %v500 = vpop.permute.xlu0 %499
          %503 = vset.pattern.permute.xlu0 0
          %504 = vperm.xlu0 %503, %v441
          %v505 = vpop.permute.xlu0 %504
          %508 = vset.pattern.permute.xlu0 0
          %509 = vperm.xlu0 %508, %v442
          %v510 = vpop.permute.xlu0 %509
          %513 = vset.pattern.permute.xlu0 0
          %514 = vperm.xlu0 %513, %v443
          %v515 = vpop.permute.xlu0 %514
          %518 = vset.pattern.permute.xlu0 0
          %519 = vperm.xlu0 %518, %v444
          %v520 = vpop.permute.xlu0 %519
          %523 = vset.pattern.permute.xlu0 0
          %524 = vperm.xlu0 %523, %v445
          %v525 = vpop.permute.xlu0 %524
          %v527 = vlaneseq
          %v528 = vshrl.u32 %v527, 7
          %v529 = vsub.s32 0, %v528
          %v530 = vrot.slane %v446, %v529
          %v531 = vmul.f32 %v450, %v530
          %v532 = vmul.f32 %v455, %v530
          %v533 = vmul.f32 %v460, %v530
          %v534 = vmul.f32 %v465, %v530
          %v535 = vmul.f32 %v470, %v530
          %v536 = vmul.f32 %v475, %v530
          %v537 = vmul.f32 %v480, %v530
          %v538 = vmul.f32 %v485, %v530
          %v539 = vmul.f32 %v490, %v530
          %v540 = vmul.f32 %v495, %v530
          %v541 = vmul.f32 %v500, %v530
          %v542 = vmul.f32 %v505, %v530
          %v543 = vmul.f32 %v510, %v530
          %v544 = vmul.f32 %v515, %v530
          %v545 = vmul.f32 %v520, %v530
          %v546 = vmul.f32 %v525, %v530
          %547 = vset.pattern.permute.xlu0 1
          %548 = vperm.xlu0 %547, %v430
          %v549 = vpop.permute.xlu0 %548
          %551 = vset.pattern.permute.xlu0 1
          %552 = vperm.xlu0 %551, %v431
          %v553 = vpop.permute.xlu0 %552
          %555 = vset.pattern.permute.xlu0 1
          %556 = vperm.xlu0 %555, %v432
          %v557 = vpop.permute.xlu0 %556
          %559 = vset.pattern.permute.xlu0 1
          %560 = vperm.xlu0 %559, %v433
          %v561 = vpop.permute.xlu0 %560
          %563 = vset.pattern.permute.xlu0 1
          %564 = vperm.xlu0 %563, %v434
          %v565 = vpop.permute.xlu0 %564
          %567 = vset.pattern.permute.xlu0 1
          %568 = vperm.xlu0 %567, %v435
          %v569 = vpop.permute.xlu0 %568
          %571 = vset.pattern.permute.xlu0 1
          %572 = vperm.xlu0 %571, %v436
          %v573 = vpop.permute.xlu0 %572
          %575 = vset.pattern.permute.xlu0 1
          %576 = vperm.xlu0 %575, %v437
          %v577 = vpop.permute.xlu0 %576
          %579 = vset.pattern.permute.xlu0 1
          %580 = vperm.xlu0 %579, %v438
          %v581 = vpop.permute.xlu0 %580
          %583 = vset.pattern.permute.xlu0 1
          %584 = vperm.xlu0 %583, %v439
          %v585 = vpop.permute.xlu0 %584
          %587 = vset.pattern.permute.xlu0 1
          %588 = vperm.xlu0 %587, %v440
          %v589 = vpop.permute.xlu0 %588
          %591 = vset.pattern.permute.xlu0 1
          %592 = vperm.xlu0 %591, %v441
          %v593 = vpop.permute.xlu0 %592
          %595 = vset.pattern.permute.xlu0 1
          %596 = vperm.xlu0 %595, %v442
          %v597 = vpop.permute.xlu0 %596
          %599 = vset.pattern.permute.xlu0 1
          %600 = vperm.xlu0 %599, %v443
          %v601 = vpop.permute.xlu0 %600
          %603 = vset.pattern.permute.xlu0 1
          %604 = vperm.xlu0 %603, %v444
          %v605 = vpop.permute.xlu0 %604
          %607 = vset.pattern.permute.xlu0 1
          %608 = vperm.xlu0 %607, %v445
          %v609 = vpop.permute.xlu0 %608
          %v611 = vlaneseq
          %v612 = vshrl.u32 %v611, 7
          %v613 = vsub.s32 1, %v612
          %v614 = vrot.slane %v446, %v613
          %v615 = vmul.f32 %v549, %v614
          %v616 = vmul.f32 %v553, %v614
          %v617 = vmul.f32 %v557, %v614
          %v618 = vmul.f32 %v561, %v614
          %v619 = vmul.f32 %v565, %v614
          %v620 = vmul.f32 %v569, %v614
          %v621 = vmul.f32 %v573, %v614
          %v622 = vmul.f32 %v577, %v614
          %v623 = vmul.f32 %v581, %v614
          %v624 = vmul.f32 %v585, %v614
          %v625 = vmul.f32 %v589, %v614
          %v626 = vmul.f32 %v593, %v614
          %v627 = vmul.f32 %v597, %v614
          %v628 = vmul.f32 %v601, %v614
          %v629 = vmul.f32 %v605, %v614
          %v630 = vmul.f32 %v609, %v614
          %v631 = vadd.f32 %v531, %v615
          %v632 = vadd.f32 %v532, %v616
          %v633 = vadd.f32 %v533, %v617
          %v634 = vadd.f32 %v534, %v618
          %v635 = vadd.f32 %v535, %v619
          %v636 = vadd.f32 %v536, %v620
          %v637 = vadd.f32 %v537, %v621
          %v638 = vadd.f32 %v538, %v622
          %v639 = vadd.f32 %v539, %v623
          %v640 = vadd.f32 %v540, %v624
          %v641 = vadd.f32 %v541, %v625
          %v642 = vadd.f32 %v542, %v626
          %v643 = vadd.f32 %v543, %v627
          %v644 = vadd.f32 %v544, %v628
          %v645 = vadd.f32 %v545, %v629
          %v646 = vadd.f32 %v546, %v630
          %647 = vset.pattern.permute.xlu0 2
          %648 = vperm.xlu0 %647, %v430
          %v649 = vpop.permute.xlu0 %648
          %651 = vset.pattern.permute.xlu0 2
          %652 = vperm.xlu0 %651, %v431
          %v653 = vpop.permute.xlu0 %652
          %655 = vset.pattern.permute.xlu0 2
          %656 = vperm.xlu0 %655, %v432
          %v657 = vpop.permute.xlu0 %656
          %659 = vset.pattern.permute.xlu0 2
          %660 = vperm.xlu0 %659, %v433
          %v661 = vpop.permute.xlu0 %660
          %663 = vset.pattern.permute.xlu0 2
          %664 = vperm.xlu0 %663, %v434
          %v665 = vpop.permute.xlu0 %664
          %667 = vset.pattern.permute.xlu0 2
          %668 = vperm.xlu0 %667, %v435
          %v669 = vpop.permute.xlu0 %668
          %671 = vset.pattern.permute.xlu0 2
          %672 = vperm.xlu0 %671, %v436
          %v673 = vpop.permute.xlu0 %672
          %675 = vset.pattern.permute.xlu0 2
          %676 = vperm.xlu0 %675, %v437
          %v677 = vpop.permute.xlu0 %676
          %679 = vset.pattern.permute.xlu0 2
          %680 = vperm.xlu0 %679, %v438
          %v681 = vpop.permute.xlu0 %680
          %683 = vset.pattern.permute.xlu0 2
          %684 = vperm.xlu0 %683, %v439
          %v685 = vpop.permute.xlu0 %684
          %687 = vset.pattern.permute.xlu0 2
          %688 = vperm.xlu0 %687, %v440
          %v689 = vpop.permute.xlu0 %688
          %691 = vset.pattern.permute.xlu0 2
          %692 = vperm.xlu0 %691, %v441
          %v693 = vpop.permute.xlu0 %692
          %695 = vset.pattern.permute.xlu0 2
          %696 = vperm.xlu0 %695, %v442
          %v697 = vpop.permute.xlu0 %696
          %699 = vset.pattern.permute.xlu0 2
          %700 = vperm.xlu0 %699, %v443
          %v701 = vpop.permute.xlu0 %700
          %703 = vset.pattern.permute.xlu0 2
          %704 = vperm.xlu0 %703, %v444
          %v705 = vpop.permute.xlu0 %704
          %707 = vset.pattern.permute.xlu0 2
          %708 = vperm.xlu0 %707, %v445
          %v709 = vpop.permute.xlu0 %708
          %v711 = vlaneseq
          %v712 = vshrl.u32 %v711, 7
          %v713 = vsub.s32 2, %v712
          %v714 = vrot.slane %v446, %v713
          %v715 = vmul.f32 %v649, %v714
          %v716 = vmul.f32 %v653, %v714
          %v717 = vmul.f32 %v657, %v714
          %v718 = vmul.f32 %v661, %v714
          %v719 = vmul.f32 %v665, %v714
          %v720 = vmul.f32 %v669, %v714
          %v721 = vmul.f32 %v673, %v714
          %v722 = vmul.f32 %v677, %v714
          %v723 = vmul.f32 %v681, %v714
          %v724 = vmul.f32 %v685, %v714
          %v725 = vmul.f32 %v689, %v714
          %v726 = vmul.f32 %v693, %v714
          %v727 = vmul.f32 %v697, %v714
          %v728 = vmul.f32 %v701, %v714
          %v729 = vmul.f32 %v705, %v714
          %v730 = vmul.f32 %v709, %v714
          %v731 = vadd.f32 %v631, %v715
          %v732 = vadd.f32 %v632, %v716
          %v733 = vadd.f32 %v633, %v717
          %v734 = vadd.f32 %v634, %v718
          %v735 = vadd.f32 %v635, %v719
          %v736 = vadd.f32 %v636, %v720
          %v737 = vadd.f32 %v637, %v721
          %v738 = vadd.f32 %v638, %v722
          %v739 = vadd.f32 %v639, %v723
          %v740 = vadd.f32 %v640, %v724
          %v741 = vadd.f32 %v641, %v725
          %v742 = vadd.f32 %v642, %v726
          %v743 = vadd.f32 %v643, %v727
          %v744 = vadd.f32 %v644, %v728
          %v745 = vadd.f32 %v645, %v729
          %v746 = vadd.f32 %v646, %v730
          %v747 = vld [vmem:[#allocation2] sm:$0x1]
          %vm748 = vcmask 523264
          %v749 = vsel %vm748, %v731, 0.0
          %v750 = vsel %vm748, %v732, 0.0
          %v751 = vadd.f32 %v749, %v750
          %v752 = vsel %vm748, %v733, 0.0
          %v753 = vadd.f32 %v751, %v752
          %v754 = vsel %vm748, %v734, 0.0
          %v755 = vadd.f32 %v753, %v754
          %v756 = vsel %vm748, %v735, 0.0
          %v757 = vadd.f32 %v755, %v756
          %v758 = vsel %vm748, %v736, 0.0
          %v759 = vadd.f32 %v757, %v758
          %v760 = vsel %vm748, %v737, 0.0
          %v761 = vadd.f32 %v759, %v760
          %v762 = vsel %vm748, %v738, 0.0
          %v763 = vadd.f32 %v761, %v762
          %v764 = vsel %vm748, %v739, 0.0
          %v765 = vadd.f32 %v763, %v764
          %v766 = vsel %vm748, %v740, 0.0
          %v767 = vadd.f32 %v765, %v766
          %v768 = vsel %vm748, %v741, 0.0
          %v769 = vadd.f32 %v767, %v768
          %v770 = vsel %vm748, %v742, 0.0
          %v771 = vadd.f32 %v769, %v770
          %v772 = vsel %vm748, %v743, 0.0
          %v773 = vadd.f32 %v771, %v772
          %v774 = vsel %vm748, %v744, 0.0
          %v775 = vadd.f32 %v773, %v774
          %v776 = vsel %vm748, %v745, 0.0
          %v777 = vadd.f32 %v775, %v776
          %v778 = vsel %vm748, %v746, 0.0
          %v779 = vadd.f32 %v777, %v778
          %v780 = vrot.slane %v779, 4
          %v781 = vadd.f32 %v779, %v780
          %v782 = vrot.slane %v781, 2
          %v783 = vadd.f32 %v781, %v782
          %v784 = vrot.slane %v783, 1
          %v785 = vadd.f32 %v783, %v784
          %v786 = vadd.f32 %v747, %v785
          %vm787 = vcmask 516096
          %788 = vst.msk [vmem:[#allocation2] sm:$0x1] %vm787, %v786
          %v789 = vld [vmem:[#allocation3] sm:$0x1]
          %v790 = vmul.f32 %v731, %v731
          %v791 = vmul.f32 %v732, %v732
          %v792 = vmul.f32 %v733, %v733
          %v793 = vmul.f32 %v734, %v734
          %v794 = vmul.f32 %v735, %v735
          %v795 = vmul.f32 %v736, %v736
          %v796 = vmul.f32 %v737, %v737
          %v797 = vmul.f32 %v738, %v738
          %v798 = vmul.f32 %v739, %v739
          %v799 = vmul.f32 %v740, %v740
          %v800 = vmul.f32 %v741, %v741
          %v801 = vmul.f32 %v742, %v742
          %v802 = vmul.f32 %v743, %v743
          %v803 = vmul.f32 %v744, %v744
          %v804 = vmul.f32 %v745, %v745
          %v805 = vmul.f32 %v746, %v746
          %v806 = vsel %vm748, %v790, 0.0
          %v807 = vsel %vm748, %v791, 0.0
          %v808 = vadd.f32 %v806, %v807
          %v809 = vsel %vm748, %v792, 0.0
          %v810 = vadd.f32 %v808, %v809
          %v811 = vsel %vm748, %v793, 0.0
          %v812 = vadd.f32 %v810, %v811
          %v813 = vsel %vm748, %v794, 0.0
          %v814 = vadd.f32 %v812, %v813
          %v815 = vsel %vm748, %v795, 0.0
          %v816 = vadd.f32 %v814, %v815
          %v817 = vsel %vm748, %v796, 0.0
          %v818 = vadd.f32 %v816, %v817
          %v819 = vsel %vm748, %v797, 0.0
          %v820 = vadd.f32 %v818, %v819
          %v821 = vsel %vm748, %v798, 0.0
          %v822 = vadd.f32 %v820, %v821
          %v823 = vsel %vm748, %v799, 0.0
          %v824 = vadd.f32 %v822, %v823
          %v825 = vsel %vm748, %v800, 0.0
          %v826 = vadd.f32 %v824, %v825
          %v827 = vsel %vm748, %v801, 0.0
          %v828 = vadd.f32 %v826, %v827
          %v829 = vsel %vm748, %v802, 0.0
          %v830 = vadd.f32 %v828, %v829
          %v831 = vsel %vm748, %v803, 0.0
          %v832 = vadd.f32 %v830, %v831
          %v833 = vsel %vm748, %v804, 0.0
          %v834 = vadd.f32 %v832, %v833
          %v835 = vsel %vm748, %v805, 0.0
          %v836 = vadd.f32 %v834, %v835
          %v837 = vrot.slane %v836, 4
          %v838 = vadd.f32 %v836, %v837
          %v839 = vrot.slane %v838, 2
          %v840 = vadd.f32 %v838, %v839
          %v841 = vrot.slane %v840, 1
          %v842 = vadd.f32 %v840, %v841
          %v843 = vadd.f32 %v789, %v842
          %844 = vst.msk [vmem:[#allocation3] sm:$0x1] %vm787, %v843
        $region68: #{tpu_custom_call.1} parent=59 // pred_fallthru
          _
        %p845 = scmp.eq.s32.totalorder %s27, 1
        // Predicated region
        $region69: #{tpu_custom_call.1} parent=59 // pred_check
          %p846 = pneg %p845
        $region70: #{tpu_custom_call.1} parent=59 // pred_check_branch
          %848 = sbr.rel (%p846) target = $region72
        $region71: #{tpu_custom_call.1} parent=59 // pred_region
          // Predicated region
          $region73: #{tpu_custom_call.1} parent=71 // pred_check
            _
          $region74: #{tpu_custom_call.1} parent=71 // pred_check_branch
            %850 = sbr.rel (%p384) target = $region76
          $region75: #{tpu_custom_call.1} parent=71 // pred_region
            %v851 = vld [vmem:[#allocation2] sm:$0x1]
            %v852 = vmul.f32 %v851, 0.0009765625
            %v853 = vld [vmem:[#allocation3] sm:$0x1]
            %v854 = vmul.f32 %v853, 0.0009765625
            %v855 = vmul.f32 %v852, %v852
            %v856 = vsub.f32 %v854, %v855
            %v857 = vmax.f32 %v856, 0.0
            %v858 = vld [vmem:[%s2] sm:$0x1]
            %v859 = vadd.f32 %v857, 1e-05
            %v860 = vrsqrt.pop %v859
            %v861 = vmul.f32 %v858, %v860
            %vm862 = vcmask 516096
            %863 = vst.msk [vmem:[#allocation8] sm:$0x1] %vm862, %v861
            %v864 = vld [vmem:[%s3] sm:$0x1]
            %v865 = vmul.f32 %v852, %v861
            %v866 = vsub.f32 %v864, %v865
            %867 = vst.msk [vmem:[#allocation9] sm:$0x1] %vm862, %v866
          $region76: #{tpu_custom_call.1} parent=71 // pred_fallthru
            _
          %v868 = vld [vmem:[%s377] sm:$0xff]
          %v869 = vld [vmem:[%s377 + $0x8] sm:$0xff]
          %v870 = vld [vmem:[%s377 + $0x10] sm:$0xff]
          %v871 = vld [vmem:[%s377 + $0x18] sm:$0xff]
          %v872 = vld [vmem:[%s377 + $0x20] sm:$0xff]
          %v873 = vld [vmem:[%s377 + $0x28] sm:$0xff]
          %v874 = vld [vmem:[%s377 + $0x30] sm:$0xff]
          %v875 = vld [vmem:[%s377 + $0x38] sm:$0xff]
          %v876 = vld [vmem:[%s377 + $0x40] sm:$0xff]
          %v877 = vld [vmem:[%s377 + $0x48] sm:$0xff]
          %v878 = vld [vmem:[%s377 + $0x50] sm:$0xff]
          %v879 = vld [vmem:[%s377 + $0x58] sm:$0xff]
          %v880 = vld [vmem:[%s377 + $0x60] sm:$0xff]
          %v881 = vld [vmem:[%s377 + $0x68] sm:$0xff]
          %v882 = vld [vmem:[%s377 + $0x70] sm:$0xff]
          %v883 = vld [vmem:[%s377 + $0x78] sm:$0xff]
          %v884 = vld [vmem:[%s1] sm:$0x7]
          %886 = vset.pattern.permute.xlu0 0
          %887 = vperm.xlu0 %886, %v868
          %v888 = vpop.permute.xlu0 %887
          %891 = vset.pattern.permute.xlu0 0
          %892 = vperm.xlu0 %891, %v869
          %v893 = vpop.permute.xlu0 %892
          %896 = vset.pattern.permute.xlu0 0
          %897 = vperm.xlu0 %896, %v870
          %v898 = vpop.permute.xlu0 %897
          %901 = vset.pattern.permute.xlu0 0
          %902 = vperm.xlu0 %901, %v871
          %v903 = vpop.permute.xlu0 %902
          %906 = vset.pattern.permute.xlu0 0
          %907 = vperm.xlu0 %906, %v872
          %v908 = vpop.permute.xlu0 %907
          %911 = vset.pattern.permute.xlu0 0
          %912 = vperm.xlu0 %911, %v873
          %v913 = vpop.permute.xlu0 %912
          %916 = vset.pattern.permute.xlu0 0
          %917 = vperm.xlu0 %916, %v874
          %v918 = vpop.permute.xlu0 %917
          %921 = vset.pattern.permute.xlu0 0
          %922 = vperm.xlu0 %921, %v875
          %v923 = vpop.permute.xlu0 %922
          %926 = vset.pattern.permute.xlu0 0
          %927 = vperm.xlu0 %926, %v876
          %v928 = vpop.permute.xlu0 %927
          %931 = vset.pattern.permute.xlu0 0
          %932 = vperm.xlu0 %931, %v877
          %v933 = vpop.permute.xlu0 %932
          %936 = vset.pattern.permute.xlu0 0
          %937 = vperm.xlu0 %936, %v878
          %v938 = vpop.permute.xlu0 %937
          %941 = vset.pattern.permute.xlu0 0
          %942 = vperm.xlu0 %941, %v879
          %v943 = vpop.permute.xlu0 %942
          %946 = vset.pattern.permute.xlu0 0
          %947 = vperm.xlu0 %946, %v880
          %v948 = vpop.permute.xlu0 %947
          %951 = vset.pattern.permute.xlu0 0
          %952 = vperm.xlu0 %951, %v881
          %v953 = vpop.permute.xlu0 %952
          %956 = vset.pattern.permute.xlu0 0
          %957 = vperm.xlu0 %956, %v882
          %v958 = vpop.permute.xlu0 %957
          %961 = vset.pattern.permute.xlu0 0
          %962 = vperm.xlu0 %961, %v883
          %v963 = vpop.permute.xlu0 %962
          %v965 = vlaneseq
          %v966 = vshrl.u32 %v965, 7
          %v967 = vsub.s32 0, %v966
          %v968 = vrot.slane %v884, %v967
          %v969 = vmul.f32 %v888, %v968
          %v970 = vmul.f32 %v893, %v968
          %v971 = vmul.f32 %v898, %v968
          %v972 = vmul.f32 %v903, %v968
          %v973 = vmul.f32 %v908, %v968
          %v974 = vmul.f32 %v913, %v968
          %v975 = vmul.f32 %v918, %v968
          %v976 = vmul.f32 %v923, %v968
          %v977 = vmul.f32 %v928, %v968
          %v978 = vmul.f32 %v933, %v968
          %v979 = vmul.f32 %v938, %v968
          %v980 = vmul.f32 %v943, %v968
          %v981 = vmul.f32 %v948, %v968
          %v982 = vmul.f32 %v953, %v968
          %v983 = vmul.f32 %v958, %v968
          %v984 = vmul.f32 %v963, %v968
          %985 = vset.pattern.permute.xlu0 1
          %986 = vperm.xlu0 %985, %v868
          %v987 = vpop.permute.xlu0 %986
          %989 = vset.pattern.permute.xlu0 1
          %990 = vperm.xlu0 %989, %v869
          %v991 = vpop.permute.xlu0 %990
          %993 = vset.pattern.permute.xlu0 1
          %994 = vperm.xlu0 %993, %v870
          %v995 = vpop.permute.xlu0 %994
          %997 = vset.pattern.permute.xlu0 1
          %998 = vperm.xlu0 %997, %v871
          %v999 = vpop.permute.xlu0 %998
          %1001 = vset.pattern.permute.xlu0 1
          %1002 = vperm.xlu0 %1001, %v872
          %v1003 = vpop.permute.xlu0 %1002
          %1005 = vset.pattern.permute.xlu0 1
          %1006 = vperm.xlu0 %1005, %v873
          %v1007 = vpop.permute.xlu0 %1006
          %1009 = vset.pattern.permute.xlu0 1
          %1010 = vperm.xlu0 %1009, %v874
          %v1011 = vpop.permute.xlu0 %1010
          %1013 = vset.pattern.permute.xlu0 1
          %1014 = vperm.xlu0 %1013, %v875
          %v1015 = vpop.permute.xlu0 %1014
          %1017 = vset.pattern.permute.xlu0 1
          %1018 = vperm.xlu0 %1017, %v876
          %v1019 = vpop.permute.xlu0 %1018
          %1021 = vset.pattern.permute.xlu0 1
          %1022 = vperm.xlu0 %1021, %v877
          %v1023 = vpop.permute.xlu0 %1022
          %1025 = vset.pattern.permute.xlu0 1
          %1026 = vperm.xlu0 %1025, %v878
          %v1027 = vpop.permute.xlu0 %1026
          %1029 = vset.pattern.permute.xlu0 1
          %1030 = vperm.xlu0 %1029, %v879
          %v1031 = vpop.permute.xlu0 %1030
          %1033 = vset.pattern.permute.xlu0 1
          %1034 = vperm.xlu0 %1033, %v880
          %v1035 = vpop.permute.xlu0 %1034
          %1037 = vset.pattern.permute.xlu0 1
          %1038 = vperm.xlu0 %1037, %v881
          %v1039 = vpop.permute.xlu0 %1038
          %1041 = vset.pattern.permute.xlu0 1
          %1042 = vperm.xlu0 %1041, %v882
          %v1043 = vpop.permute.xlu0 %1042
          %1045 = vset.pattern.permute.xlu0 1
          %1046 = vperm.xlu0 %1045, %v883
          %v1047 = vpop.permute.xlu0 %1046
          %v1049 = vlaneseq
          %v1050 = vshrl.u32 %v1049, 7
          %v1051 = vsub.s32 1, %v1050
          %v1052 = vrot.slane %v884, %v1051
          %v1053 = vmul.f32 %v987, %v1052
          %v1054 = vmul.f32 %v991, %v1052
          %v1055 = vmul.f32 %v995, %v1052
          %v1056 = vmul.f32 %v999, %v1052
          %v1057 = vmul.f32 %v1003, %v1052
          %v1058 = vmul.f32 %v1007, %v1052
          %v1059 = vmul.f32 %v1011, %v1052
          %v1060 = vmul.f32 %v1015, %v1052
          %v1061 = vmul.f32 %v1019, %v1052
          %v1062 = vmul.f32 %v1023, %v1052
          %v1063 = vmul.f32 %v1027, %v1052
          %v1064 = vmul.f32 %v1031, %v1052
          %v1065 = vmul.f32 %v1035, %v1052
          %v1066 = vmul.f32 %v1039, %v1052
          %v1067 = vmul.f32 %v1043, %v1052
          %v1068 = vmul.f32 %v1047, %v1052
          %v1069 = vadd.f32 %v969, %v1053
          %v1070 = vadd.f32 %v970, %v1054
          %v1071 = vadd.f32 %v971, %v1055
          %v1072 = vadd.f32 %v972, %v1056
          %v1073 = vadd.f32 %v973, %v1057
          %v1074 = vadd.f32 %v974, %v1058
          %v1075 = vadd.f32 %v975, %v1059
          %v1076 = vadd.f32 %v976, %v1060
          %v1077 = vadd.f32 %v977, %v1061
          %v1078 = vadd.f32 %v978, %v1062
          %v1079 = vadd.f32 %v979, %v1063
          %v1080 = vadd.f32 %v980, %v1064
          %v1081 = vadd.f32 %v981, %v1065
          %v1082 = vadd.f32 %v982, %v1066
          %v1083 = vadd.f32 %v983, %v1067
          %v1084 = vadd.f32 %v984, %v1068
          %1085 = vset.pattern.permute.xlu0 2
          %1086 = vperm.xlu0 %1085, %v868
          %v1087 = vpop.permute.xlu0 %1086
          %1089 = vset.pattern.permute.xlu0 2
          %1090 = vperm.xlu0 %1089, %v869
          %v1091 = vpop.permute.xlu0 %1090
          %1093 = vset.pattern.permute.xlu0 2
          %1094 = vperm.xlu0 %1093, %v870
          %v1095 = vpop.permute.xlu0 %1094
          %1097 = vset.pattern.permute.xlu0 2
          %1098 = vperm.xlu0 %1097, %v871
          %v1099 = vpop.permute.xlu0 %1098
          %1101 = vset.pattern.permute.xlu0 2
          %1102 = vperm.xlu0 %1101, %v872
          %v1103 = vpop.permute.xlu0 %1102
          %1105 = vset.pattern.permute.xlu0 2
          %1106 = vperm.xlu0 %1105, %v873
          %v1107 = vpop.permute.xlu0 %1106
          %1109 = vset.pattern.permute.xlu0 2
          %1110 = vperm.xlu0 %1109, %v874
          %v1111 = vpop.permute.xlu0 %1110
          %1113 = vset.pattern.permute.xlu0 2
          %1114 = vperm.xlu0 %1113, %v875
          %v1115 = vpop.permute.xlu0 %1114
          %1117 = vset.pattern.permute.xlu0 2
          %1118 = vperm.xlu0 %1117, %v876
          %v1119 = vpop.permute.xlu0 %1118
          %1121 = vset.pattern.permute.xlu0 2
          %1122 = vperm.xlu0 %1121, %v877
          %v1123 = vpop.permute.xlu0 %1122
          %1125 = vset.pattern.permute.xlu0 2
          %1126 = vperm.xlu0 %1125, %v878
          %v1127 = vpop.permute.xlu0 %1126
          %1129 = vset.pattern.permute.xlu0 2
          %1130 = vperm.xlu0 %1129, %v879
          %v1131 = vpop.permute.xlu0 %1130
          %1133 = vset.pattern.permute.xlu0 2
          %1134 = vperm.xlu0 %1133, %v880
          %v1135 = vpop.permute.xlu0 %1134
          %1137 = vset.pattern.permute.xlu0 2
          %1138 = vperm.xlu0 %1137, %v881
          %v1139 = vpop.permute.xlu0 %1138
          %1141 = vset.pattern.permute.xlu0 2
          %1142 = vperm.xlu0 %1141, %v882
          %v1143 = vpop.permute.xlu0 %1142
          %1145 = vset.pattern.permute.xlu0 2
          %1146 = vperm.xlu0 %1145, %v883
          %v1147 = vpop.permute.xlu0 %1146
          %v1149 = vlaneseq
          %v1150 = vshrl.u32 %v1149, 7
          %v1151 = vsub.s32 2, %v1150
          %v1152 = vrot.slane %v884, %v1151
          %v1153 = vmul.f32 %v1087, %v1152
          %v1154 = vmul.f32 %v1091, %v1152
          %v1155 = vmul.f32 %v1095, %v1152
          %v1156 = vmul.f32 %v1099, %v1152
          %v1157 = vmul.f32 %v1103, %v1152
          %v1158 = vmul.f32 %v1107, %v1152
          %v1159 = vmul.f32 %v1111, %v1152
          %v1160 = vmul.f32 %v1115, %v1152
          %v1161 = vmul.f32 %v1119, %v1152
          %v1162 = vmul.f32 %v1123, %v1152
          %v1163 = vmul.f32 %v1127, %v1152
          %v1164 = vmul.f32 %v1131, %v1152
          %v1165 = vmul.f32 %v1135, %v1152
          %v1166 = vmul.f32 %v1139, %v1152
          %v1167 = vmul.f32 %v1143, %v1152
          %v1168 = vmul.f32 %v1147, %v1152
          %v1169 = vadd.f32 %v1069, %v1153
          %v1170 = vadd.f32 %v1070, %v1154
          %v1171 = vadd.f32 %v1071, %v1155
          %v1172 = vadd.f32 %v1072, %v1156
          %v1173 = vadd.f32 %v1073, %v1157
          %v1174 = vadd.f32 %v1074, %v1158
          %v1175 = vadd.f32 %v1075, %v1159
          %v1176 = vadd.f32 %v1076, %v1160
          %v1177 = vadd.f32 %v1077, %v1161
          %v1178 = vadd.f32 %v1078, %v1162
          %v1179 = vadd.f32 %v1079, %v1163
          %v1180 = vadd.f32 %v1080, %v1164
          %v1181 = vadd.f32 %v1081, %v1165
          %v1182 = vadd.f32 %v1082, %v1166
          %v1183 = vadd.f32 %v1083, %v1167
          %v1184 = vadd.f32 %v1084, %v1168
          %v1185 = vld [vmem:[#allocation8] sm:$0x1]
          %v1187 = vlaneseq
          %v1188 = vshrl.u32 %v1187, 7
          %v1189 = vsub.s32 0, %v1188
          %v1190 = vrot.slane %v1185, %v1189
          %v1192 = vmul.f32 %v1169, %v1190
          %v1193 = vmul.f32 %v1170, %v1190
          %v1194 = vmul.f32 %v1171, %v1190
          %v1195 = vmul.f32 %v1172, %v1190
          %v1196 = vmul.f32 %v1173, %v1190
          %v1197 = vmul.f32 %v1174, %v1190
          %v1198 = vmul.f32 %v1175, %v1190
          %v1199 = vmul.f32 %v1176, %v1190
          %v1200 = vmul.f32 %v1177, %v1190
          %v1201 = vmul.f32 %v1178, %v1190
          %v1202 = vmul.f32 %v1179, %v1190
          %v1203 = vmul.f32 %v1180, %v1190
          %v1204 = vmul.f32 %v1181, %v1190
          %v1205 = vmul.f32 %v1182, %v1190
          %v1206 = vmul.f32 %v1183, %v1190
          %v1207 = vmul.f32 %v1184, %v1190
          %v1208 = vld [vmem:[#allocation9] sm:$0x1]
          %v1210 = vlaneseq
          %v1211 = vshrl.u32 %v1210, 7
          %v1212 = vsub.s32 0, %v1211
          %v1213 = vrot.slane %v1208, %v1212
          %v1215 = vadd.f32 %v1192, %v1213
          %v1216 = vadd.f32 %v1193, %v1213
          %v1217 = vadd.f32 %v1194, %v1213
          %v1218 = vadd.f32 %v1195, %v1213
          %v1219 = vadd.f32 %v1196, %v1213
          %v1220 = vadd.f32 %v1197, %v1213
          %v1221 = vadd.f32 %v1198, %v1213
          %v1222 = vadd.f32 %v1199, %v1213
          %v1223 = vadd.f32 %v1200, %v1213
          %v1224 = vadd.f32 %v1201, %v1213
          %v1225 = vadd.f32 %v1202, %v1213
          %v1226 = vadd.f32 %v1203, %v1213
          %v1227 = vadd.f32 %v1204, %v1213
          %v1228 = vadd.f32 %v1205, %v1213
          %v1229 = vadd.f32 %v1206, %v1213
          %v1230 = vadd.f32 %v1207, %v1213
          %v1231 = vmax.f32 %v1215, 0.0
          %v1232 = vmax.f32 %v1216, 0.0
          %v1233 = vmax.f32 %v1217, 0.0
          %v1234 = vmax.f32 %v1218, 0.0
          %v1235 = vmax.f32 %v1219, 0.0
          %v1236 = vmax.f32 %v1220, 0.0
          %v1237 = vmax.f32 %v1221, 0.0
          %v1238 = vmax.f32 %v1222, 0.0
          %v1239 = vmax.f32 %v1223, 0.0
          %v1240 = vmax.f32 %v1224, 0.0
          %v1241 = vmax.f32 %v1225, 0.0
          %v1242 = vmax.f32 %v1226, 0.0
          %v1243 = vmax.f32 %v1227, 0.0
          %v1244 = vmax.f32 %v1228, 0.0
          %v1245 = vmax.f32 %v1229, 0.0
          %v1246 = vmax.f32 %v1230, 0.0
          %v1247 = vpack.c.bf16 %v1232, %v1231
          %v1248 = vpack.c.bf16 %v1234, %v1233
          %v1249 = vpack.c.bf16 %v1236, %v1235
          %v1250 = vpack.c.bf16 %v1238, %v1237
          %v1251 = vpack.c.bf16 %v1240, %v1239
          %v1252 = vpack.c.bf16 %v1242, %v1241
          %v1253 = vpack.c.bf16 %v1244, %v1243
          %v1254 = vpack.c.bf16 %v1246, %v1245
          %v1255 = vld [vmem:[#allocation4] sm:$0x1]
          %v1256 = vunpack.c.l.bf16 %v1247
          %v1257 = vunpack.c.h.bf16 %v1247
          %v1258 = vunpack.c.l.bf16 %v1248
          %v1259 = vunpack.c.h.bf16 %v1248
          %v1260 = vunpack.c.l.bf16 %v1249
          %v1261 = vunpack.c.h.bf16 %v1249
          %v1262 = vunpack.c.l.bf16 %v1250
          %v1263 = vunpack.c.h.bf16 %v1250
          %v1264 = vunpack.c.l.bf16 %v1251
          %v1265 = vunpack.c.h.bf16 %v1251
          %v1266 = vunpack.c.l.bf16 %v1252
          %v1267 = vunpack.c.h.bf16 %v1252
          %v1268 = vunpack.c.l.bf16 %v1253
          %v1269 = vunpack.c.h.bf16 %v1253
          %v1270 = vunpack.c.l.bf16 %v1254
          %v1271 = vunpack.c.h.bf16 %v1254
          %vm1272 = vcmask 523264
          %v1273 = vsel %vm1272, %v1256, 0.0
          %v1274 = vsel %vm1272, %v1257, 0.0
          %v1275 = vadd.f32 %v1273, %v1274
          %v1276 = vsel %vm1272, %v1258, 0.0
          %v1277 = vadd.f32 %v1275, %v1276
          %v1278 = vsel %vm1272, %v1259, 0.0
          %v1279 = vadd.f32 %v1277, %v1278
          %v1280 = vsel %vm1272, %v1260, 0.0
          %v1281 = vadd.f32 %v1279, %v1280
          %v1282 = vsel %vm1272, %v1261, 0.0
          %v1283 = vadd.f32 %v1281, %v1282
          %v1284 = vsel %vm1272, %v1262, 0.0
          %v1285 = vadd.f32 %v1283, %v1284
          %v1286 = vsel %vm1272, %v1263, 0.0
          %v1287 = vadd.f32 %v1285, %v1286
          %v1288 = vsel %vm1272, %v1264, 0.0
          %v1289 = vadd.f32 %v1287, %v1288
          %v1290 = vsel %vm1272, %v1265, 0.0
          %v1291 = vadd.f32 %v1289, %v1290
          %v1292 = vsel %vm1272, %v1266, 0.0
          %v1293 = vadd.f32 %v1291, %v1292
          %v1294 = vsel %vm1272, %v1267, 0.0
          %v1295 = vadd.f32 %v1293, %v1294
          %v1296 = vsel %vm1272, %v1268, 0.0
          %v1297 = vadd.f32 %v1295, %v1296
          %v1298 = vsel %vm1272, %v1269, 0.0
          %v1299 = vadd.f32 %v1297, %v1298
          %v1300 = vsel %vm1272, %v1270, 0.0
          %v1301 = vadd.f32 %v1299, %v1300
          %v1302 = vsel %vm1272, %v1271, 0.0
          %v1303 = vadd.f32 %v1301, %v1302
          %v1304 = vrot.slane %v1303, 4
          %v1305 = vadd.f32 %v1303, %v1304
          %v1306 = vrot.slane %v1305, 2
          %v1307 = vadd.f32 %v1305, %v1306
          %v1308 = vrot.slane %v1307, 1
          %v1309 = vadd.f32 %v1307, %v1308
          %v1310 = vadd.f32 %v1255, %v1309
          %vm1311 = vcmask 516096
          %1312 = vst.msk [vmem:[#allocation4] sm:$0x1] %vm1311, %v1310
          %v1313 = vld [vmem:[#allocation5] sm:$0xff]
          %v1314 = vld [vmem:[#allocation5 + $0x8] sm:$0xff]
          %v1315 = vld [vmem:[#allocation5 + $0x10] sm:$0xff]
          %v1316 = vld [vmem:[#allocation5 + $0x18] sm:$0xff]
          %v1317 = vld [vmem:[#allocation5 + $0x20] sm:$0xff]
          %v1318 = vld [vmem:[#allocation5 + $0x28] sm:$0xff]
          %v1319 = vld [vmem:[#allocation5 + $0x30] sm:$0xff]
          %v1320 = vld [vmem:[#allocation5 + $0x38] sm:$0xff]
          %1321 = vxpose.xlu0.c.b16.start [1/8] %v1247, 128
          %1322 = vxpose.xlu0.c.b16.cont [2/8] %v1248, 128
          %1323 = vxpose.xlu0.c.b16.cont [3/8] %v1249, 128
          %1324 = vxpose.xlu0.c.b16.cont [4/8] %v1250, 128
          %1325 = vxpose.xlu0.c.b16.cont [5/8] %v1251, 128
          %1326 = vxpose.xlu0.c.b16.cont [6/8] %v1252, 128
          %1327 = vxpose.xlu0.c.b16.cont [7/8] %v1253, 128
          %1328 = vxpose.xlu0.c.b16.end [8/8] %v1254, 128
          %v1329 = vpop.trf.xlu0
          %v1330 = vpop.trf.xlu0
          %v1331 = vpop.trf.xlu0
          %v1332 = vpop.trf.xlu0
          %v1333 = vpop.trf.xlu0
          %v1334 = vpop.trf.xlu0
          %v1335 = vpop.trf.xlu0
          %v1336 = vpop.trf.xlu0
          %1337 = vmatprep.subr.bf16.mxu0 0
          %1338 = vmatpush1.bf16.msra.mxu0 %v1254
          %1339 = vmatprep.subr.bf16.mxu0 0
          %1340 = vmatpush1.bf16.msra.mxu0 %v1253
          %1341 = vmatprep.subr.bf16.mxu0 0
          %1342 = vmatpush1.bf16.msra.mxu0 %v1252
          %1343 = vmatprep.subr.bf16.mxu0 0
          %1344 = vmatpush1.bf16.msra.mxu0 %v1251
          %1345 = vmatprep.subr.bf16.mxu0 0
          %1346 = vmatpush1.bf16.msra.mxu0 %v1250
          %1347 = vmatprep.subr.bf16.mxu0 0
          %1348 = vmatpush1.bf16.msra.mxu0 %v1249
          %1349 = vmatprep.subr.bf16.mxu0 0
          %1350 = vmatpush1.bf16.msra.mxu0 %v1248
          %1351 = vmatprep.subr.bf16.mxu0 0
          %1352 = vmatpush1.bf16.msra.mxu0 %v1247
          %1353 = vmatprep.subr.bf16.mxu0 0
          %1354 = vmatpush2.bf16.msra.mxu0 0
          %1355 = vmatprep.subr.bf16.mxu0 0
          %1356 = vmatpush2.bf16.msra.mxu0 0
          %1357 = vmatprep.subr.bf16.mxu0 0
          %1358 = vmatpush2.bf16.msra.mxu0 0
          %1359 = vmatprep.subr.bf16.mxu0 0
          %1360 = vmatpush2.bf16.msra.mxu0 0
          %1361 = vmatprep.subr.bf16.mxu0 0
          %1362 = vmatpush2.bf16.msra.mxu0 0
          %1363 = vmatprep.subr.bf16.mxu0 0
          %1364 = vmatpush2.bf16.msra.mxu0 0
          %1365 = vmatprep.subr.bf16.mxu0 0
          %1366 = vmatpush2.bf16.msra.mxu0 0
          %1367 = vmatprep.subr.bf16.mxu0 0
          %1368 = vmatpush2.bf16.msra.mxu0 0
          %1369 = vmatprep.mubr.bf16.mxu0 0
          %1370 = vmatmul.mubr.bf16.gmra.mxu0 %v1329
          %v1371 = vpop.f32.mrf.mxu0
          %v1372 = vadd.f32 0.0, %v1371
          %v1373 = vpop.f32.mrf.mxu0
          %v1374 = vpop.f32.mrf.mxu0
          %v1375 = vadd.f32 0.0, %v1374
          %v1376 = vpop.f32.mrf.mxu0
          %1377 = vmatprep.mubr.bf16.mxu0 0
          %1378 = vmatmul.mubr.bf16.gmra.mxu0 %v1330
          %v1379 = vpop.f32.mrf.mxu0
          %v1380 = vadd.f32 0.0, %v1379
          %v1381 = vpop.f32.mrf.mxu0
          %v1382 = vpop.f32.mrf.mxu0
          %v1383 = vadd.f32 0.0, %v1382
          %v1384 = vpop.f32.mrf.mxu0
          %1385 = vmatprep.mubr.bf16.mxu0 0
          %1386 = vmatmul.mubr.bf16.gmra.mxu0 %v1331
          %v1387 = vpop.f32.mrf.mxu0
          %v1388 = vadd.f32 0.0, %v1387
          %v1389 = vpop.f32.mrf.mxu0
          %v1390 = vpop.f32.mrf.mxu0
          %v1391 = vadd.f32 0.0, %v1390
          %v1392 = vpop.f32.mrf.mxu0
          %1393 = vmatprep.mubr.bf16.mxu0 0
          %1394 = vmatmul.mubr.bf16.gmra.mxu0 %v1332
          %v1395 = vpop.f32.mrf.mxu0
          %v1396 = vadd.f32 0.0, %v1395
          %v1397 = vpop.f32.mrf.mxu0
          %v1398 = vpop.f32.mrf.mxu0
          %v1399 = vadd.f32 0.0, %v1398
          %v1400 = vpop.f32.mrf.mxu0
          %1401 = vdwg.mxu0
          %v1402 = vadd.f32 %v1313, %v1372
          %v1403 = vadd.f32 %v1314, %v1375
          %v1404 = vadd.f32 %v1315, %v1380
          %v1405 = vadd.f32 %v1316, %v1383
          %v1406 = vadd.f32 %v1317, %v1388
          %v1407 = vadd.f32 %v1318, %v1391
          %v1408 = vadd.f32 %v1319, %v1396
          %v1409 = vadd.f32 %v1320, %v1399
          %1410 = vst.msk [vmem:[#allocation5] sm:$0xff] %vm1272, %v1402
          %1411 = vst.msk [vmem:[#allocation5 + $0x8] sm:$0xff] %vm1272, %v1403
          %1412 = vst.msk [vmem:[#allocation5 + $0x10] sm:$0xff] %vm1272, %v1404
          %1413 = vst.msk [vmem:[#allocation5 + $0x18] sm:$0xff] %vm1272, %v1405
          %1414 = vst.msk [vmem:[#allocation5 + $0x20] sm:$0xff] %vm1272, %v1406
          %1415 = vst.msk [vmem:[#allocation5 + $0x28] sm:$0xff] %vm1272, %v1407
          %1416 = vst.msk [vmem:[#allocation5 + $0x30] sm:$0xff] %vm1272, %v1408
          %1417 = vst.msk [vmem:[#allocation5 + $0x38] sm:$0xff] %vm1272, %v1409
        $region72: #{tpu_custom_call.1} parent=59 // pred_fallthru
          _
        %p1418 = scmp.eq.s32.totalorder %s27, 2
        // Predicated region
        $region77: #{tpu_custom_call.1} parent=59 // pred_check
          %p1419 = pneg %p1418
        $region78: #{tpu_custom_call.1} parent=59 // pred_check_branch
          %1421 = sbr.rel (%p1419) target = $region80
        $region79: #{tpu_custom_call.1} parent=59 // pred_region
          // Predicated region
          $region81: #{tpu_custom_call.1} parent=79 // pred_check
            _
          $region82: #{tpu_custom_call.1} parent=79 // pred_check_branch
            %1423 = sbr.rel (%p384) target = $region84
          $region83: #{tpu_custom_call.1} parent=79 // pred_region
            %v1424 = vld [vmem:[%s4] sm:$0xf]
            %v1425 = vld [vmem:[%s4 + $0x4] sm:$0xf]
            %v1426 = vld [vmem:[%s4 + $0x8] sm:$0xf]
            %v1427 = vld [vmem:[%s4 + $0xc] sm:$0xf]
            %v1428 = vld [vmem:[%s4 + $0x10] sm:$0xf]
            %v1429 = vld [vmem:[%s4 + $0x14] sm:$0xf]
            %v1430 = vld [vmem:[%s4 + $0x18] sm:$0xf]
            %v1431 = vld [vmem:[%s4 + $0x1c] sm:$0xf]
            %v1432 = vunpack.c.l.bf16 %v1424
            %v1433 = vunpack.c.l.bf16 %v1425
            %v1434 = vunpack.c.l.bf16 %v1426
            %v1435 = vunpack.c.l.bf16 %v1427
            %v1436 = vunpack.c.l.bf16 %v1428
            %v1437 = vunpack.c.l.bf16 %v1429
            %v1438 = vunpack.c.l.bf16 %v1430
            %v1439 = vunpack.c.l.bf16 %v1431
            %v1440 = vld [vmem:[#allocation4] sm:$0x1]
            %v1441 = vmul.f32 %v1440, 0.0009765625
            %v1443 = vlaneseq
            %v1444 = vshrl.u32 %v1443, 7
            %v1445 = vsub.s32 0, %v1444
            %v1446 = vrot.slane %v1441, %v1445
            %vm1447 = vcmask 523264
            %v1448 = vsel %vm1447, %v1446, 0
            %1450 = vmatprep.subr.mxu0 0.0
            %1451 = vmatpush1.msra.mxu0 0.0
            %1452 = vmatprep.subr.mxu0 0.0
            %1453 = vmatpush1.msra.mxu0 0.0
            %1454 = vmatprep.subr.mxu0 0.0
            %1455 = vmatpush1.msra.mxu0 0.0
            %1456 = vmatprep.subr.mxu0 0.0
            %1457 = vmatpush1.msra.mxu0 0.0
            %1458 = vmatprep.subr.mxu0 0.0
            %1459 = vmatpush1.msra.mxu0 0.0
            %1460 = vmatprep.subr.mxu0 0.0
            %1461 = vmatpush1.msra.mxu0 0.0
            %1462 = vmatprep.subr.mxu0 0.0
            %1463 = vmatpush1.msra.mxu0 0.0
            %1464 = vmatprep.subr.mxu0 0.0
            %1465 = vmatpush1.msra.mxu0 0.0
            %1466 = vmatprep.subr.mxu0 0.0
            %1467 = vmatpush1.msra.mxu0 %v1439
            %1468 = vmatprep.subr.mxu0 0.0
            %1469 = vmatpush1.msra.mxu0 %v1438
            %1470 = vmatprep.subr.mxu0 0.0
            %1471 = vmatpush1.msra.mxu0 %v1437
            %1472 = vmatprep.subr.mxu0 0.0
            %1473 = vmatpush1.msra.mxu0 %v1436
            %1474 = vmatprep.subr.mxu0 0.0
            %1475 = vmatpush1.msra.mxu0 %v1435
            %1476 = vmatprep.subr.mxu0 0.0
            %1477 = vmatpush1.msra.mxu0 %v1434
            %1478 = vmatprep.subr.mxu0 0.0
            %1479 = vmatpush1.msra.mxu0 %v1433
            %1480 = vmatprep.subr.mxu0 0.0
            %1481 = vmatpush1.msra.mxu0 %v1432
            %1482 = vmatprep.subr.mxu0 0.0
            %1483 = vmatpush2.msra.mxu0 0.0
            %1484 = vmatprep.subr.mxu0 0.0
            %1485 = vmatpush2.msra.mxu0 0.0
            %1486 = vmatprep.subr.mxu0 0.0
            %1487 = vmatpush2.msra.mxu0 0.0
            %1488 = vmatprep.subr.mxu0 0.0
            %1489 = vmatpush2.msra.mxu0 0.0
            %1490 = vmatprep.subr.mxu0 0.0
            %1491 = vmatpush2.msra.mxu0 0.0
            %1492 = vmatprep.subr.mxu0 0.0
            %1493 = vmatpush2.msra.mxu0 0.0
            %1494 = vmatprep.subr.mxu0 0.0
            %1495 = vmatpush2.msra.mxu0 0.0
            %1496 = vmatprep.subr.mxu0 0.0
            %1497 = vmatpush2.msra.mxu0 0.0
            %1498 = vmatprep.subr.mxu0 0.0
            %1499 = vmatpush2.msra.mxu0 0.0
            %1500 = vmatprep.subr.mxu0 0.0
            %1501 = vmatpush2.msra.mxu0 0.0
            %1502 = vmatprep.subr.mxu0 0.0
            %1503 = vmatpush2.msra.mxu0 0.0
            %1504 = vmatprep.subr.mxu0 0.0
            %1505 = vmatpush2.msra.mxu0 0.0
            %1506 = vmatprep.subr.mxu0 0.0
            %1507 = vmatpush2.msra.mxu0 0.0
            %1508 = vmatprep.subr.mxu0 0.0
            %1509 = vmatpush2.msra.mxu0 0.0
            %1510 = vmatprep.subr.mxu0 0.0
            %1511 = vmatpush2.msra.mxu0 0.0
            %1512 = vmatprep.subr.mxu0 0.0
            %1513 = vmatpush2.msra.mxu0 0.0
            %1514 = vmatprep.mubr.f32.mxu0 0.0
            %1515 = vmatmul.mubr.f32.gmra.mxu0 %v1448
            %v1516 = vpop.f32.mrf.mxu0
            %v1517 = vadd.f32 0.0, %v1516
            %v1518 = vpop.f32.mrf.mxu0
            %1519 = vdwg.mxu0
            %v1520 = vld [vmem:[#allocation5] sm:$0xff]
            %v1521 = vld [vmem:[#allocation5 + $0x8] sm:$0xff]
            %v1522 = vld [vmem:[#allocation5 + $0x10] sm:$0xff]
            %v1523 = vld [vmem:[#allocation5 + $0x18] sm:$0xff]
            %v1524 = vld [vmem:[#allocation5 + $0x20] sm:$0xff]
            %v1525 = vld [vmem:[#allocation5 + $0x28] sm:$0xff]
            %v1526 = vld [vmem:[#allocation5 + $0x30] sm:$0xff]
            %v1527 = vld [vmem:[#allocation5 + $0x38] sm:$0xff]
            %v1529 = vsel %vm1447, %v1520, 0
            %v1532 = vsel %vm1447, %v1521, 0
            %v1535 = vsel %vm1447, %v1522, 0
            %v1538 = vsel %vm1447, %v1523, 0
            %v1541 = vsel %vm1447, %v1524, 0
            %v1544 = vsel %vm1447, %v1525, 0
            %v1547 = vsel %vm1447, %v1526, 0
            %v1550 = vsel %vm1447, %v1527, 0
            %1552 = vmatprep.subr.mxu0 0.0
            %1553 = vmatpush1.msra.mxu0 0.0
            %1554 = vmatprep.subr.mxu0 0.0
            %1555 = vmatpush1.msra.mxu0 0.0
            %1556 = vmatprep.subr.mxu0 0.0
            %1557 = vmatpush1.msra.mxu0 0.0
            %1558 = vmatprep.subr.mxu0 0.0
            %1559 = vmatpush1.msra.mxu0 0.0
            %1560 = vmatprep.subr.mxu0 0.0
            %1561 = vmatpush1.msra.mxu0 0.0
            %1562 = vmatprep.subr.mxu0 0.0
            %1563 = vmatpush1.msra.mxu0 0.0
            %1564 = vmatprep.subr.mxu0 0.0
            %1565 = vmatpush1.msra.mxu0 0.0
            %1566 = vmatprep.subr.mxu0 0.0
            %1567 = vmatpush1.msra.mxu0 0.0
            %1568 = vmatprep.subr.mxu0 0.0
            %1569 = vmatpush1.msra.mxu0 %v1439
            %1570 = vmatprep.subr.mxu0 0.0
            %1571 = vmatpush1.msra.mxu0 %v1438
            %1572 = vmatprep.subr.mxu0 0.0
            %1573 = vmatpush1.msra.mxu0 %v1437
            %1574 = vmatprep.subr.mxu0 0.0
            %1575 = vmatpush1.msra.mxu0 %v1436
            %1576 = vmatprep.subr.mxu0 0.0
            %1577 = vmatpush1.msra.mxu0 %v1435
            %1578 = vmatprep.subr.mxu0 0.0
            %1579 = vmatpush1.msra.mxu0 %v1434
            %1580 = vmatprep.subr.mxu0 0.0
            %1581 = vmatpush1.msra.mxu0 %v1433
            %1582 = vmatprep.subr.mxu0 0.0
            %1583 = vmatpush1.msra.mxu0 %v1432
            %1584 = vmatprep.subr.mxu0 0.0
            %1585 = vmatpush2.msra.mxu0 0.0
            %1586 = vmatprep.subr.mxu0 0.0
            %1587 = vmatpush2.msra.mxu0 0.0
            %1588 = vmatprep.subr.mxu0 0.0
            %1589 = vmatpush2.msra.mxu0 0.0
            %1590 = vmatprep.subr.mxu0 0.0
            %1591 = vmatpush2.msra.mxu0 0.0
            %1592 = vmatprep.subr.mxu0 0.0
            %1593 = vmatpush2.msra.mxu0 0.0
            %1594 = vmatprep.subr.mxu0 0.0
            %1595 = vmatpush2.msra.mxu0 0.0
            %1596 = vmatprep.subr.mxu0 0.0
            %1597 = vmatpush2.msra.mxu0 0.0
            %1598 = vmatprep.subr.mxu0 0.0
            %1599 = vmatpush2.msra.mxu0 0.0
            %1600 = vmatprep.subr.mxu0 0.0
            %1601 = vmatpush2.msra.mxu0 0.0
            %1602 = vmatprep.subr.mxu0 0.0
            %1603 = vmatpush2.msra.mxu0 0.0
            %1604 = vmatprep.subr.mxu0 0.0
            %1605 = vmatpush2.msra.mxu0 0.0
            %1606 = vmatprep.subr.mxu0 0.0
            %1607 = vmatpush2.msra.mxu0 0.0
            %1608 = vmatprep.subr.mxu0 0.0
            %1609 = vmatpush2.msra.mxu0 0.0
            %1610 = vmatprep.subr.mxu0 0.0
            %1611 = vmatpush2.msra.mxu0 0.0
            %1612 = vmatprep.subr.mxu0 0.0
            %1613 = vmatpush2.msra.mxu0 0.0
            %1614 = vmatprep.subr.mxu0 0.0
            %1615 = vmatpush2.msra.mxu0 0.0
            %1616 = vmatprep.mubr.f32.mxu0 0.0
            %1617 = vmatmul.mubr.f32.gmra.mxu0 %v1529
            %v1618 = vpop.f32.mrf.mxu0
            %v1619 = vadd.f32 0.0, %v1618
            %v1620 = vpop.f32.mrf.mxu0
            %1621 = vmatprep.mubr.f32.mxu0 0.0
            %1622 = vmatmul.mubr.f32.gmra.mxu0 %v1532
            %v1623 = vpop.f32.mrf.mxu0
            %v1624 = vadd.f32 0.0, %v1623
            %v1625 = vpop.f32.mrf.mxu0
            %1626 = vmatprep.mubr.f32.mxu0 0.0
            %1627 = vmatmul.mubr.f32.gmra.mxu0 %v1535
            %v1628 = vpop.f32.mrf.mxu0
            %v1629 = vadd.f32 0.0, %v1628
            %v1630 = vpop.f32.mrf.mxu0
            %1631 = vmatprep.mubr.f32.mxu0 0.0
            %1632 = vmatmul.mubr.f32.gmra.mxu0 %v1538
            %v1633 = vpop.f32.mrf.mxu0
            %v1634 = vadd.f32 0.0, %v1633
            %v1635 = vpop.f32.mrf.mxu0
            %1636 = vmatprep.mubr.f32.mxu0 0.0
            %1637 = vmatmul.mubr.f32.gmra.mxu0 %v1541
            %v1638 = vpop.f32.mrf.mxu0
            %v1639 = vadd.f32 0.0, %v1638
            %v1640 = vpop.f32.mrf.mxu0
            %1641 = vmatprep.mubr.f32.mxu0 0.0
            %1642 = vmatmul.mubr.f32.gmra.mxu0 %v1544
            %v1643 = vpop.f32.mrf.mxu0
            %v1644 = vadd.f32 0.0, %v1643
            %v1645 = vpop.f32.mrf.mxu0
            %1646 = vmatprep.mubr.f32.mxu0 0.0
            %1647 = vmatmul.mubr.f32.gmra.mxu0 %v1547
            %v1648 = vpop.f32.mrf.mxu0
            %v1649 = vadd.f32 0.0, %v1648
            %v1650 = vpop.f32.mrf.mxu0
            %1651 = vmatprep.mubr.f32.mxu0 0.0
            %1652 = vmatmul.mubr.f32.gmra.mxu0 %v1550
            %v1653 = vpop.f32.mrf.mxu0
            %v1654 = vadd.f32 0.0, %v1653
            %v1655 = vpop.f32.mrf.mxu0
            %1656 = vdwg.mxu0
            %v1657 = vmul.f32 %v1432, %v1619
            %v1658 = vmul.f32 %v1433, %v1624
            %v1659 = vmul.f32 %v1434, %v1629
            %v1660 = vmul.f32 %v1435, %v1634
            %v1661 = vmul.f32 %v1436, %v1639
            %v1662 = vmul.f32 %v1437, %v1644
            %v1663 = vmul.f32 %v1438, %v1649
            %v1664 = vmul.f32 %v1439, %v1654
            %v1665 = vadd.f32 %v1657, %v1658
            %v1666 = vadd.f32 %v1665, %v1659
            %v1667 = vadd.f32 %v1666, %v1660
            %v1668 = vadd.f32 %v1667, %v1661
            %v1669 = vadd.f32 %v1668, %v1662
            %v1670 = vadd.f32 %v1669, %v1663
            %v1671 = vadd.f32 %v1670, %v1664
            %v1672 = vrot.slane %v1671, 4
            %v1673 = vadd.f32 %v1671, %v1672
            %v1674 = vrot.slane %v1673, 2
            %v1675 = vadd.f32 %v1673, %v1674
            %v1676 = vrot.slane %v1675, 1
            %v1677 = vadd.f32 %v1675, %v1676
            %v1678 = vmul.f32 %v1677, 0.0009765625
            %v1679 = vmul.f32 %v1517, %v1517
            %v1680 = vsub.f32 %v1678, %v1679
            %v1681 = vmax.f32 %v1680, 0.0
            %v1682 = vld [vmem:[%s5] sm:$0x1]
            %v1683 = vadd.f32 %v1681, 1e-05
            %v1684 = vrsqrt.pop %v1683
            %v1685 = vmul.f32 %v1682, %v1684
            %1686 = vst [vmem:[#allocation10] sm:$0x1] %v1685
            %v1687 = vld [vmem:[%s6] sm:$0x1]
            %v1688 = vmul.f32 %v1517, %v1685
            %v1689 = vsub.f32 %v1687, %v1688
            %1690 = vst [vmem:[#allocation11] sm:$0x1] %v1689
          $region84: #{tpu_custom_call.1} parent=79 // pred_fallthru
            _
          %v1691 = vld [vmem:[%s377] sm:$0xff]
          %v1692 = vld [vmem:[%s377 + $0x8] sm:$0xff]
          %v1693 = vld [vmem:[%s377 + $0x10] sm:$0xff]
          %v1694 = vld [vmem:[%s377 + $0x18] sm:$0xff]
          %v1695 = vld [vmem:[%s377 + $0x20] sm:$0xff]
          %v1696 = vld [vmem:[%s377 + $0x28] sm:$0xff]
          %v1697 = vld [vmem:[%s377 + $0x30] sm:$0xff]
          %v1698 = vld [vmem:[%s377 + $0x38] sm:$0xff]
          %v1699 = vld [vmem:[%s377 + $0x40] sm:$0xff]
          %v1700 = vld [vmem:[%s377 + $0x48] sm:$0xff]
          %v1701 = vld [vmem:[%s377 + $0x50] sm:$0xff]
          %v1702 = vld [vmem:[%s377 + $0x58] sm:$0xff]
          %v1703 = vld [vmem:[%s377 + $0x60] sm:$0xff]
          %v1704 = vld [vmem:[%s377 + $0x68] sm:$0xff]
          %v1705 = vld [vmem:[%s377 + $0x70] sm:$0xff]
          %v1706 = vld [vmem:[%s377 + $0x78] sm:$0xff]
          %v1707 = vld [vmem:[%s1] sm:$0x7]
          %1709 = vset.pattern.permute.xlu0 0
          %1710 = vperm.xlu0 %1709, %v1691
          %v1711 = vpop.permute.xlu0 %1710
          %1714 = vset.pattern.permute.xlu0 0
          %1715 = vperm.xlu0 %1714, %v1692
          %v1716 = vpop.permute.xlu0 %1715
          %1719 = vset.pattern.permute.xlu0 0
          %1720 = vperm.xlu0 %1719, %v1693
          %v1721 = vpop.permute.xlu0 %1720
          %1724 = vset.pattern.permute.xlu0 0
          %1725 = vperm.xlu0 %1724, %v1694
          %v1726 = vpop.permute.xlu0 %1725
          %1729 = vset.pattern.permute.xlu0 0
          %1730 = vperm.xlu0 %1729, %v1695
          %v1731 = vpop.permute.xlu0 %1730
          %1734 = vset.pattern.permute.xlu0 0
          %1735 = vperm.xlu0 %1734, %v1696
          %v1736 = vpop.permute.xlu0 %1735
          %1739 = vset.pattern.permute.xlu0 0
          %1740 = vperm.xlu0 %1739, %v1697
          %v1741 = vpop.permute.xlu0 %1740
          %1744 = vset.pattern.permute.xlu0 0
          %1745 = vperm.xlu0 %1744, %v1698
          %v1746 = vpop.permute.xlu0 %1745
          %1749 = vset.pattern.permute.xlu0 0
          %1750 = vperm.xlu0 %1749, %v1699
          %v1751 = vpop.permute.xlu0 %1750
          %1754 = vset.pattern.permute.xlu0 0
          %1755 = vperm.xlu0 %1754, %v1700
          %v1756 = vpop.permute.xlu0 %1755
          %1759 = vset.pattern.permute.xlu0 0
          %1760 = vperm.xlu0 %1759, %v1701
          %v1761 = vpop.permute.xlu0 %1760
          %1764 = vset.pattern.permute.xlu0 0
          %1765 = vperm.xlu0 %1764, %v1702
          %v1766 = vpop.permute.xlu0 %1765
          %1769 = vset.pattern.permute.xlu0 0
          %1770 = vperm.xlu0 %1769, %v1703
          %v1771 = vpop.permute.xlu0 %1770
          %1774 = vset.pattern.permute.xlu0 0
          %1775 = vperm.xlu0 %1774, %v1704
          %v1776 = vpop.permute.xlu0 %1775
          %1779 = vset.pattern.permute.xlu0 0
          %1780 = vperm.xlu0 %1779, %v1705
          %v1781 = vpop.permute.xlu0 %1780
          %1784 = vset.pattern.permute.xlu0 0
          %1785 = vperm.xlu0 %1784, %v1706
          %v1786 = vpop.permute.xlu0 %1785
          %v1788 = vlaneseq
          %v1789 = vshrl.u32 %v1788, 7
          %v1790 = vsub.s32 0, %v1789
          %v1791 = vrot.slane %v1707, %v1790
          %v1792 = vmul.f32 %v1711, %v1791
          %v1793 = vmul.f32 %v1716, %v1791
          %v1794 = vmul.f32 %v1721, %v1791
          %v1795 = vmul.f32 %v1726, %v1791
          %v1796 = vmul.f32 %v1731, %v1791
          %v1797 = vmul.f32 %v1736, %v1791
          %v1798 = vmul.f32 %v1741, %v1791
          %v1799 = vmul.f32 %v1746, %v1791
          %v1800 = vmul.f32 %v1751, %v1791
          %v1801 = vmul.f32 %v1756, %v1791
          %v1802 = vmul.f32 %v1761, %v1791
          %v1803 = vmul.f32 %v1766, %v1791
          %v1804 = vmul.f32 %v1771, %v1791
          %v1805 = vmul.f32 %v1776, %v1791
          %v1806 = vmul.f32 %v1781, %v1791
          %v1807 = vmul.f32 %v1786, %v1791
          %1808 = vset.pattern.permute.xlu0 1
          %1809 = vperm.xlu0 %1808, %v1691
          %v1810 = vpop.permute.xlu0 %1809
          %1812 = vset.pattern.permute.xlu0 1
          %1813 = vperm.xlu0 %1812, %v1692
          %v1814 = vpop.permute.xlu0 %1813
          %1816 = vset.pattern.permute.xlu0 1
          %1817 = vperm.xlu0 %1816, %v1693
          %v1818 = vpop.permute.xlu0 %1817
          %1820 = vset.pattern.permute.xlu0 1
          %1821 = vperm.xlu0 %1820, %v1694
          %v1822 = vpop.permute.xlu0 %1821
          %1824 = vset.pattern.permute.xlu0 1
          %1825 = vperm.xlu0 %1824, %v1695
          %v1826 = vpop.permute.xlu0 %1825
          %1828 = vset.pattern.permute.xlu0 1
          %1829 = vperm.xlu0 %1828, %v1696
          %v1830 = vpop.permute.xlu0 %1829
          %1832 = vset.pattern.permute.xlu0 1
          %1833 = vperm.xlu0 %1832, %v1697
          %v1834 = vpop.permute.xlu0 %1833
          %1836 = vset.pattern.permute.xlu0 1
          %1837 = vperm.xlu0 %1836, %v1698
          %v1838 = vpop.permute.xlu0 %1837
          %1840 = vset.pattern.permute.xlu0 1
          %1841 = vperm.xlu0 %1840, %v1699
          %v1842 = vpop.permute.xlu0 %1841
          %1844 = vset.pattern.permute.xlu0 1
          %1845 = vperm.xlu0 %1844, %v1700
          %v1846 = vpop.permute.xlu0 %1845
          %1848 = vset.pattern.permute.xlu0 1
          %1849 = vperm.xlu0 %1848, %v1701
          %v1850 = vpop.permute.xlu0 %1849
          %1852 = vset.pattern.permute.xlu0 1
          %1853 = vperm.xlu0 %1852, %v1702
          %v1854 = vpop.permute.xlu0 %1853
          %1856 = vset.pattern.permute.xlu0 1
          %1857 = vperm.xlu0 %1856, %v1703
          %v1858 = vpop.permute.xlu0 %1857
          %1860 = vset.pattern.permute.xlu0 1
          %1861 = vperm.xlu0 %1860, %v1704
          %v1862 = vpop.permute.xlu0 %1861
          %1864 = vset.pattern.permute.xlu0 1
          %1865 = vperm.xlu0 %1864, %v1705
          %v1866 = vpop.permute.xlu0 %1865
          %1868 = vset.pattern.permute.xlu0 1
          %1869 = vperm.xlu0 %1868, %v1706
          %v1870 = vpop.permute.xlu0 %1869
          %v1872 = vlaneseq
          %v1873 = vshrl.u32 %v1872, 7
          %v1874 = vsub.s32 1, %v1873
          %v1875 = vrot.slane %v1707, %v1874
          %v1876 = vmul.f32 %v1810, %v1875
          %v1877 = vmul.f32 %v1814, %v1875
          %v1878 = vmul.f32 %v1818, %v1875
          %v1879 = vmul.f32 %v1822, %v1875
          %v1880 = vmul.f32 %v1826, %v1875
          %v1881 = vmul.f32 %v1830, %v1875
          %v1882 = vmul.f32 %v1834, %v1875
          %v1883 = vmul.f32 %v1838, %v1875
          %v1884 = vmul.f32 %v1842, %v1875
          %v1885 = vmul.f32 %v1846, %v1875
          %v1886 = vmul.f32 %v1850, %v1875
          %v1887 = vmul.f32 %v1854, %v1875
          %v1888 = vmul.f32 %v1858, %v1875
          %v1889 = vmul.f32 %v1862, %v1875
          %v1890 = vmul.f32 %v1866, %v1875
          %v1891 = vmul.f32 %v1870, %v1875
          %v1892 = vadd.f32 %v1792, %v1876
          %v1893 = vadd.f32 %v1793, %v1877
          %v1894 = vadd.f32 %v1794, %v1878
          %v1895 = vadd.f32 %v1795, %v1879
          %v1896 = vadd.f32 %v1796, %v1880
          %v1897 = vadd.f32 %v1797, %v1881
          %v1898 = vadd.f32 %v1798, %v1882
          %v1899 = vadd.f32 %v1799, %v1883
          %v1900 = vadd.f32 %v1800, %v1884
          %v1901 = vadd.f32 %v1801, %v1885
          %v1902 = vadd.f32 %v1802, %v1886
          %v1903 = vadd.f32 %v1803, %v1887
          %v1904 = vadd.f32 %v1804, %v1888
          %v1905 = vadd.f32 %v1805, %v1889
          %v1906 = vadd.f32 %v1806, %v1890
          %v1907 = vadd.f32 %v1807, %v1891
          %1908 = vset.pattern.permute.xlu0 2
          %1909 = vperm.xlu0 %1908, %v1691
          %v1910 = vpop.permute.xlu0 %1909
          %1912 = vset.pattern.permute.xlu0 2
          %1913 = vperm.xlu0 %1912, %v1692
          %v1914 = vpop.permute.xlu0 %1913
          %1916 = vset.pattern.permute.xlu0 2
          %1917 = vperm.xlu0 %1916, %v1693
          %v1918 = vpop.permute.xlu0 %1917
          %1920 = vset.pattern.permute.xlu0 2
          %1921 = vperm.xlu0 %1920, %v1694
          %v1922 = vpop.permute.xlu0 %1921
          %1924 = vset.pattern.permute.xlu0 2
          %1925 = vperm.xlu0 %1924, %v1695
          %v1926 = vpop.permute.xlu0 %1925
          %1928 = vset.pattern.permute.xlu0 2
          %1929 = vperm.xlu0 %1928, %v1696
          %v1930 = vpop.permute.xlu0 %1929
          %1932 = vset.pattern.permute.xlu0 2
          %1933 = vperm.xlu0 %1932, %v1697
          %v1934 = vpop.permute.xlu0 %1933
          %1936 = vset.pattern.permute.xlu0 2
          %1937 = vperm.xlu0 %1936, %v1698
          %v1938 = vpop.permute.xlu0 %1937
          %1940 = vset.pattern.permute.xlu0 2
          %1941 = vperm.xlu0 %1940, %v1699
          %v1942 = vpop.permute.xlu0 %1941
          %1944 = vset.pattern.permute.xlu0 2
          %1945 = vperm.xlu0 %1944, %v1700
          %v1946 = vpop.permute.xlu0 %1945
          %1948 = vset.pattern.permute.xlu0 2
          %1949 = vperm.xlu0 %1948, %v1701
          %v1950 = vpop.permute.xlu0 %1949
          %1952 = vset.pattern.permute.xlu0 2
          %1953 = vperm.xlu0 %1952, %v1702
          %v1954 = vpop.permute.xlu0 %1953
          %1956 = vset.pattern.permute.xlu0 2
          %1957 = vperm.xlu0 %1956, %v1703
          %v1958 = vpop.permute.xlu0 %1957
          %1960 = vset.pattern.permute.xlu0 2
          %1961 = vperm.xlu0 %1960, %v1704
          %v1962 = vpop.permute.xlu0 %1961
          %1964 = vset.pattern.permute.xlu0 2
          %1965 = vperm.xlu0 %1964, %v1705
          %v1966 = vpop.permute.xlu0 %1965
          %1968 = vset.pattern.permute.xlu0 2
          %1969 = vperm.xlu0 %1968, %v1706
          %v1970 = vpop.permute.xlu0 %1969
          %v1972 = vlaneseq
          %v1973 = vshrl.u32 %v1972, 7
          %v1974 = vsub.s32 2, %v1973
          %v1975 = vrot.slane %v1707, %v1974
          %v1976 = vmul.f32 %v1910, %v1975
          %v1977 = vmul.f32 %v1914, %v1975
          %v1978 = vmul.f32 %v1918, %v1975
          %v1979 = vmul.f32 %v1922, %v1975
          %v1980 = vmul.f32 %v1926, %v1975
          %v1981 = vmul.f32 %v1930, %v1975
          %v1982 = vmul.f32 %v1934, %v1975
          %v1983 = vmul.f32 %v1938, %v1975
          %v1984 = vmul.f32 %v1942, %v1975
          %v1985 = vmul.f32 %v1946, %v1975
          %v1986 = vmul.f32 %v1950, %v1975
          %v1987 = vmul.f32 %v1954, %v1975
          %v1988 = vmul.f32 %v1958, %v1975
          %v1989 = vmul.f32 %v1962, %v1975
          %v1990 = vmul.f32 %v1966, %v1975
          %v1991 = vmul.f32 %v1970, %v1975
          %v1992 = vadd.f32 %v1892, %v1976
          %v1993 = vadd.f32 %v1893, %v1977
          %v1994 = vadd.f32 %v1894, %v1978
          %v1995 = vadd.f32 %v1895, %v1979
          %v1996 = vadd.f32 %v1896, %v1980
          %v1997 = vadd.f32 %v1897, %v1981
          %v1998 = vadd.f32 %v1898, %v1982
          %v1999 = vadd.f32 %v1899, %v1983
          %v2000 = vadd.f32 %v1900, %v1984
          %v2001 = vadd.f32 %v1901, %v1985
          %v2002 = vadd.f32 %v1902, %v1986
          %v2003 = vadd.f32 %v1903, %v1987
          %v2004 = vadd.f32 %v1904, %v1988
          %v2005 = vadd.f32 %v1905, %v1989
          %v2006 = vadd.f32 %v1906, %v1990
          %v2007 = vadd.f32 %v1907, %v1991
          %v2008 = vld [vmem:[#allocation8] sm:$0x1]
          %v2010 = vlaneseq
          %v2011 = vshrl.u32 %v2010, 7
          %v2012 = vsub.s32 0, %v2011
          %v2013 = vrot.slane %v2008, %v2012
          %v2015 = vmul.f32 %v1992, %v2013
          %v2016 = vmul.f32 %v1993, %v2013
          %v2017 = vmul.f32 %v1994, %v2013
          %v2018 = vmul.f32 %v1995, %v2013
          %v2019 = vmul.f32 %v1996, %v2013
          %v2020 = vmul.f32 %v1997, %v2013
          %v2021 = vmul.f32 %v1998, %v2013
          %v2022 = vmul.f32 %v1999, %v2013
          %v2023 = vmul.f32 %v2000, %v2013
          %v2024 = vmul.f32 %v2001, %v2013
          %v2025 = vmul.f32 %v2002, %v2013
          %v2026 = vmul.f32 %v2003, %v2013
          %v2027 = vmul.f32 %v2004, %v2013
          %v2028 = vmul.f32 %v2005, %v2013
          %v2029 = vmul.f32 %v2006, %v2013
          %v2030 = vmul.f32 %v2007, %v2013
          %v2031 = vld [vmem:[#allocation9] sm:$0x1]
          %v2033 = vlaneseq
          %v2034 = vshrl.u32 %v2033, 7
          %v2035 = vsub.s32 0, %v2034
          %v2036 = vrot.slane %v2031, %v2035
          %v2038 = vadd.f32 %v2015, %v2036
          %v2039 = vadd.f32 %v2016, %v2036
          %v2040 = vadd.f32 %v2017, %v2036
          %v2041 = vadd.f32 %v2018, %v2036
          %v2042 = vadd.f32 %v2019, %v2036
          %v2043 = vadd.f32 %v2020, %v2036
          %v2044 = vadd.f32 %v2021, %v2036
          %v2045 = vadd.f32 %v2022, %v2036
          %v2046 = vadd.f32 %v2023, %v2036
          %v2047 = vadd.f32 %v2024, %v2036
          %v2048 = vadd.f32 %v2025, %v2036
          %v2049 = vadd.f32 %v2026, %v2036
          %v2050 = vadd.f32 %v2027, %v2036
          %v2051 = vadd.f32 %v2028, %v2036
          %v2052 = vadd.f32 %v2029, %v2036
          %v2053 = vadd.f32 %v2030, %v2036
          %v2054 = vmax.f32 %v2038, 0.0
          %v2055 = vmax.f32 %v2039, 0.0
          %v2056 = vmax.f32 %v2040, 0.0
          %v2057 = vmax.f32 %v2041, 0.0
          %v2058 = vmax.f32 %v2042, 0.0
          %v2059 = vmax.f32 %v2043, 0.0
          %v2060 = vmax.f32 %v2044, 0.0
          %v2061 = vmax.f32 %v2045, 0.0
          %v2062 = vmax.f32 %v2046, 0.0
          %v2063 = vmax.f32 %v2047, 0.0
          %v2064 = vmax.f32 %v2048, 0.0
          %v2065 = vmax.f32 %v2049, 0.0
          %v2066 = vmax.f32 %v2050, 0.0
          %v2067 = vmax.f32 %v2051, 0.0
          %v2068 = vmax.f32 %v2052, 0.0
          %v2069 = vmax.f32 %v2053, 0.0
          %v2070 = vpack.c.bf16 %v2055, %v2054
          %v2071 = vpack.c.bf16 %v2057, %v2056
          %v2072 = vpack.c.bf16 %v2059, %v2058
          %v2073 = vpack.c.bf16 %v2061, %v2060
          %v2074 = vpack.c.bf16 %v2063, %v2062
          %v2075 = vpack.c.bf16 %v2065, %v2064
          %v2076 = vpack.c.bf16 %v2067, %v2066
          %v2077 = vpack.c.bf16 %v2069, %v2068
          %v2078 = vld [vmem:[%s4] sm:$0xf]
          %v2079 = vld [vmem:[%s4 + $0x4] sm:$0xf]
          %v2080 = vld [vmem:[%s4 + $0x8] sm:$0xf]
          %v2081 = vld [vmem:[%s4 + $0xc] sm:$0xf]
          %v2082 = vld [vmem:[%s4 + $0x10] sm:$0xf]
          %v2083 = vld [vmem:[%s4 + $0x14] sm:$0xf]
          %v2084 = vld [vmem:[%s4 + $0x18] sm:$0xf]
          %v2085 = vld [vmem:[%s4 + $0x1c] sm:$0xf]
          %v2094 = vunpack.c.l.b16 %v2078
          %v2095 = vunpack.c.l.b16 %v2079
          %v2096 = vunpack.c.l.b16 %v2080
          %v2097 = vunpack.c.l.b16 %v2081
          %v2098 = vunpack.c.l.b16 %v2082
          %v2099 = vunpack.c.l.b16 %v2083
          %v2100 = vunpack.c.l.b16 %v2084
          %v2101 = vunpack.c.l.b16 %v2085
          %v2102 = vpack.c.b16 %v2095, %v2094
          %v2103 = vpack.c.b16 %v2097, %v2096
          %v2104 = vpack.c.b16 %v2099, %v2098
          %v2105 = vpack.c.b16 %v2101, %v2100
          %vm2110 = vcmask 523264
          %v2112 = vsel %vm2110, %v2070, 0
          %v2115 = vsel %vm2110, %v2071, 0
          %v2118 = vsel %vm2110, %v2072, 0
          %v2121 = vsel %vm2110, %v2073, 0
          %v2124 = vsel %vm2110, %v2074, 0
          %v2127 = vsel %vm2110, %v2075, 0
          %v2130 = vsel %vm2110, %v2076, 0
          %v2133 = vsel %vm2110, %v2077, 0
          %2135 = vmatprep.subr.bf16.mxu0 0
          %2136 = vmatpush1.bf16.msra.mxu0 0
          %2137 = vmatprep.subr.bf16.mxu0 0
          %2138 = vmatpush1.bf16.msra.mxu0 0
          %2139 = vmatprep.subr.bf16.mxu0 0
          %2140 = vmatpush1.bf16.msra.mxu0 0
          %2141 = vmatprep.subr.bf16.mxu0 0
          %2142 = vmatpush1.bf16.msra.mxu0 0
          %2143 = vmatprep.subr.bf16.mxu0 0
          %2144 = vmatpush1.bf16.msra.mxu0 %v2105
          %2145 = vmatprep.subr.bf16.mxu0 0
          %2146 = vmatpush1.bf16.msra.mxu0 %v2104
          %2147 = vmatprep.subr.bf16.mxu0 0
          %2148 = vmatpush1.bf16.msra.mxu0 %v2103
          %2149 = vmatprep.subr.bf16.mxu0 0
          %2150 = vmatpush1.bf16.msra.mxu0 %v2102
          %2151 = vmatprep.subr.bf16.mxu0 0
          %2152 = vmatpush2.bf16.msra.mxu0 0
          %2153 = vmatprep.subr.bf16.mxu0 0
          %2154 = vmatpush2.bf16.msra.mxu0 0
          %2155 = vmatprep.subr.bf16.mxu0 0
          %2156 = vmatpush2.bf16.msra.mxu0 0
          %2157 = vmatprep.subr.bf16.mxu0 0
          %2158 = vmatpush2.bf16.msra.mxu0 0
          %2159 = vmatprep.subr.bf16.mxu0 0
          %2160 = vmatpush2.bf16.msra.mxu0 0
          %2161 = vmatprep.subr.bf16.mxu0 0
          %2162 = vmatpush2.bf16.msra.mxu0 0
          %2163 = vmatprep.subr.bf16.mxu0 0
          %2164 = vmatpush2.bf16.msra.mxu0 0
          %2165 = vmatprep.subr.bf16.mxu0 0
          %2166 = vmatpush2.bf16.msra.mxu0 0
          %2167 = vmatprep.mubr.bf16.mxu0 0
          %2168 = vmatmul.mubr.bf16.gmra.mxu0 %v2112
          %v2169 = vpop.f32.mrf.mxu0
          %v2170 = vadd.f32 0.0, %v2169
          %v2171 = vpop.f32.mrf.mxu0
          %v2172 = vpop.f32.mrf.mxu0
          %v2173 = vadd.f32 0.0, %v2172
          %v2174 = vpop.f32.mrf.mxu0
          %2175 = vmatprep.mubr.bf16.mxu0 0
          %2176 = vmatmul.mubr.bf16.gmra.mxu0 %v2115
          %v2177 = vpop.f32.mrf.mxu0
          %v2178 = vadd.f32 0.0, %v2177
          %v2179 = vpop.f32.mrf.mxu0
          %v2180 = vpop.f32.mrf.mxu0
          %v2181 = vadd.f32 0.0, %v2180
          %v2182 = vpop.f32.mrf.mxu0
          %2183 = vmatprep.mubr.bf16.mxu0 0
          %2184 = vmatmul.mubr.bf16.gmra.mxu0 %v2118
          %v2185 = vpop.f32.mrf.mxu0
          %v2186 = vadd.f32 0.0, %v2185
          %v2187 = vpop.f32.mrf.mxu0
          %v2188 = vpop.f32.mrf.mxu0
          %v2189 = vadd.f32 0.0, %v2188
          %v2190 = vpop.f32.mrf.mxu0
          %2191 = vmatprep.mubr.bf16.mxu0 0
          %2192 = vmatmul.mubr.bf16.gmra.mxu0 %v2121
          %v2193 = vpop.f32.mrf.mxu0
          %v2194 = vadd.f32 0.0, %v2193
          %v2195 = vpop.f32.mrf.mxu0
          %v2196 = vpop.f32.mrf.mxu0
          %v2197 = vadd.f32 0.0, %v2196
          %v2198 = vpop.f32.mrf.mxu0
          %2199 = vmatprep.mubr.bf16.mxu0 0
          %2200 = vmatmul.mubr.bf16.gmra.mxu0 %v2124
          %v2201 = vpop.f32.mrf.mxu0
          %v2202 = vadd.f32 0.0, %v2201
          %v2203 = vpop.f32.mrf.mxu0
          %v2204 = vpop.f32.mrf.mxu0
          %v2205 = vadd.f32 0.0, %v2204
          %v2206 = vpop.f32.mrf.mxu0
          %2207 = vmatprep.mubr.bf16.mxu0 0
          %2208 = vmatmul.mubr.bf16.gmra.mxu0 %v2127
          %v2209 = vpop.f32.mrf.mxu0
          %v2210 = vadd.f32 0.0, %v2209
          %v2211 = vpop.f32.mrf.mxu0
          %v2212 = vpop.f32.mrf.mxu0
          %v2213 = vadd.f32 0.0, %v2212
          %v2214 = vpop.f32.mrf.mxu0
          %2215 = vmatprep.mubr.bf16.mxu0 0
          %2216 = vmatmul.mubr.bf16.gmra.mxu0 %v2130
          %v2217 = vpop.f32.mrf.mxu0
          %v2218 = vadd.f32 0.0, %v2217
          %v2219 = vpop.f32.mrf.mxu0
          %v2220 = vpop.f32.mrf.mxu0
          %v2221 = vadd.f32 0.0, %v2220
          %v2222 = vpop.f32.mrf.mxu0
          %2223 = vmatprep.mubr.bf16.mxu0 0
          %2224 = vmatmul.mubr.bf16.gmra.mxu0 %v2133
          %v2225 = vpop.f32.mrf.mxu0
          %v2226 = vadd.f32 0.0, %v2225
          %v2227 = vpop.f32.mrf.mxu0
          %v2228 = vpop.f32.mrf.mxu0
          %v2229 = vadd.f32 0.0, %v2228
          %v2230 = vpop.f32.mrf.mxu0
          %2231 = vdwg.mxu0
          %v2232 = vld [vmem:[#allocation10] sm:$0x1]
          %v2234 = vlaneseq
          %v2235 = vshrl.u32 %v2234, 7
          %v2236 = vsub.s32 0, %v2235
          %v2237 = vrot.slane %v2232, %v2236
          %v2239 = vmul.f32 %v2170, %v2237
          %v2240 = vmul.f32 %v2173, %v2237
          %v2241 = vmul.f32 %v2178, %v2237
          %v2242 = vmul.f32 %v2181, %v2237
          %v2243 = vmul.f32 %v2186, %v2237
          %v2244 = vmul.f32 %v2189, %v2237
          %v2245 = vmul.f32 %v2194, %v2237
          %v2246 = vmul.f32 %v2197, %v2237
          %v2247 = vmul.f32 %v2202, %v2237
          %v2248 = vmul.f32 %v2205, %v2237
          %v2249 = vmul.f32 %v2210, %v2237
          %v2250 = vmul.f32 %v2213, %v2237
          %v2251 = vmul.f32 %v2218, %v2237
          %v2252 = vmul.f32 %v2221, %v2237
          %v2253 = vmul.f32 %v2226, %v2237
          %v2254 = vmul.f32 %v2229, %v2237
          %v2255 = vld [vmem:[#allocation11] sm:$0x1]
          %v2257 = vlaneseq
          %v2258 = vshrl.u32 %v2257, 7
          %v2259 = vsub.s32 0, %v2258
          %v2260 = vrot.slane %v2255, %v2259
          %v2262 = vadd.f32 %v2239, %v2260
          %v2263 = vadd.f32 %v2240, %v2260
          %v2264 = vadd.f32 %v2241, %v2260
          %v2265 = vadd.f32 %v2242, %v2260
          %v2266 = vadd.f32 %v2243, %v2260
          %v2267 = vadd.f32 %v2244, %v2260
          %v2268 = vadd.f32 %v2245, %v2260
          %v2269 = vadd.f32 %v2246, %v2260
          %v2270 = vadd.f32 %v2247, %v2260
          %v2271 = vadd.f32 %v2248, %v2260
          %v2272 = vadd.f32 %v2249, %v2260
          %v2273 = vadd.f32 %v2250, %v2260
          %v2274 = vadd.f32 %v2251, %v2260
          %v2275 = vadd.f32 %v2252, %v2260
          %v2276 = vadd.f32 %v2253, %v2260
          %v2277 = vadd.f32 %v2254, %v2260
          %v2278 = vmax.f32 %v2262, 0.0
          %v2279 = vmax.f32 %v2263, 0.0
          %v2280 = vmax.f32 %v2264, 0.0
          %v2281 = vmax.f32 %v2265, 0.0
          %v2282 = vmax.f32 %v2266, 0.0
          %v2283 = vmax.f32 %v2267, 0.0
          %v2284 = vmax.f32 %v2268, 0.0
          %v2285 = vmax.f32 %v2269, 0.0
          %v2286 = vmax.f32 %v2270, 0.0
          %v2287 = vmax.f32 %v2271, 0.0
          %v2288 = vmax.f32 %v2272, 0.0
          %v2289 = vmax.f32 %v2273, 0.0
          %v2290 = vmax.f32 %v2274, 0.0
          %v2291 = vmax.f32 %v2275, 0.0
          %v2292 = vmax.f32 %v2276, 0.0
          %v2293 = vmax.f32 %v2277, 0.0
          %v2294 = vpack.c.bf16 %v2279, %v2278
          %v2295 = vpack.c.bf16 %v2281, %v2280
          %v2296 = vpack.c.bf16 %v2283, %v2282
          %v2297 = vpack.c.bf16 %v2285, %v2284
          %v2298 = vpack.c.bf16 %v2287, %v2286
          %v2299 = vpack.c.bf16 %v2289, %v2288
          %v2300 = vpack.c.bf16 %v2291, %v2290
          %v2301 = vpack.c.bf16 %v2293, %v2292
          %v2302 = vld [vmem:[%s7] sm:$0xff]
          %v2303 = vld [vmem:[%s7 + $0x8] sm:$0xff]
          %v2304 = vld [vmem:[%s7 + $0x10] sm:$0xff]
          %v2305 = vld [vmem:[%s7 + $0x18] sm:$0xff]
          %v2306 = vld [vmem:[%s7 + $0x20] sm:$0xff]
          %v2307 = vld [vmem:[%s7 + $0x28] sm:$0xff]
          %v2308 = vld [vmem:[%s7 + $0x30] sm:$0xff]
          %v2309 = vld [vmem:[%s7 + $0x38] sm:$0xff]
          %v2310 = vld [vmem:[%s7 + $0x40] sm:$0xff]
          %v2311 = vld [vmem:[%s7 + $0x48] sm:$0xff]
          %v2312 = vld [vmem:[%s7 + $0x50] sm:$0xff]
          %v2313 = vld [vmem:[%s7 + $0x58] sm:$0xff]
          %v2314 = vld [vmem:[%s7 + $0x60] sm:$0xff]
          %v2315 = vld [vmem:[%s7 + $0x68] sm:$0xff]
          %v2316 = vld [vmem:[%s7 + $0x70] sm:$0xff]
          %v2317 = vld [vmem:[%s7 + $0x78] sm:$0xff]
          %v2318 = vld [vmem:[%s7 + $0x80] sm:$0xff]
          %v2319 = vld [vmem:[%s7 + $0x88] sm:$0xff]
          %v2320 = vld [vmem:[%s7 + $0x90] sm:$0xff]
          %v2321 = vld [vmem:[%s7 + $0x98] sm:$0xff]
          %v2322 = vld [vmem:[%s7 + $0xa0] sm:$0xff]
          %v2323 = vld [vmem:[%s7 + $0xa8] sm:$0xff]
          %v2324 = vld [vmem:[%s7 + $0xb0] sm:$0xff]
          %v2325 = vld [vmem:[%s7 + $0xb8] sm:$0xff]
          %v2326 = vld [vmem:[%s7 + $0xc0] sm:$0xff]
          %v2327 = vld [vmem:[%s7 + $0xc8] sm:$0xff]
          %v2328 = vld [vmem:[%s7 + $0xd0] sm:$0xff]
          %v2329 = vld [vmem:[%s7 + $0xd8] sm:$0xff]
          %v2330 = vld [vmem:[%s7 + $0xe0] sm:$0xff]
          %v2331 = vld [vmem:[%s7 + $0xe8] sm:$0xff]
          %v2332 = vld [vmem:[%s7 + $0xf0] sm:$0xff]
          %v2333 = vld [vmem:[%s7 + $0xf8] sm:$0xff]
          %v2334 = vld [vmem:[%s7 + $0x100] sm:$0xff]
          %v2335 = vld [vmem:[%s7 + $0x108] sm:$0xff]
          %v2336 = vld [vmem:[%s7 + $0x110] sm:$0xff]
          %v2337 = vld [vmem:[%s7 + $0x118] sm:$0xff]
          %v2338 = vld [vmem:[%s7 + $0x120] sm:$0xff]
          %v2339 = vld [vmem:[%s7 + $0x128] sm:$0xff]
          %v2340 = vld [vmem:[%s7 + $0x130] sm:$0xff]
          %v2341 = vld [vmem:[%s7 + $0x138] sm:$0xff]
          %v2342 = vld [vmem:[%s7 + $0x140] sm:$0xff]
          %v2343 = vld [vmem:[%s7 + $0x148] sm:$0xff]
          %v2344 = vld [vmem:[%s7 + $0x150] sm:$0xff]
          %v2345 = vld [vmem:[%s7 + $0x158] sm:$0xff]
          %v2346 = vld [vmem:[%s7 + $0x160] sm:$0xff]
          %v2347 = vld [vmem:[%s7 + $0x168] sm:$0xff]
          %v2348 = vld [vmem:[%s7 + $0x170] sm:$0xff]
          %v2349 = vld [vmem:[%s7 + $0x178] sm:$0xff]
          %v2350 = vld [vmem:[%s7 + $0x180] sm:$0xff]
          %v2351 = vld [vmem:[%s7 + $0x188] sm:$0xff]
          %v2352 = vld [vmem:[%s7 + $0x190] sm:$0xff]
          %v2353 = vld [vmem:[%s7 + $0x198] sm:$0xff]
          %v2354 = vld [vmem:[%s7 + $0x1a0] sm:$0xff]
          %v2355 = vld [vmem:[%s7 + $0x1a8] sm:$0xff]
          %v2356 = vld [vmem:[%s7 + $0x1b0] sm:$0xff]
          %v2357 = vld [vmem:[%s7 + $0x1b8] sm:$0xff]
          %v2358 = vld [vmem:[%s7 + $0x1c0] sm:$0xff]
          %v2359 = vld [vmem:[%s7 + $0x1c8] sm:$0xff]
          %v2360 = vld [vmem:[%s7 + $0x1d0] sm:$0xff]
          %v2361 = vld [vmem:[%s7 + $0x1d8] sm:$0xff]
          %v2362 = vld [vmem:[%s7 + $0x1e0] sm:$0xff]
          %v2363 = vld [vmem:[%s7 + $0x1e8] sm:$0xff]
          %v2364 = vld [vmem:[%s7 + $0x1f0] sm:$0xff]
          %v2365 = vld [vmem:[%s7 + $0x1f8] sm:$0xff]
          %v2430 = vunpack.c.l.b16 %v2302
          %v2431 = vunpack.c.h.b16 %v2302
          %v2432 = vunpack.c.l.b16 %v2303
          %v2433 = vunpack.c.h.b16 %v2303
          %v2434 = vunpack.c.l.b16 %v2304
          %v2435 = vunpack.c.h.b16 %v2304
          %v2436 = vunpack.c.l.b16 %v2305
          %v2437 = vunpack.c.h.b16 %v2305
          %v2438 = vunpack.c.l.b16 %v2306
          %v2439 = vunpack.c.h.b16 %v2306
          %v2440 = vunpack.c.l.b16 %v2307
          %v2441 = vunpack.c.h.b16 %v2307
          %v2442 = vunpack.c.l.b16 %v2308
          %v2443 = vunpack.c.h.b16 %v2308
          %v2444 = vunpack.c.l.b16 %v2309
          %v2445 = vunpack.c.h.b16 %v2309
          %v2446 = vunpack.c.l.b16 %v2310
          %v2447 = vunpack.c.h.b16 %v2310
          %v2448 = vunpack.c.l.b16 %v2311
          %v2449 = vunpack.c.h.b16 %v2311
          %v2450 = vunpack.c.l.b16 %v2312
          %v2451 = vunpack.c.h.b16 %v2312
          %v2452 = vunpack.c.l.b16 %v2313
          %v2453 = vunpack.c.h.b16 %v2313
          %v2454 = vunpack.c.l.b16 %v2314
          %v2455 = vunpack.c.h.b16 %v2314
          %v2456 = vunpack.c.l.b16 %v2315
          %v2457 = vunpack.c.h.b16 %v2315
          %v2458 = vunpack.c.l.b16 %v2316
          %v2459 = vunpack.c.h.b16 %v2316
          %v2460 = vunpack.c.l.b16 %v2317
          %v2461 = vunpack.c.h.b16 %v2317
          %v2462 = vunpack.c.l.b16 %v2318
          %v2463 = vunpack.c.h.b16 %v2318
          %v2464 = vunpack.c.l.b16 %v2319
          %v2465 = vunpack.c.h.b16 %v2319
          %v2466 = vunpack.c.l.b16 %v2320
          %v2467 = vunpack.c.h.b16 %v2320
          %v2468 = vunpack.c.l.b16 %v2321
          %v2469 = vunpack.c.h.b16 %v2321
          %v2470 = vunpack.c.l.b16 %v2322
          %v2471 = vunpack.c.h.b16 %v2322
          %v2472 = vunpack.c.l.b16 %v2323
          %v2473 = vunpack.c.h.b16 %v2323
          %v2474 = vunpack.c.l.b16 %v2324
          %v2475 = vunpack.c.h.b16 %v2324
          %v2476 = vunpack.c.l.b16 %v2325
          %v2477 = vunpack.c.h.b16 %v2325
          %v2478 = vunpack.c.l.b16 %v2326
          %v2479 = vunpack.c.h.b16 %v2326
          %v2480 = vunpack.c.l.b16 %v2327
          %v2481 = vunpack.c.h.b16 %v2327
          %v2482 = vunpack.c.l.b16 %v2328
          %v2483 = vunpack.c.h.b16 %v2328
          %v2484 = vunpack.c.l.b16 %v2329
          %v2485 = vunpack.c.h.b16 %v2329
          %v2486 = vunpack.c.l.b16 %v2330
          %v2487 = vunpack.c.h.b16 %v2330
          %v2488 = vunpack.c.l.b16 %v2331
          %v2489 = vunpack.c.h.b16 %v2331
          %v2490 = vunpack.c.l.b16 %v2332
          %v2491 = vunpack.c.h.b16 %v2332
          %v2492 = vunpack.c.l.b16 %v2333
          %v2493 = vunpack.c.h.b16 %v2333
          %v2494 = vunpack.c.l.b16 %v2334
          %v2495 = vunpack.c.h.b16 %v2334
          %v2496 = vunpack.c.l.b16 %v2335
          %v2497 = vunpack.c.h.b16 %v2335
          %v2498 = vunpack.c.l.b16 %v2336
          %v2499 = vunpack.c.h.b16 %v2336
          %v2500 = vunpack.c.l.b16 %v2337
          %v2501 = vunpack.c.h.b16 %v2337
          %v2502 = vunpack.c.l.b16 %v2338
          %v2503 = vunpack.c.h.b16 %v2338
          %v2504 = vunpack.c.l.b16 %v2339
          %v2505 = vunpack.c.h.b16 %v2339
          %v2506 = vunpack.c.l.b16 %v2340
          %v2507 = vunpack.c.h.b16 %v2340
          %v2508 = vunpack.c.l.b16 %v2341
          %v2509 = vunpack.c.h.b16 %v2341
          %v2510 = vunpack.c.l.b16 %v2342
          %v2511 = vunpack.c.h.b16 %v2342
          %v2512 = vunpack.c.l.b16 %v2343
          %v2513 = vunpack.c.h.b16 %v2343
          %v2514 = vunpack.c.l.b16 %v2344
          %v2515 = vunpack.c.h.b16 %v2344
          %v2516 = vunpack.c.l.b16 %v2345
          %v2517 = vunpack.c.h.b16 %v2345
          %v2518 = vunpack.c.l.b16 %v2346
          %v2519 = vunpack.c.h.b16 %v2346
          %v2520 = vunpack.c.l.b16 %v2347
          %v2521 = vunpack.c.h.b16 %v2347
          %v2522 = vunpack.c.l.b16 %v2348
          %v2523 = vunpack.c.h.b16 %v2348
          %v2524 = vunpack.c.l.b16 %v2349
          %v2525 = vunpack.c.h.b16 %v2349
          %v2526 = vunpack.c.l.b16 %v2350
          %v2527 = vunpack.c.h.b16 %v2350
          %v2528 = vunpack.c.l.b16 %v2351
          %v2529 = vunpack.c.h.b16 %v2351
          %v2530 = vunpack.c.l.b16 %v2352
          %v2531 = vunpack.c.h.b16 %v2352
          %v2532 = vunpack.c.l.b16 %v2353
          %v2533 = vunpack.c.h.b16 %v2353
          %v2534 = vunpack.c.l.b16 %v2354
          %v2535 = vunpack.c.h.b16 %v2354
          %v2536 = vunpack.c.l.b16 %v2355
          %v2537 = vunpack.c.h.b16 %v2355
          %v2538 = vunpack.c.l.b16 %v2356
          %v2539 = vunpack.c.h.b16 %v2356
          %v2540 = vunpack.c.l.b16 %v2357
          %v2541 = vunpack.c.h.b16 %v2357
          %v2542 = vunpack.c.l.b16 %v2358
          %v2543 = vunpack.c.h.b16 %v2358
          %v2544 = vunpack.c.l.b16 %v2359
          %v2545 = vunpack.c.h.b16 %v2359
          %v2546 = vunpack.c.l.b16 %v2360
          %v2547 = vunpack.c.h.b16 %v2360
          %v2548 = vunpack.c.l.b16 %v2361
          %v2549 = vunpack.c.h.b16 %v2361
          %v2550 = vunpack.c.l.b16 %v2362
          %v2551 = vunpack.c.h.b16 %v2362
          %v2552 = vunpack.c.l.b16 %v2363
          %v2553 = vunpack.c.h.b16 %v2363
          %v2554 = vunpack.c.l.b16 %v2364
          %v2555 = vunpack.c.h.b16 %v2364
          %v2556 = vunpack.c.l.b16 %v2365
          %v2557 = vunpack.c.h.b16 %v2365
          %v2558 = vpack.c.b16 %v2438, %v2430
          %v2559 = vpack.c.b16 %v2439, %v2431
          %v2560 = vpack.c.b16 %v2440, %v2432
          %v2561 = vpack.c.b16 %v2441, %v2433
          %v2562 = vpack.c.b16 %v2442, %v2434
          %v2563 = vpack.c.b16 %v2443, %v2435
          %v2564 = vpack.c.b16 %v2444, %v2436
          %v2565 = vpack.c.b16 %v2445, %v2437
          %v2566 = vpack.c.b16 %v2454, %v2446
          %v2567 = vpack.c.b16 %v2455, %v2447
          %v2568 = vpack.c.b16 %v2456, %v2448
          %v2569 = vpack.c.b16 %v2457, %v2449
          %v2570 = vpack.c.b16 %v2458, %v2450
          %v2571 = vpack.c.b16 %v2459, %v2451
          %v2572 = vpack.c.b16 %v2460, %v2452
          %v2573 = vpack.c.b16 %v2461, %v2453
          %v2574 = vpack.c.b16 %v2470, %v2462
          %v2575 = vpack.c.b16 %v2471, %v2463
          %v2576 = vpack.c.b16 %v2472, %v2464
          %v2577 = vpack.c.b16 %v2473, %v2465
          %v2578 = vpack.c.b16 %v2474, %v2466
          %v2579 = vpack.c.b16 %v2475, %v2467
          %v2580 = vpack.c.b16 %v2476, %v2468
          %v2581 = vpack.c.b16 %v2477, %v2469
          %v2582 = vpack.c.b16 %v2486, %v2478
          %v2583 = vpack.c.b16 %v2487, %v2479
          %v2584 = vpack.c.b16 %v2488, %v2480
          %v2585 = vpack.c.b16 %v2489, %v2481
          %v2586 = vpack.c.b16 %v2490, %v2482
          %v2587 = vpack.c.b16 %v2491, %v2483
          %v2588 = vpack.c.b16 %v2492, %v2484
          %v2589 = vpack.c.b16 %v2493, %v2485
          %v2590 = vpack.c.b16 %v2502, %v2494
          %v2591 = vpack.c.b16 %v2503, %v2495
          %v2592 = vpack.c.b16 %v2504, %v2496
          %v2593 = vpack.c.b16 %v2505, %v2497
          %v2594 = vpack.c.b16 %v2506, %v2498
          %v2595 = vpack.c.b16 %v2507, %v2499
          %v2596 = vpack.c.b16 %v2508, %v2500
          %v2597 = vpack.c.b16 %v2509, %v2501
          %v2598 = vpack.c.b16 %v2518, %v2510
          %v2599 = vpack.c.b16 %v2519, %v2511
          %v2600 = vpack.c.b16 %v2520, %v2512
          %v2601 = vpack.c.b16 %v2521, %v2513
          %v2602 = vpack.c.b16 %v2522, %v2514
          %v2603 = vpack.c.b16 %v2523, %v2515
          %v2604 = vpack.c.b16 %v2524, %v2516
          %v2605 = vpack.c.b16 %v2525, %v2517
          %v2606 = vpack.c.b16 %v2534, %v2526
          %v2607 = vpack.c.b16 %v2535, %v2527
          %v2608 = vpack.c.b16 %v2536, %v2528
          %v2609 = vpack.c.b16 %v2537, %v2529
          %v2610 = vpack.c.b16 %v2538, %v2530
          %v2611 = vpack.c.b16 %v2539, %v2531
          %v2612 = vpack.c.b16 %v2540, %v2532
          %v2613 = vpack.c.b16 %v2541, %v2533
          %v2614 = vpack.c.b16 %v2550, %v2542
          %v2615 = vpack.c.b16 %v2551, %v2543
          %v2616 = vpack.c.b16 %v2552, %v2544
          %v2617 = vpack.c.b16 %v2553, %v2545
          %v2618 = vpack.c.b16 %v2554, %v2546
          %v2619 = vpack.c.b16 %v2555, %v2547
          %v2620 = vpack.c.b16 %v2556, %v2548
          %v2621 = vpack.c.b16 %v2557, %v2549
          %2686 = vmatprep.subr.bf16.mxu0 %v2615
          %2687 = vmatpush1.bf16.msra.mxu0 %v2614
          %2688 = vmatprep.subr.bf16.mxu0 %v2607
          %2689 = vmatpush1.bf16.msra.mxu0 %v2606
          %2690 = vmatprep.subr.bf16.mxu0 %v2599
          %2691 = vmatpush1.bf16.msra.mxu0 %v2598
          %2692 = vmatprep.subr.bf16.mxu0 %v2591
          %2693 = vmatpush1.bf16.msra.mxu0 %v2590
          %2694 = vmatprep.subr.bf16.mxu0 %v2583
          %2695 = vmatpush1.bf16.msra.mxu0 %v2582
          %2696 = vmatprep.subr.bf16.mxu0 %v2575
          %2697 = vmatpush1.bf16.msra.mxu0 %v2574
          %2698 = vmatprep.subr.bf16.mxu0 %v2567
          %2699 = vmatpush1.bf16.msra.mxu0 %v2566
          %2700 = vmatprep.subr.bf16.mxu0 %v2559
          %2701 = vmatpush1.bf16.msra.mxu0 %v2558
          %2702 = vmatprep.subr.bf16.mxu0 0
          %2703 = vmatpush2.bf16.msra.mxu0 0
          %2704 = vmatprep.subr.bf16.mxu0 0
          %2705 = vmatpush2.bf16.msra.mxu0 0
          %2706 = vmatprep.subr.bf16.mxu0 0
          %2707 = vmatpush2.bf16.msra.mxu0 0
          %2708 = vmatprep.subr.bf16.mxu0 0
          %2709 = vmatpush2.bf16.msra.mxu0 0
          %2710 = vmatprep.subr.bf16.mxu0 0
          %2711 = vmatpush2.bf16.msra.mxu0 0
          %2712 = vmatprep.subr.bf16.mxu0 0
          %2713 = vmatpush2.bf16.msra.mxu0 0
          %2714 = vmatprep.subr.bf16.mxu0 0
          %2715 = vmatpush2.bf16.msra.mxu0 0
          %2716 = vmatprep.subr.bf16.mxu0 0
          %2717 = vmatpush2.bf16.msra.mxu0 0
          %2718 = vmatprep.mubr.bf16.mxu0 0
          %2719 = vmatmul.mubr.bf16.gmra.mxu0 %v2294
          %v2720 = vpop.f32.mrf.mxu0
          %v2721 = vadd.f32 0.0, %v2720
          %v2722 = vpop.f32.mrf.mxu0
          %v2723 = vadd.f32 0.0, %v2722
          %v2724 = vpop.f32.mrf.mxu0
          %v2725 = vadd.f32 0.0, %v2724
          %v2726 = vpop.f32.mrf.mxu0
          %v2727 = vadd.f32 0.0, %v2726
          %2728 = vmatprep.mubr.bf16.mxu0 0
          %2729 = vmatmul.mubr.bf16.gmra.mxu0 %v2295
          %v2730 = vpop.f32.mrf.mxu0
          %v2731 = vadd.f32 0.0, %v2730
          %v2732 = vpop.f32.mrf.mxu0
          %v2733 = vadd.f32 0.0, %v2732
          %v2734 = vpop.f32.mrf.mxu0
          %v2735 = vadd.f32 0.0, %v2734
          %v2736 = vpop.f32.mrf.mxu0
          %v2737 = vadd.f32 0.0, %v2736
          %2738 = vmatprep.mubr.bf16.mxu0 0
          %2739 = vmatmul.mubr.bf16.gmra.mxu0 %v2296
          %v2740 = vpop.f32.mrf.mxu0
          %v2741 = vadd.f32 0.0, %v2740
          %v2742 = vpop.f32.mrf.mxu0
          %v2743 = vadd.f32 0.0, %v2742
          %v2744 = vpop.f32.mrf.mxu0
          %v2745 = vadd.f32 0.0, %v2744
          %v2746 = vpop.f32.mrf.mxu0
          %v2747 = vadd.f32 0.0, %v2746
          %2748 = vmatprep.mubr.bf16.mxu0 0
          %2749 = vmatmul.mubr.bf16.gmra.mxu0 %v2297
          %v2750 = vpop.f32.mrf.mxu0
          %v2751 = vadd.f32 0.0, %v2750
          %v2752 = vpop.f32.mrf.mxu0
          %v2753 = vadd.f32 0.0, %v2752
          %v2754 = vpop.f32.mrf.mxu0
          %v2755 = vadd.f32 0.0, %v2754
          %v2756 = vpop.f32.mrf.mxu0
          %v2757 = vadd.f32 0.0, %v2756
          %2758 = vmatprep.mubr.bf16.mxu0 0
          %2759 = vmatmul.mubr.bf16.gmra.mxu0 %v2298
          %v2760 = vpop.f32.mrf.mxu0
          %v2761 = vadd.f32 0.0, %v2760
          %v2762 = vpop.f32.mrf.mxu0
          %v2763 = vadd.f32 0.0, %v2762
          %v2764 = vpop.f32.mrf.mxu0
          %v2765 = vadd.f32 0.0, %v2764
          %v2766 = vpop.f32.mrf.mxu0
          %v2767 = vadd.f32 0.0, %v2766
          %2768 = vmatprep.mubr.bf16.mxu0 0
          %2769 = vmatmul.mubr.bf16.gmra.mxu0 %v2299
          %v2770 = vpop.f32.mrf.mxu0
          %v2771 = vadd.f32 0.0, %v2770
          %v2772 = vpop.f32.mrf.mxu0
          %v2773 = vadd.f32 0.0, %v2772
          %v2774 = vpop.f32.mrf.mxu0
          %v2775 = vadd.f32 0.0, %v2774
          %v2776 = vpop.f32.mrf.mxu0
          %v2777 = vadd.f32 0.0, %v2776
          %2778 = vmatprep.mubr.bf16.mxu0 0
          %2779 = vmatmul.mubr.bf16.gmra.mxu0 %v2300
          %v2780 = vpop.f32.mrf.mxu0
          %v2781 = vadd.f32 0.0, %v2780
          %v2782 = vpop.f32.mrf.mxu0
          %v2783 = vadd.f32 0.0, %v2782
          %v2784 = vpop.f32.mrf.mxu0
          %v2785 = vadd.f32 0.0, %v2784
          %v2786 = vpop.f32.mrf.mxu0
          %v2787 = vadd.f32 0.0, %v2786
          %2788 = vmatprep.mubr.bf16.mxu0 0
          %2789 = vmatmul.mubr.bf16.gmra.mxu0 %v2301
          %v2790 = vpop.f32.mrf.mxu0
          %v2791 = vadd.f32 0.0, %v2790
          %v2792 = vpop.f32.mrf.mxu0
          %v2793 = vadd.f32 0.0, %v2792
          %v2794 = vpop.f32.mrf.mxu0
          %v2795 = vadd.f32 0.0, %v2794
          %v2796 = vpop.f32.mrf.mxu0
          %v2797 = vadd.f32 0.0, %v2796
          %2798 = vdwg.mxu0
          %2799 = vmatprep.subr.bf16.mxu0 %v2617
          %2800 = vmatpush1.bf16.msra.mxu0 %v2616
          %2801 = vmatprep.subr.bf16.mxu0 %v2609
          %2802 = vmatpush1.bf16.msra.mxu0 %v2608
          %2803 = vmatprep.subr.bf16.mxu0 %v2601
          %2804 = vmatpush1.bf16.msra.mxu0 %v2600
          %2805 = vmatprep.subr.bf16.mxu0 %v2593
          %2806 = vmatpush1.bf16.msra.mxu0 %v2592
          %2807 = vmatprep.subr.bf16.mxu0 %v2585
          %2808 = vmatpush1.bf16.msra.mxu0 %v2584
          %2809 = vmatprep.subr.bf16.mxu0 %v2577
          %2810 = vmatpush1.bf16.msra.mxu0 %v2576
          %2811 = vmatprep.subr.bf16.mxu0 %v2569
          %2812 = vmatpush1.bf16.msra.mxu0 %v2568
          %2813 = vmatprep.subr.bf16.mxu0 %v2561
          %2814 = vmatpush1.bf16.msra.mxu0 %v2560
          %2815 = vmatprep.subr.bf16.mxu0 0
          %2816 = vmatpush2.bf16.msra.mxu0 0
          %2817 = vmatprep.subr.bf16.mxu0 0
          %2818 = vmatpush2.bf16.msra.mxu0 0
          %2819 = vmatprep.subr.bf16.mxu0 0
          %2820 = vmatpush2.bf16.msra.mxu0 0
          %2821 = vmatprep.subr.bf16.mxu0 0
          %2822 = vmatpush2.bf16.msra.mxu0 0
          %2823 = vmatprep.subr.bf16.mxu0 0
          %2824 = vmatpush2.bf16.msra.mxu0 0
          %2825 = vmatprep.subr.bf16.mxu0 0
          %2826 = vmatpush2.bf16.msra.mxu0 0
          %2827 = vmatprep.subr.bf16.mxu0 0
          %2828 = vmatpush2.bf16.msra.mxu0 0
          %2829 = vmatprep.subr.bf16.mxu0 0
          %2830 = vmatpush2.bf16.msra.mxu0 0
          %2831 = vmatprep.mubr.bf16.mxu0 0
          %2832 = vmatmul.mubr.bf16.gmra.mxu0 %v2294
          %v2833 = vpop.f32.mrf.mxu0
          %v2834 = vadd.f32 0.0, %v2833
          %v2835 = vpop.f32.mrf.mxu0
          %v2836 = vadd.f32 0.0, %v2835
          %v2837 = vpop.f32.mrf.mxu0
          %v2838 = vadd.f32 0.0, %v2837
          %v2839 = vpop.f32.mrf.mxu0
          %v2840 = vadd.f32 0.0, %v2839
          %2841 = vmatprep.mubr.bf16.mxu0 0
          %2842 = vmatmul.mubr.bf16.gmra.mxu0 %v2295
          %v2843 = vpop.f32.mrf.mxu0
          %v2844 = vadd.f32 0.0, %v2843
          %v2845 = vpop.f32.mrf.mxu0
          %v2846 = vadd.f32 0.0, %v2845
          %v2847 = vpop.f32.mrf.mxu0
          %v2848 = vadd.f32 0.0, %v2847
          %v2849 = vpop.f32.mrf.mxu0
          %v2850 = vadd.f32 0.0, %v2849
          %2851 = vmatprep.mubr.bf16.mxu0 0
          %2852 = vmatmul.mubr.bf16.gmra.mxu0 %v2296
          %v2853 = vpop.f32.mrf.mxu0
          %v2854 = vadd.f32 0.0, %v2853
          %v2855 = vpop.f32.mrf.mxu0
          %v2856 = vadd.f32 0.0, %v2855
          %v2857 = vpop.f32.mrf.mxu0
          %v2858 = vadd.f32 0.0, %v2857
          %v2859 = vpop.f32.mrf.mxu0
          %v2860 = vadd.f32 0.0, %v2859
          %2861 = vmatprep.mubr.bf16.mxu0 0
          %2862 = vmatmul.mubr.bf16.gmra.mxu0 %v2297
          %v2863 = vpop.f32.mrf.mxu0
          %v2864 = vadd.f32 0.0, %v2863
          %v2865 = vpop.f32.mrf.mxu0
          %v2866 = vadd.f32 0.0, %v2865
          %v2867 = vpop.f32.mrf.mxu0
          %v2868 = vadd.f32 0.0, %v2867
          %v2869 = vpop.f32.mrf.mxu0
          %v2870 = vadd.f32 0.0, %v2869
          %2871 = vmatprep.mubr.bf16.mxu0 0
          %2872 = vmatmul.mubr.bf16.gmra.mxu0 %v2298
          %v2873 = vpop.f32.mrf.mxu0
          %v2874 = vadd.f32 0.0, %v2873
          %v2875 = vpop.f32.mrf.mxu0
          %v2876 = vadd.f32 0.0, %v2875
          %v2877 = vpop.f32.mrf.mxu0
          %v2878 = vadd.f32 0.0, %v2877
          %v2879 = vpop.f32.mrf.mxu0
          %v2880 = vadd.f32 0.0, %v2879
          %2881 = vmatprep.mubr.bf16.mxu0 0
          %2882 = vmatmul.mubr.bf16.gmra.mxu0 %v2299
          %v2883 = vpop.f32.mrf.mxu0
          %v2884 = vadd.f32 0.0, %v2883
          %v2885 = vpop.f32.mrf.mxu0
          %v2886 = vadd.f32 0.0, %v2885
          %v2887 = vpop.f32.mrf.mxu0
          %v2888 = vadd.f32 0.0, %v2887
          %v2889 = vpop.f32.mrf.mxu0
          %v2890 = vadd.f32 0.0, %v2889
          %2891 = vmatprep.mubr.bf16.mxu0 0
          %2892 = vmatmul.mubr.bf16.gmra.mxu0 %v2300
          %v2893 = vpop.f32.mrf.mxu0
          %v2894 = vadd.f32 0.0, %v2893
          %v2895 = vpop.f32.mrf.mxu0
          %v2896 = vadd.f32 0.0, %v2895
          %v2897 = vpop.f32.mrf.mxu0
          %v2898 = vadd.f32 0.0, %v2897
          %v2899 = vpop.f32.mrf.mxu0
          %v2900 = vadd.f32 0.0, %v2899
          %2901 = vmatprep.mubr.bf16.mxu0 0
          %2902 = vmatmul.mubr.bf16.gmra.mxu0 %v2301
          %v2903 = vpop.f32.mrf.mxu0
          %v2904 = vadd.f32 0.0, %v2903
          %v2905 = vpop.f32.mrf.mxu0
          %v2906 = vadd.f32 0.0, %v2905
          %v2907 = vpop.f32.mrf.mxu0
          %v2908 = vadd.f32 0.0, %v2907
          %v2909 = vpop.f32.mrf.mxu0
          %v2910 = vadd.f32 0.0, %v2909
          %2911 = vdwg.mxu0
          %2912 = vmatprep.subr.bf16.mxu0 %v2619
          %2913 = vmatpush1.bf16.msra.mxu0 %v2618
          %2914 = vmatprep.subr.bf16.mxu0 %v2611
          %2915 = vmatpush1.bf16.msra.mxu0 %v2610
          %2916 = vmatprep.subr.bf16.mxu0 %v2603
          %2917 = vmatpush1.bf16.msra.mxu0 %v2602
          %2918 = vmatprep.subr.bf16.mxu0 %v2595
          %2919 = vmatpush1.bf16.msra.mxu0 %v2594
          %2920 = vmatprep.subr.bf16.mxu0 %v2587
          %2921 = vmatpush1.bf16.msra.mxu0 %v2586
          %2922 = vmatprep.subr.bf16.mxu0 %v2579
          %2923 = vmatpush1.bf16.msra.mxu0 %v2578
          %2924 = vmatprep.subr.bf16.mxu0 %v2571
          %2925 = vmatpush1.bf16.msra.mxu0 %v2570
          %2926 = vmatprep.subr.bf16.mxu0 %v2563
          %2927 = vmatpush1.bf16.msra.mxu0 %v2562
          %2928 = vmatprep.subr.bf16.mxu0 0
          %2929 = vmatpush2.bf16.msra.mxu0 0
          %2930 = vmatprep.subr.bf16.mxu0 0
          %2931 = vmatpush2.bf16.msra.mxu0 0
          %2932 = vmatprep.subr.bf16.mxu0 0
          %2933 = vmatpush2.bf16.msra.mxu0 0
          %2934 = vmatprep.subr.bf16.mxu0 0
          %2935 = vmatpush2.bf16.msra.mxu0 0
          %2936 = vmatprep.subr.bf16.mxu0 0
          %2937 = vmatpush2.bf16.msra.mxu0 0
          %2938 = vmatprep.subr.bf16.mxu0 0
          %2939 = vmatpush2.bf16.msra.mxu0 0
          %2940 = vmatprep.subr.bf16.mxu0 0
          %2941 = vmatpush2.bf16.msra.mxu0 0
          %2942 = vmatprep.subr.bf16.mxu0 0
          %2943 = vmatpush2.bf16.msra.mxu0 0
          %2944 = vmatprep.mubr.bf16.mxu0 0
          %2945 = vmatmul.mubr.bf16.gmra.mxu0 %v2294
          %v2946 = vpop.f32.mrf.mxu0
          %v2947 = vadd.f32 0.0, %v2946
          %v2948 = vpop.f32.mrf.mxu0
          %v2949 = vadd.f32 0.0, %v2948
          %v2950 = vpop.f32.mrf.mxu0
          %v2951 = vadd.f32 0.0, %v2950
          %v2952 = vpop.f32.mrf.mxu0
          %v2953 = vadd.f32 0.0, %v2952
          %2954 = vmatprep.mubr.bf16.mxu0 0
          %2955 = vmatmul.mubr.bf16.gmra.mxu0 %v2295
          %v2956 = vpop.f32.mrf.mxu0
          %v2957 = vadd.f32 0.0, %v2956
          %v2958 = vpop.f32.mrf.mxu0
          %v2959 = vadd.f32 0.0, %v2958
          %v2960 = vpop.f32.mrf.mxu0
          %v2961 = vadd.f32 0.0, %v2960
          %v2962 = vpop.f32.mrf.mxu0
          %v2963 = vadd.f32 0.0, %v2962
          %2964 = vmatprep.mubr.bf16.mxu0 0
          %2965 = vmatmul.mubr.bf16.gmra.mxu0 %v2296
          %v2966 = vpop.f32.mrf.mxu0
          %v2967 = vadd.f32 0.0, %v2966
          %v2968 = vpop.f32.mrf.mxu0
          %v2969 = vadd.f32 0.0, %v2968
          %v2970 = vpop.f32.mrf.mxu0
          %v2971 = vadd.f32 0.0, %v2970
          %v2972 = vpop.f32.mrf.mxu0
          %v2973 = vadd.f32 0.0, %v2972
          %2974 = vmatprep.mubr.bf16.mxu0 0
          %2975 = vmatmul.mubr.bf16.gmra.mxu0 %v2297
          %v2976 = vpop.f32.mrf.mxu0
          %v2977 = vadd.f32 0.0, %v2976
          %v2978 = vpop.f32.mrf.mxu0
          %v2979 = vadd.f32 0.0, %v2978
          %v2980 = vpop.f32.mrf.mxu0
          %v2981 = vadd.f32 0.0, %v2980
          %v2982 = vpop.f32.mrf.mxu0
          %v2983 = vadd.f32 0.0, %v2982
          %2984 = vmatprep.mubr.bf16.mxu0 0
          %2985 = vmatmul.mubr.bf16.gmra.mxu0 %v2298
          %v2986 = vpop.f32.mrf.mxu0
          %v2987 = vadd.f32 0.0, %v2986
          %v2988 = vpop.f32.mrf.mxu0
          %v2989 = vadd.f32 0.0, %v2988
          %v2990 = vpop.f32.mrf.mxu0
          %v2991 = vadd.f32 0.0, %v2990
          %v2992 = vpop.f32.mrf.mxu0
          %v2993 = vadd.f32 0.0, %v2992
          %2994 = vmatprep.mubr.bf16.mxu0 0
          %2995 = vmatmul.mubr.bf16.gmra.mxu0 %v2299
          %v2996 = vpop.f32.mrf.mxu0
          %v2997 = vadd.f32 0.0, %v2996
          %v2998 = vpop.f32.mrf.mxu0
          %v2999 = vadd.f32 0.0, %v2998
          %v3000 = vpop.f32.mrf.mxu0
          %v3001 = vadd.f32 0.0, %v3000
          %v3002 = vpop.f32.mrf.mxu0
          %v3003 = vadd.f32 0.0, %v3002
          %3004 = vmatprep.mubr.bf16.mxu0 0
          %3005 = vmatmul.mubr.bf16.gmra.mxu0 %v2300
          %v3006 = vpop.f32.mrf.mxu0
          %v3007 = vadd.f32 0.0, %v3006
          %v3008 = vpop.f32.mrf.mxu0
          %v3009 = vadd.f32 0.0, %v3008
          %v3010 = vpop.f32.mrf.mxu0
          %v3011 = vadd.f32 0.0, %v3010
          %v3012 = vpop.f32.mrf.mxu0
          %v3013 = vadd.f32 0.0, %v3012
          %3014 = vmatprep.mubr.bf16.mxu0 0
          %3015 = vmatmul.mubr.bf16.gmra.mxu0 %v2301
          %v3016 = vpop.f32.mrf.mxu0
          %v3017 = vadd.f32 0.0, %v3016
          %v3018 = vpop.f32.mrf.mxu0
          %v3019 = vadd.f32 0.0, %v3018
          %v3020 = vpop.f32.mrf.mxu0
          %v3021 = vadd.f32 0.0, %v3020
          %v3022 = vpop.f32.mrf.mxu0
          %v3023 = vadd.f32 0.0, %v3022
          %3024 = vdwg.mxu0
          %3025 = vmatprep.subr.bf16.mxu0 %v2621
          %3026 = vmatpush1.bf16.msra.mxu0 %v2620
          %3027 = vmatprep.subr.bf16.mxu0 %v2613
          %3028 = vmatpush1.bf16.msra.mxu0 %v2612
          %3029 = vmatprep.subr.bf16.mxu0 %v2605
          %3030 = vmatpush1.bf16.msra.mxu0 %v2604
          %3031 = vmatprep.subr.bf16.mxu0 %v2597
          %3032 = vmatpush1.bf16.msra.mxu0 %v2596
          %3033 = vmatprep.subr.bf16.mxu0 %v2589
          %3034 = vmatpush1.bf16.msra.mxu0 %v2588
          %3035 = vmatprep.subr.bf16.mxu0 %v2581
          %3036 = vmatpush1.bf16.msra.mxu0 %v2580
          %3037 = vmatprep.subr.bf16.mxu0 %v2573
          %3038 = vmatpush1.bf16.msra.mxu0 %v2572
          %3039 = vmatprep.subr.bf16.mxu0 %v2565
          %3040 = vmatpush1.bf16.msra.mxu0 %v2564
          %3041 = vmatprep.subr.bf16.mxu0 0
          %3042 = vmatpush2.bf16.msra.mxu0 0
          %3043 = vmatprep.subr.bf16.mxu0 0
          %3044 = vmatpush2.bf16.msra.mxu0 0
          %3045 = vmatprep.subr.bf16.mxu0 0
          %3046 = vmatpush2.bf16.msra.mxu0 0
          %3047 = vmatprep.subr.bf16.mxu0 0
          %3048 = vmatpush2.bf16.msra.mxu0 0
          %3049 = vmatprep.subr.bf16.mxu0 0
          %3050 = vmatpush2.bf16.msra.mxu0 0
          %3051 = vmatprep.subr.bf16.mxu0 0
          %3052 = vmatpush2.bf16.msra.mxu0 0
          %3053 = vmatprep.subr.bf16.mxu0 0
          %3054 = vmatpush2.bf16.msra.mxu0 0
          %3055 = vmatprep.subr.bf16.mxu0 0
          %3056 = vmatpush2.bf16.msra.mxu0 0
          %3057 = vmatprep.mubr.bf16.mxu0 0
          %3058 = vmatmul.mubr.bf16.gmra.mxu0 %v2294
          %v3059 = vpop.f32.mrf.mxu0
          %v3060 = vadd.f32 0.0, %v3059
          %v3061 = vpop.f32.mrf.mxu0
          %v3062 = vadd.f32 0.0, %v3061
          %v3063 = vpop.f32.mrf.mxu0
          %v3064 = vadd.f32 0.0, %v3063
          %v3065 = vpop.f32.mrf.mxu0
          %v3066 = vadd.f32 0.0, %v3065
          %3067 = vmatprep.mubr.bf16.mxu0 0
          %3068 = vmatmul.mubr.bf16.gmra.mxu0 %v2295
          %v3069 = vpop.f32.mrf.mxu0
          %v3070 = vadd.f32 0.0, %v3069
          %v3071 = vpop.f32.mrf.mxu0
          %v3072 = vadd.f32 0.0, %v3071
          %v3073 = vpop.f32.mrf.mxu0
          %v3074 = vadd.f32 0.0, %v3073
          %v3075 = vpop.f32.mrf.mxu0
          %v3076 = vadd.f32 0.0, %v3075
          %3077 = vmatprep.mubr.bf16.mxu0 0
          %3078 = vmatmul.mubr.bf16.gmra.mxu0 %v2296
          %v3079 = vpop.f32.mrf.mxu0
          %v3080 = vadd.f32 0.0, %v3079
          %v3081 = vpop.f32.mrf.mxu0
          %v3082 = vadd.f32 0.0, %v3081
          %v3083 = vpop.f32.mrf.mxu0
          %v3084 = vadd.f32 0.0, %v3083
          %v3085 = vpop.f32.mrf.mxu0
          %v3086 = vadd.f32 0.0, %v3085
          %3087 = vmatprep.mubr.bf16.mxu0 0
          %3088 = vmatmul.mubr.bf16.gmra.mxu0 %v2297
          %v3089 = vpop.f32.mrf.mxu0
          %v3090 = vadd.f32 0.0, %v3089
          %v3091 = vpop.f32.mrf.mxu0
          %v3092 = vadd.f32 0.0, %v3091
          %v3093 = vpop.f32.mrf.mxu0
          %v3094 = vadd.f32 0.0, %v3093
          %v3095 = vpop.f32.mrf.mxu0
          %v3096 = vadd.f32 0.0, %v3095
          %3097 = vmatprep.mubr.bf16.mxu0 0
          %3098 = vmatmul.mubr.bf16.gmra.mxu0 %v2298
          %v3099 = vpop.f32.mrf.mxu0
          %v3100 = vadd.f32 0.0, %v3099
          %v3101 = vpop.f32.mrf.mxu0
          %v3102 = vadd.f32 0.0, %v3101
          %v3103 = vpop.f32.mrf.mxu0
          %v3104 = vadd.f32 0.0, %v3103
          %v3105 = vpop.f32.mrf.mxu0
          %v3106 = vadd.f32 0.0, %v3105
          %3107 = vmatprep.mubr.bf16.mxu0 0
          %3108 = vmatmul.mubr.bf16.gmra.mxu0 %v2299
          %v3109 = vpop.f32.mrf.mxu0
          %v3110 = vadd.f32 0.0, %v3109
          %v3111 = vpop.f32.mrf.mxu0
          %v3112 = vadd.f32 0.0, %v3111
          %v3113 = vpop.f32.mrf.mxu0
          %v3114 = vadd.f32 0.0, %v3113
          %v3115 = vpop.f32.mrf.mxu0
          %v3116 = vadd.f32 0.0, %v3115
          %3117 = vmatprep.mubr.bf16.mxu0 0
          %3118 = vmatmul.mubr.bf16.gmra.mxu0 %v2300
          %v3119 = vpop.f32.mrf.mxu0
          %v3120 = vadd.f32 0.0, %v3119
          %v3121 = vpop.f32.mrf.mxu0
          %v3122 = vadd.f32 0.0, %v3121
          %v3123 = vpop.f32.mrf.mxu0
          %v3124 = vadd.f32 0.0, %v3123
          %v3125 = vpop.f32.mrf.mxu0
          %v3126 = vadd.f32 0.0, %v3125
          %3127 = vmatprep.mubr.bf16.mxu0 0
          %3128 = vmatmul.mubr.bf16.gmra.mxu0 %v2301
          %v3129 = vpop.f32.mrf.mxu0
          %v3130 = vadd.f32 0.0, %v3129
          %v3131 = vpop.f32.mrf.mxu0
          %v3132 = vadd.f32 0.0, %v3131
          %v3133 = vpop.f32.mrf.mxu0
          %v3134 = vadd.f32 0.0, %v3133
          %v3135 = vpop.f32.mrf.mxu0
          %v3136 = vadd.f32 0.0, %v3135
          %3137 = vdwg.mxu0
          %v3138 = vld [vmem:[#allocation6] sm:$0x1]
          %v3139 = vunpack.c.l.bf16 %v2294
          %v3140 = vunpack.c.h.bf16 %v2294
          %v3141 = vunpack.c.l.bf16 %v2295
          %v3142 = vunpack.c.h.bf16 %v2295
          %v3143 = vunpack.c.l.bf16 %v2296
          %v3144 = vunpack.c.h.bf16 %v2296
          %v3145 = vunpack.c.l.bf16 %v2297
          %v3146 = vunpack.c.h.bf16 %v2297
          %v3147 = vunpack.c.l.bf16 %v2298
          %v3148 = vunpack.c.h.bf16 %v2298
          %v3149 = vunpack.c.l.bf16 %v2299
          %v3150 = vunpack.c.h.bf16 %v2299
          %v3151 = vunpack.c.l.bf16 %v2300
          %v3152 = vunpack.c.h.bf16 %v2300
          %v3153 = vunpack.c.l.bf16 %v2301
          %v3154 = vunpack.c.h.bf16 %v2301
          %v3155 = vadd.f32 %v3139, %v3140
          %v3156 = vadd.f32 %v3155, %v3141
          %v3157 = vadd.f32 %v3156, %v3142
          %v3158 = vadd.f32 %v3157, %v3143
          %v3159 = vadd.f32 %v3158, %v3144
          %v3160 = vadd.f32 %v3159, %v3145
          %v3161 = vadd.f32 %v3160, %v3146
          %v3162 = vadd.f32 %v3161, %v3147
          %v3163 = vadd.f32 %v3162, %v3148
          %v3164 = vadd.f32 %v3163, %v3149
          %v3165 = vadd.f32 %v3164, %v3150
          %v3166 = vadd.f32 %v3165, %v3151
          %v3167 = vadd.f32 %v3166, %v3152
          %v3168 = vadd.f32 %v3167, %v3153
          %v3169 = vadd.f32 %v3168, %v3154
          %v3170 = vrot.slane %v3169, 4
          %v3171 = vadd.f32 %v3169, %v3170
          %v3172 = vrot.slane %v3171, 2
          %v3173 = vadd.f32 %v3171, %v3172
          %v3174 = vrot.slane %v3173, 1
          %v3175 = vadd.f32 %v3173, %v3174
          %v3176 = vadd.f32 %v3138, %v3175
          %3177 = vst [vmem:[#allocation6] sm:$0x1] %v3176
          %v3178 = vld [vmem:[#allocation7] sm:$0xff]
          %v3179 = vld [vmem:[#allocation7 + $0x8] sm:$0xff]
          %v3180 = vld [vmem:[#allocation7 + $0x10] sm:$0xff]
          %v3181 = vld [vmem:[#allocation7 + $0x18] sm:$0xff]
          %v3182 = vld [vmem:[#allocation7 + $0x20] sm:$0xff]
          %v3183 = vld [vmem:[#allocation7 + $0x28] sm:$0xff]
          %v3184 = vld [vmem:[#allocation7 + $0x30] sm:$0xff]
          %v3185 = vld [vmem:[#allocation7 + $0x38] sm:$0xff]
          %v3186 = vld [vmem:[#allocation7 + $0x40] sm:$0xff]
          %v3187 = vld [vmem:[#allocation7 + $0x48] sm:$0xff]
          %v3188 = vld [vmem:[#allocation7 + $0x50] sm:$0xff]
          %v3189 = vld [vmem:[#allocation7 + $0x58] sm:$0xff]
          %v3190 = vld [vmem:[#allocation7 + $0x60] sm:$0xff]
          %v3191 = vld [vmem:[#allocation7 + $0x68] sm:$0xff]
          %v3192 = vld [vmem:[#allocation7 + $0x70] sm:$0xff]
          %v3193 = vld [vmem:[#allocation7 + $0x78] sm:$0xff]
          %3194 = vxpose.xlu0.c.b16.start [1/8] %v2294, 128
          %3195 = vxpose.xlu0.c.b16.cont [2/8] %v2295, 128
          %3196 = vxpose.xlu0.c.b16.cont [3/8] %v2296, 128
          %3197 = vxpose.xlu0.c.b16.cont [4/8] %v2297, 128
          %3198 = vxpose.xlu0.c.b16.cont [5/8] %v2298, 128
          %3199 = vxpose.xlu0.c.b16.cont [6/8] %v2299, 128
          %3200 = vxpose.xlu0.c.b16.cont [7/8] %v2300, 128
          %3201 = vxpose.xlu0.c.b16.end [8/8] %v2301, 128
          %v3202 = vpop.trf.xlu0
          %v3203 = vpop.trf.xlu0
          %v3204 = vpop.trf.xlu0
          %v3205 = vpop.trf.xlu0
          %v3206 = vpop.trf.xlu0
          %v3207 = vpop.trf.xlu0
          %v3208 = vpop.trf.xlu0
          %v3209 = vpop.trf.xlu0
          %3210 = vmatprep.subr.bf16.mxu0 0
          %3211 = vmatpush1.bf16.msra.mxu0 %v2301
          %3212 = vmatprep.subr.bf16.mxu0 0
          %3213 = vmatpush1.bf16.msra.mxu0 %v2300
          %3214 = vmatprep.subr.bf16.mxu0 0
          %3215 = vmatpush1.bf16.msra.mxu0 %v2299
          %3216 = vmatprep.subr.bf16.mxu0 0
          %3217 = vmatpush1.bf16.msra.mxu0 %v2298
          %3218 = vmatprep.subr.bf16.mxu0 0
          %3219 = vmatpush1.bf16.msra.mxu0 %v2297
          %3220 = vmatprep.subr.bf16.mxu0 0
          %3221 = vmatpush1.bf16.msra.mxu0 %v2296
          %3222 = vmatprep.subr.bf16.mxu0 0
          %3223 = vmatpush1.bf16.msra.mxu0 %v2295
          %3224 = vmatprep.subr.bf16.mxu0 0
          %3225 = vmatpush1.bf16.msra.mxu0 %v2294
          %3226 = vmatprep.subr.bf16.mxu0 0
          %3227 = vmatpush2.bf16.msra.mxu0 0
          %3228 = vmatprep.subr.bf16.mxu0 0
          %3229 = vmatpush2.bf16.msra.mxu0 0
          %3230 = vmatprep.subr.bf16.mxu0 0
          %3231 = vmatpush2.bf16.msra.mxu0 0
          %3232 = vmatprep.subr.bf16.mxu0 0
          %3233 = vmatpush2.bf16.msra.mxu0 0
          %3234 = vmatprep.subr.bf16.mxu0 0
          %3235 = vmatpush2.bf16.msra.mxu0 0
          %3236 = vmatprep.subr.bf16.mxu0 0
          %3237 = vmatpush2.bf16.msra.mxu0 0
          %3238 = vmatprep.subr.bf16.mxu0 0
          %3239 = vmatpush2.bf16.msra.mxu0 0
          %3240 = vmatprep.subr.bf16.mxu0 0
          %3241 = vmatpush2.bf16.msra.mxu0 0
          %3242 = vmatprep.mubr.bf16.mxu0 0
          %3243 = vmatmul.mubr.bf16.gmra.mxu0 %v3202
          %v3244 = vpop.f32.mrf.mxu0
          %v3245 = vadd.f32 0.0, %v3244
          %v3246 = vpop.f32.mrf.mxu0
          %v3247 = vpop.f32.mrf.mxu0
          %v3248 = vadd.f32 0.0, %v3247
          %v3249 = vpop.f32.mrf.mxu0
          %3250 = vmatprep.mubr.bf16.mxu0 0
          %3251 = vmatmul.mubr.bf16.gmra.mxu0 %v3203
          %v3252 = vpop.f32.mrf.mxu0
          %v3253 = vadd.f32 0.0, %v3252
          %v3254 = vpop.f32.mrf.mxu0
          %v3255 = vpop.f32.mrf.mxu0
          %v3256 = vadd.f32 0.0, %v3255
          %v3257 = vpop.f32.mrf.mxu0
          %3258 = vmatprep.mubr.bf16.mxu0 0
          %3259 = vmatmul.mubr.bf16.gmra.mxu0 %v3204
          %v3260 = vpop.f32.mrf.mxu0
          %v3261 = vadd.f32 0.0, %v3260
          %v3262 = vpop.f32.mrf.mxu0
          %v3263 = vpop.f32.mrf.mxu0
          %v3264 = vadd.f32 0.0, %v3263
          %v3265 = vpop.f32.mrf.mxu0
          %3266 = vmatprep.mubr.bf16.mxu0 0
          %3267 = vmatmul.mubr.bf16.gmra.mxu0 %v3205
          %v3268 = vpop.f32.mrf.mxu0
          %v3269 = vadd.f32 0.0, %v3268
          %v3270 = vpop.f32.mrf.mxu0
          %v3271 = vpop.f32.mrf.mxu0
          %v3272 = vadd.f32 0.0, %v3271
          %v3273 = vpop.f32.mrf.mxu0
          %3274 = vmatprep.mubr.bf16.mxu0 0
          %3275 = vmatmul.mubr.bf16.gmra.mxu0 %v3206
          %v3276 = vpop.f32.mrf.mxu0
          %v3277 = vadd.f32 0.0, %v3276
          %v3278 = vpop.f32.mrf.mxu0
          %v3279 = vpop.f32.mrf.mxu0
          %v3280 = vadd.f32 0.0, %v3279
          %v3281 = vpop.f32.mrf.mxu0
          %3282 = vmatprep.mubr.bf16.mxu0 0
          %3283 = vmatmul.mubr.bf16.gmra.mxu0 %v3207
          %v3284 = vpop.f32.mrf.mxu0
          %v3285 = vadd.f32 0.0, %v3284
          %v3286 = vpop.f32.mrf.mxu0
          %v3287 = vpop.f32.mrf.mxu0
          %v3288 = vadd.f32 0.0, %v3287
          %v3289 = vpop.f32.mrf.mxu0
          %3290 = vmatprep.mubr.bf16.mxu0 0
          %3291 = vmatmul.mubr.bf16.gmra.mxu0 %v3208
          %v3292 = vpop.f32.mrf.mxu0
          %v3293 = vadd.f32 0.0, %v3292
          %v3294 = vpop.f32.mrf.mxu0
          %v3295 = vpop.f32.mrf.mxu0
          %v3296 = vadd.f32 0.0, %v3295
          %v3297 = vpop.f32.mrf.mxu0
          %3298 = vmatprep.mubr.bf16.mxu0 0
          %3299 = vmatmul.mubr.bf16.gmra.mxu0 %v3209
          %v3300 = vpop.f32.mrf.mxu0
          %v3301 = vadd.f32 0.0, %v3300
          %v3302 = vpop.f32.mrf.mxu0
          %v3303 = vpop.f32.mrf.mxu0
          %v3304 = vadd.f32 0.0, %v3303
          %v3305 = vpop.f32.mrf.mxu0
          %3306 = vdwg.mxu0
          %v3307 = vadd.f32 %v3178, %v3245
          %v3308 = vadd.f32 %v3179, %v3248
          %v3309 = vadd.f32 %v3180, %v3253
          %v3310 = vadd.f32 %v3181, %v3256
          %v3311 = vadd.f32 %v3182, %v3261
          %v3312 = vadd.f32 %v3183, %v3264
          %v3313 = vadd.f32 %v3184, %v3269
          %v3314 = vadd.f32 %v3185, %v3272
          %v3315 = vadd.f32 %v3186, %v3277
          %v3316 = vadd.f32 %v3187, %v3280
          %v3317 = vadd.f32 %v3188, %v3285
          %v3318 = vadd.f32 %v3189, %v3288
          %v3319 = vadd.f32 %v3190, %v3293
          %v3320 = vadd.f32 %v3191, %v3296
          %v3321 = vadd.f32 %v3192, %v3301
          %v3322 = vadd.f32 %v3193, %v3304
          %3323 = vst [vmem:[#allocation7] sm:$0xff] %v3307
          %3324 = vst [vmem:[#allocation7 + $0x8] sm:$0xff] %v3308
          %3325 = vst [vmem:[#allocation7 + $0x10] sm:$0xff] %v3309
          %3326 = vst [vmem:[#allocation7 + $0x18] sm:$0xff] %v3310
          %3327 = vst [vmem:[#allocation7 + $0x20] sm:$0xff] %v3311
          %3328 = vst [vmem:[#allocation7 + $0x28] sm:$0xff] %v3312
          %3329 = vst [vmem:[#allocation7 + $0x30] sm:$0xff] %v3313
          %3330 = vst [vmem:[#allocation7 + $0x38] sm:$0xff] %v3314
          %3331 = vst [vmem:[#allocation7 + $0x40] sm:$0xff] %v3315
          %3332 = vst [vmem:[#allocation7 + $0x48] sm:$0xff] %v3316
          %3333 = vst [vmem:[#allocation7 + $0x50] sm:$0xff] %v3317
          %3334 = vst [vmem:[#allocation7 + $0x58] sm:$0xff] %v3318
          %3335 = vst [vmem:[#allocation7 + $0x60] sm:$0xff] %v3319
          %3336 = vst [vmem:[#allocation7 + $0x68] sm:$0xff] %v3320
          %3337 = vst [vmem:[#allocation7 + $0x70] sm:$0xff] %v3321
          %3338 = vst [vmem:[#allocation7 + $0x78] sm:$0xff] %v3322
          %s3339 = sshra.s32 %s28, 1
          %s3340 = sand.u32 %s28, 1
          %s3341 = sshra.s32 %s28, 1
          %s3342 = sand.u32 %s28, 1
          %s3343 = smul.u32 %s3339, 8
          %s3344 = smul.u32 %s3343, 2
          %s3345 = sadd.s32 %s3344, %s3342
          %s3346 = scalar_lea.vmem [#allocation12], %s3345
          %v3347 = vld [vmem:[%s3346] ss:$2 sm:$0xff]
          %v3348 = vmax.f32 %v2721, %v2725
          %v3349 = vmax.f32 %v3348, %v2731
          %v3350 = vmax.f32 %v3349, %v2735
          %v3351 = vmax.f32 %v3350, %v2741
          %v3352 = vmax.f32 %v3351, %v2745
          %v3353 = vmax.f32 %v3352, %v2751
          %v3354 = vmax.f32 %v3353, %v2755
          %v3355 = vmax.f32 %v3354, %v2761
          %v3356 = vmax.f32 %v3355, %v2765
          %v3357 = vmax.f32 %v3356, %v2771
          %v3358 = vmax.f32 %v3357, %v2775
          %v3359 = vmax.f32 %v3358, %v2781
          %v3360 = vmax.f32 %v3359, %v2785
          %v3361 = vmax.f32 %v3360, %v2791
          %v3362 = vmax.f32 %v3361, %v2795
          %v3363 = vrot.slane %v3362, 4
          %v3364 = vmax.f32 %v3362, %v3363
          %v3365 = vrot.slane %v3364, 2
          %v3366 = vmax.f32 %v3364, %v3365
          %v3367 = vrot.slane %v3366, 1
          %v3368 = vmax.f32 %v3366, %v3367
          %v3369 = vmax.f32 %v2723, %v2727
          %v3370 = vmax.f32 %v3369, %v2733
          %v3371 = vmax.f32 %v3370, %v2737
          %v3372 = vmax.f32 %v3371, %v2743
          %v3373 = vmax.f32 %v3372, %v2747
          %v3374 = vmax.f32 %v3373, %v2753
          %v3375 = vmax.f32 %v3374, %v2757
          %v3376 = vmax.f32 %v3375, %v2763
          %v3377 = vmax.f32 %v3376, %v2767
          %v3378 = vmax.f32 %v3377, %v2773
          %v3379 = vmax.f32 %v3378, %v2777
          %v3380 = vmax.f32 %v3379, %v2783
          %v3381 = vmax.f32 %v3380, %v2787
          %v3382 = vmax.f32 %v3381, %v2793
          %v3383 = vmax.f32 %v3382, %v2797
          %v3384 = vrot.slane %v3383, 4
          %v3385 = vmax.f32 %v3383, %v3384
          %v3386 = vrot.slane %v3385, 2
          %v3387 = vmax.f32 %v3385, %v3386
          %v3388 = vrot.slane %v3387, 1
          %v3389 = vmax.f32 %v3387, %v3388
          %v3390 = vmax.f32 %v2834, %v2838
          %v3391 = vmax.f32 %v3390, %v2844
          %v3392 = vmax.f32 %v3391, %v2848
          %v3393 = vmax.f32 %v3392, %v2854
          %v3394 = vmax.f32 %v3393, %v2858
          %v3395 = vmax.f32 %v3394, %v2864
          %v3396 = vmax.f32 %v3395, %v2868
          %v3397 = vmax.f32 %v3396, %v2874
          %v3398 = vmax.f32 %v3397, %v2878
          %v3399 = vmax.f32 %v3398, %v2884
          %v3400 = vmax.f32 %v3399, %v2888
          %v3401 = vmax.f32 %v3400, %v2894
          %v3402 = vmax.f32 %v3401, %v2898
          %v3403 = vmax.f32 %v3402, %v2904
          %v3404 = vmax.f32 %v3403, %v2908
          %v3405 = vrot.slane %v3404, 4
          %v3406 = vmax.f32 %v3404, %v3405
          %v3407 = vrot.slane %v3406, 2
          %v3408 = vmax.f32 %v3406, %v3407
          %v3409 = vrot.slane %v3408, 1
          %v3410 = vmax.f32 %v3408, %v3409
          %v3411 = vmax.f32 %v2836, %v2840
          %v3412 = vmax.f32 %v3411, %v2846
          %v3413 = vmax.f32 %v3412, %v2850
          %v3414 = vmax.f32 %v3413, %v2856
          %v3415 = vmax.f32 %v3414, %v2860
          %v3416 = vmax.f32 %v3415, %v2866
          %v3417 = vmax.f32 %v3416, %v2870
          %v3418 = vmax.f32 %v3417, %v2876
          %v3419 = vmax.f32 %v3418, %v2880
          %v3420 = vmax.f32 %v3419, %v2886
          %v3421 = vmax.f32 %v3420, %v2890
          %v3422 = vmax.f32 %v3421, %v2896
          %v3423 = vmax.f32 %v3422, %v2900
          %v3424 = vmax.f32 %v3423, %v2906
          %v3425 = vmax.f32 %v3424, %v2910
          %v3426 = vrot.slane %v3425, 4
          %v3427 = vmax.f32 %v3425, %v3426
          %v3428 = vrot.slane %v3427, 2
          %v3429 = vmax.f32 %v3427, %v3428
          %v3430 = vrot.slane %v3429, 1
          %v3431 = vmax.f32 %v3429, %v3430
          %v3432 = vmax.f32 %v2947, %v2951
          %v3433 = vmax.f32 %v3432, %v2957
          %v3434 = vmax.f32 %v3433, %v2961
          %v3435 = vmax.f32 %v3434, %v2967
          %v3436 = vmax.f32 %v3435, %v2971
          %v3437 = vmax.f32 %v3436, %v2977
          %v3438 = vmax.f32 %v3437, %v2981
          %v3439 = vmax.f32 %v3438, %v2987
          %v3440 = vmax.f32 %v3439, %v2991
          %v3441 = vmax.f32 %v3440, %v2997
          %v3442 = vmax.f32 %v3441, %v3001
          %v3443 = vmax.f32 %v3442, %v3007
          %v3444 = vmax.f32 %v3443, %v3011
          %v3445 = vmax.f32 %v3444, %v3017
          %v3446 = vmax.f32 %v3445, %v3021
          %v3447 = vrot.slane %v3446, 4
          %v3448 = vmax.f32 %v3446, %v3447
          %v3449 = vrot.slane %v3448, 2
          %v3450 = vmax.f32 %v3448, %v3449
          %v3451 = vrot.slane %v3450, 1
          %v3452 = vmax.f32 %v3450, %v3451
          %v3453 = vmax.f32 %v2949, %v2953
          %v3454 = vmax.f32 %v3453, %v2959
          %v3455 = vmax.f32 %v3454, %v2963
          %v3456 = vmax.f32 %v3455, %v2969
          %v3457 = vmax.f32 %v3456, %v2973
          %v3458 = vmax.f32 %v3457, %v2979
          %v3459 = vmax.f32 %v3458, %v2983
          %v3460 = vmax.f32 %v3459, %v2989
          %v3461 = vmax.f32 %v3460, %v2993
          %v3462 = vmax.f32 %v3461, %v2999
          %v3463 = vmax.f32 %v3462, %v3003
          %v3464 = vmax.f32 %v3463, %v3009
          %v3465 = vmax.f32 %v3464, %v3013
          %v3466 = vmax.f32 %v3465, %v3019
          %v3467 = vmax.f32 %v3466, %v3023
          %v3468 = vrot.slane %v3467, 4
          %v3469 = vmax.f32 %v3467, %v3468
          %v3470 = vrot.slane %v3469, 2
          %v3471 = vmax.f32 %v3469, %v3470
          %v3472 = vrot.slane %v3471, 1
          %v3473 = vmax.f32 %v3471, %v3472
          %v3474 = vmax.f32 %v3060, %v3064
          %v3475 = vmax.f32 %v3474, %v3070
          %v3476 = vmax.f32 %v3475, %v3074
          %v3477 = vmax.f32 %v3476, %v3080
          %v3478 = vmax.f32 %v3477, %v3084
          %v3479 = vmax.f32 %v3478, %v3090
          %v3480 = vmax.f32 %v3479, %v3094
          %v3481 = vmax.f32 %v3480, %v3100
          %v3482 = vmax.f32 %v3481, %v3104
          %v3483 = vmax.f32 %v3482, %v3110
          %v3484 = vmax.f32 %v3483, %v3114
          %v3485 = vmax.f32 %v3484, %v3120
          %v3486 = vmax.f32 %v3485, %v3124
          %v3487 = vmax.f32 %v3486, %v3130
          %v3488 = vmax.f32 %v3487, %v3134
          %v3489 = vrot.slane %v3488, 4
          %v3490 = vmax.f32 %v3488, %v3489
          %v3491 = vrot.slane %v3490, 2
          %v3492 = vmax.f32 %v3490, %v3491
          %v3493 = vrot.slane %v3492, 1
          %v3494 = vmax.f32 %v3492, %v3493
          %v3495 = vmax.f32 %v3062, %v3066
          %v3496 = vmax.f32 %v3495, %v3072
          %v3497 = vmax.f32 %v3496, %v3076
          %v3498 = vmax.f32 %v3497, %v3082
          %v3499 = vmax.f32 %v3498, %v3086
          %v3500 = vmax.f32 %v3499, %v3092
          %v3501 = vmax.f32 %v3500, %v3096
          %v3502 = vmax.f32 %v3501, %v3102
          %v3503 = vmax.f32 %v3502, %v3106
          %v3504 = vmax.f32 %v3503, %v3112
          %v3505 = vmax.f32 %v3504, %v3116
          %v3506 = vmax.f32 %v3505, %v3122
          %v3507 = vmax.f32 %v3506, %v3126
          %v3508 = vmax.f32 %v3507, %v3132
          %v3509 = vmax.f32 %v3508, %v3136
          %v3510 = vrot.slane %v3509, 4
          %v3511 = vmax.f32 %v3509, %v3510
          %v3512 = vrot.slane %v3511, 2
          %v3513 = vmax.f32 %v3511, %v3512
          %v3514 = vrot.slane %v3513, 1
          %v3515 = vmax.f32 %v3513, %v3514
          %v3524 = vcombine.low %v3368, %v3389
          %v3525 = vcombine.low %v3410, %v3431
          %v3526 = vcombine.low %v3452, %v3473
          %v3527 = vcombine.low %v3494, %v3515
          %v3529 = vunpack.c.l.s4 1966171168
          %v3530 = vunpack.c.0.s8 %v3529
          %v3531 = vlaneseq
          %v3532 = vshrl.u32 %v3531, 7
          %v3533 = vsub.s32 %v3530, %v3532
          %v3534 = vrot.slane %v3524, %v3533
          %v3536 = vunpack.c.l.s4 1966171168
          %v3537 = vunpack.c.0.s8 %v3536
          %v3538 = vlaneseq
          %v3539 = vshrl.u32 %v3538, 7
          %v3540 = vsub.s32 %v3537, %v3539
          %v3541 = vrot.slane %v3525, %v3540
          %v3543 = vunpack.c.l.s4 1966171168
          %v3544 = vunpack.c.0.s8 %v3543
          %v3545 = vlaneseq
          %v3546 = vshrl.u32 %v3545, 7
          %v3547 = vsub.s32 %v3544, %v3546
          %v3548 = vrot.slane %v3526, %v3547
          %v3550 = vunpack.c.l.s4 1966171168
          %v3551 = vunpack.c.0.s8 %v3550
          %v3552 = vlaneseq
          %v3553 = vshrl.u32 %v3552, 7
          %v3554 = vsub.s32 %v3551, %v3553
          %v3555 = vrot.slane %v3527, %v3554
          %v3556 = vcombine.low %v3534, %v3541
          %v3557 = vcombine.low %v3548, %v3555
          %v3559 = vunpack.c.l.s4 1966171168
          %v3560 = vunpack.c.0.s8 %v3559
          %v3561 = vlaneseq
          %v3562 = vshrl.u32 %v3561, 7
          %v3563 = vsub.s32 %v3560, %v3562
          %v3564 = vrot.slane %v3556, %v3563
          %v3566 = vunpack.c.l.s4 1966171168
          %v3567 = vunpack.c.0.s8 %v3566
          %v3568 = vlaneseq
          %v3569 = vshrl.u32 %v3568, 7
          %v3570 = vsub.s32 %v3567, %v3569
          %v3571 = vrot.slane %v3557, %v3570
          %v3572 = vcombine.low %v3564, %v3571
          %v3574 = vmax.f32 %v3347, %v3572
          %3575 = vst [vmem:[%s3346] ss:$2 sm:$0xff] %v3574
        $region80: #{tpu_custom_call.1} parent=59 // pred_fallthru
          _
        %p3576 = pnand %p1418, %p389
        %p3577 = pneg %p3576
        // Predicated region
        $region85: #{tpu_custom_call.1} parent=59 // pred_check
          _
        $region86: #{tpu_custom_call.1} parent=59 // pred_check_branch
          %3579 = sbr.rel (%p3576) target = $region88
        $region87: #{tpu_custom_call.1} parent=59 // pred_region
          %v3580 = vld [vmem:[%s7] sm:$0xff]
          %v3581 = vld [vmem:[%s7 + $0x8] sm:$0xff]
          %v3582 = vld [vmem:[%s7 + $0x10] sm:$0xff]
          %v3583 = vld [vmem:[%s7 + $0x18] sm:$0xff]
          %v3584 = vld [vmem:[%s7 + $0x20] sm:$0xff]
          %v3585 = vld [vmem:[%s7 + $0x28] sm:$0xff]
          %v3586 = vld [vmem:[%s7 + $0x30] sm:$0xff]
          %v3587 = vld [vmem:[%s7 + $0x38] sm:$0xff]
          %v3588 = vld [vmem:[%s7 + $0x40] sm:$0xff]
          %v3589 = vld [vmem:[%s7 + $0x48] sm:$0xff]
          %v3590 = vld [vmem:[%s7 + $0x50] sm:$0xff]
          %v3591 = vld [vmem:[%s7 + $0x58] sm:$0xff]
          %v3592 = vld [vmem:[%s7 + $0x60] sm:$0xff]
          %v3593 = vld [vmem:[%s7 + $0x68] sm:$0xff]
          %v3594 = vld [vmem:[%s7 + $0x70] sm:$0xff]
          %v3595 = vld [vmem:[%s7 + $0x78] sm:$0xff]
          %v3596 = vld [vmem:[%s7 + $0x80] sm:$0xff]
          %v3597 = vld [vmem:[%s7 + $0x88] sm:$0xff]
          %v3598 = vld [vmem:[%s7 + $0x90] sm:$0xff]
          %v3599 = vld [vmem:[%s7 + $0x98] sm:$0xff]
          %v3600 = vld [vmem:[%s7 + $0xa0] sm:$0xff]
          %v3601 = vld [vmem:[%s7 + $0xa8] sm:$0xff]
          %v3602 = vld [vmem:[%s7 + $0xb0] sm:$0xff]
          %v3603 = vld [vmem:[%s7 + $0xb8] sm:$0xff]
          %v3604 = vld [vmem:[%s7 + $0xc0] sm:$0xff]
          %v3605 = vld [vmem:[%s7 + $0xc8] sm:$0xff]
          %v3606 = vld [vmem:[%s7 + $0xd0] sm:$0xff]
          %v3607 = vld [vmem:[%s7 + $0xd8] sm:$0xff]
          %v3608 = vld [vmem:[%s7 + $0xe0] sm:$0xff]
          %v3609 = vld [vmem:[%s7 + $0xe8] sm:$0xff]
          %v3610 = vld [vmem:[%s7 + $0xf0] sm:$0xff]
          %v3611 = vld [vmem:[%s7 + $0xf8] sm:$0xff]
          %v3612 = vld [vmem:[%s7 + $0x100] sm:$0xff]
          %v3613 = vld [vmem:[%s7 + $0x108] sm:$0xff]
          %v3614 = vld [vmem:[%s7 + $0x110] sm:$0xff]
          %v3615 = vld [vmem:[%s7 + $0x118] sm:$0xff]
          %v3616 = vld [vmem:[%s7 + $0x120] sm:$0xff]
          %v3617 = vld [vmem:[%s7 + $0x128] sm:$0xff]
          %v3618 = vld [vmem:[%s7 + $0x130] sm:$0xff]
          %v3619 = vld [vmem:[%s7 + $0x138] sm:$0xff]
          %v3620 = vld [vmem:[%s7 + $0x140] sm:$0xff]
          %v3621 = vld [vmem:[%s7 + $0x148] sm:$0xff]
          %v3622 = vld [vmem:[%s7 + $0x150] sm:$0xff]
          %v3623 = vld [vmem:[%s7 + $0x158] sm:$0xff]
          %v3624 = vld [vmem:[%s7 + $0x160] sm:$0xff]
          %v3625 = vld [vmem:[%s7 + $0x168] sm:$0xff]
          %v3626 = vld [vmem:[%s7 + $0x170] sm:$0xff]
          %v3627 = vld [vmem:[%s7 + $0x178] sm:$0xff]
          %v3628 = vld [vmem:[%s7 + $0x180] sm:$0xff]
          %v3629 = vld [vmem:[%s7 + $0x188] sm:$0xff]
          %v3630 = vld [vmem:[%s7 + $0x190] sm:$0xff]
          %v3631 = vld [vmem:[%s7 + $0x198] sm:$0xff]
          %v3632 = vld [vmem:[%s7 + $0x1a0] sm:$0xff]
          %v3633 = vld [vmem:[%s7 + $0x1a8] sm:$0xff]
          %v3634 = vld [vmem:[%s7 + $0x1b0] sm:$0xff]
          %v3635 = vld [vmem:[%s7 + $0x1b8] sm:$0xff]
          %v3636 = vld [vmem:[%s7 + $0x1c0] sm:$0xff]
          %v3637 = vld [vmem:[%s7 + $0x1c8] sm:$0xff]
          %v3638 = vld [vmem:[%s7 + $0x1d0] sm:$0xff]
          %v3639 = vld [vmem:[%s7 + $0x1d8] sm:$0xff]
          %v3640 = vld [vmem:[%s7 + $0x1e0] sm:$0xff]
          %v3641 = vld [vmem:[%s7 + $0x1e8] sm:$0xff]
          %v3642 = vld [vmem:[%s7 + $0x1f0] sm:$0xff]
          %v3643 = vld [vmem:[%s7 + $0x1f8] sm:$0xff]
          %v3644 = vunpack.c.l.bf16 %v3580
          %v3645 = vunpack.c.h.bf16 %v3580
          %v3646 = vunpack.c.l.bf16 %v3581
          %v3647 = vunpack.c.h.bf16 %v3581
          %v3648 = vunpack.c.l.bf16 %v3582
          %v3649 = vunpack.c.h.bf16 %v3582
          %v3650 = vunpack.c.l.bf16 %v3583
          %v3651 = vunpack.c.h.bf16 %v3583
          %v3652 = vunpack.c.l.bf16 %v3584
          %v3653 = vunpack.c.h.bf16 %v3584
          %v3654 = vunpack.c.l.bf16 %v3585
          %v3655 = vunpack.c.h.bf16 %v3585
          %v3656 = vunpack.c.l.bf16 %v3586
          %v3657 = vunpack.c.h.bf16 %v3586
          %v3658 = vunpack.c.l.bf16 %v3587
          %v3659 = vunpack.c.h.bf16 %v3587
          %v3660 = vunpack.c.l.bf16 %v3588
          %v3661 = vunpack.c.h.bf16 %v3588
          %v3662 = vunpack.c.l.bf16 %v3589
          %v3663 = vunpack.c.h.bf16 %v3589
          %v3664 = vunpack.c.l.bf16 %v3590
          %v3665 = vunpack.c.h.bf16 %v3590
          %v3666 = vunpack.c.l.bf16 %v3591
          %v3667 = vunpack.c.h.bf16 %v3591
          %v3668 = vunpack.c.l.bf16 %v3592
          %v3669 = vunpack.c.h.bf16 %v3592
          %v3670 = vunpack.c.l.bf16 %v3593
          %v3671 = vunpack.c.h.bf16 %v3593
          %v3672 = vunpack.c.l.bf16 %v3594
          %v3673 = vunpack.c.h.bf16 %v3594
          %v3674 = vunpack.c.l.bf16 %v3595
          %v3675 = vunpack.c.h.bf16 %v3595
          %v3676 = vunpack.c.l.bf16 %v3596
          %v3677 = vunpack.c.h.bf16 %v3596
          %v3678 = vunpack.c.l.bf16 %v3597
          %v3679 = vunpack.c.h.bf16 %v3597
          %v3680 = vunpack.c.l.bf16 %v3598
          %v3681 = vunpack.c.h.bf16 %v3598
          %v3682 = vunpack.c.l.bf16 %v3599
          %v3683 = vunpack.c.h.bf16 %v3599
          %v3684 = vunpack.c.l.bf16 %v3600
          %v3685 = vunpack.c.h.bf16 %v3600
          %v3686 = vunpack.c.l.bf16 %v3601
          %v3687 = vunpack.c.h.bf16 %v3601
          %v3688 = vunpack.c.l.bf16 %v3602
          %v3689 = vunpack.c.h.bf16 %v3602
          %v3690 = vunpack.c.l.bf16 %v3603
          %v3691 = vunpack.c.h.bf16 %v3603
          %v3692 = vunpack.c.l.bf16 %v3604
          %v3693 = vunpack.c.h.bf16 %v3604
          %v3694 = vunpack.c.l.bf16 %v3605
          %v3695 = vunpack.c.h.bf16 %v3605
          %v3696 = vunpack.c.l.bf16 %v3606
          %v3697 = vunpack.c.h.bf16 %v3606
          %v3698 = vunpack.c.l.bf16 %v3607
          %v3699 = vunpack.c.h.bf16 %v3607
          %v3700 = vunpack.c.l.bf16 %v3608
          %v3701 = vunpack.c.h.bf16 %v3608
          %v3702 = vunpack.c.l.bf16 %v3609
          %v3703 = vunpack.c.h.bf16 %v3609
          %v3704 = vunpack.c.l.bf16 %v3610
          %v3705 = vunpack.c.h.bf16 %v3610
          %v3706 = vunpack.c.l.bf16 %v3611
          %v3707 = vunpack.c.h.bf16 %v3611
          %v3708 = vunpack.c.l.bf16 %v3612
          %v3709 = vunpack.c.h.bf16 %v3612
          %v3710 = vunpack.c.l.bf16 %v3613
          %v3711 = vunpack.c.h.bf16 %v3613
          %v3712 = vunpack.c.l.bf16 %v3614
          %v3713 = vunpack.c.h.bf16 %v3614
          %v3714 = vunpack.c.l.bf16 %v3615
          %v3715 = vunpack.c.h.bf16 %v3615
          %v3716 = vunpack.c.l.bf16 %v3616
          %v3717 = vunpack.c.h.bf16 %v3616
          %v3718 = vunpack.c.l.bf16 %v3617
          %v3719 = vunpack.c.h.bf16 %v3617
          %v3720 = vunpack.c.l.bf16 %v3618
          %v3721 = vunpack.c.h.bf16 %v3618
          %v3722 = vunpack.c.l.bf16 %v3619
          %v3723 = vunpack.c.h.bf16 %v3619
          %v3724 = vunpack.c.l.bf16 %v3620
          %v3725 = vunpack.c.h.bf16 %v3620
          %v3726 = vunpack.c.l.bf16 %v3621
          %v3727 = vunpack.c.h.bf16 %v3621
          %v3728 = vunpack.c.l.bf16 %v3622
          %v3729 = vunpack.c.h.bf16 %v3622
          %v3730 = vunpack.c.l.bf16 %v3623
          %v3731 = vunpack.c.h.bf16 %v3623
          %v3732 = vunpack.c.l.bf16 %v3624
          %v3733 = vunpack.c.h.bf16 %v3624
          %v3734 = vunpack.c.l.bf16 %v3625
          %v3735 = vunpack.c.h.bf16 %v3625
          %v3736 = vunpack.c.l.bf16 %v3626
          %v3737 = vunpack.c.h.bf16 %v3626
          %v3738 = vunpack.c.l.bf16 %v3627
          %v3739 = vunpack.c.h.bf16 %v3627
          %v3740 = vunpack.c.l.bf16 %v3628
          %v3741 = vunpack.c.h.bf16 %v3628
          %v3742 = vunpack.c.l.bf16 %v3629
          %v3743 = vunpack.c.h.bf16 %v3629
          %v3744 = vunpack.c.l.bf16 %v3630
          %v3745 = vunpack.c.h.bf16 %v3630
          %v3746 = vunpack.c.l.bf16 %v3631
          %v3747 = vunpack.c.h.bf16 %v3631
          %v3748 = vunpack.c.l.bf16 %v3632
          %v3749 = vunpack.c.h.bf16 %v3632
          %v3750 = vunpack.c.l.bf16 %v3633
          %v3751 = vunpack.c.h.bf16 %v3633
          %v3752 = vunpack.c.l.bf16 %v3634
          %v3753 = vunpack.c.h.bf16 %v3634
          %v3754 = vunpack.c.l.bf16 %v3635
          %v3755 = vunpack.c.h.bf16 %v3635
          %v3756 = vunpack.c.l.bf16 %v3636
          %v3757 = vunpack.c.h.bf16 %v3636
          %v3758 = vunpack.c.l.bf16 %v3637
          %v3759 = vunpack.c.h.bf16 %v3637
          %v3760 = vunpack.c.l.bf16 %v3638
          %v3761 = vunpack.c.h.bf16 %v3638
          %v3762 = vunpack.c.l.bf16 %v3639
          %v3763 = vunpack.c.h.bf16 %v3639
          %v3764 = vunpack.c.l.bf16 %v3640
          %v3765 = vunpack.c.h.bf16 %v3640
          %v3766 = vunpack.c.l.bf16 %v3641
          %v3767 = vunpack.c.h.bf16 %v3641
          %v3768 = vunpack.c.l.bf16 %v3642
          %v3769 = vunpack.c.h.bf16 %v3642
          %v3770 = vunpack.c.l.bf16 %v3643
          %v3771 = vunpack.c.h.bf16 %v3643
          %v3772 = vld [vmem:[#allocation6] sm:$0x1]
          %v3773 = vmul.f32 %v3772, 0.0009765625
          %v3775 = vlaneseq
          %v3776 = vshrl.u32 %v3775, 7
          %v3777 = vsub.s32 0, %v3776
          %v3778 = vrot.slane %v3773, %v3777
          %3780 = vmatprep.subr.mxu0 %v3765
          %3781 = vmatpush1.msra.mxu0 %v3764
          %3782 = vmatprep.subr.mxu0 %v3757
          %3783 = vmatpush1.msra.mxu0 %v3756
          %3784 = vmatprep.subr.mxu0 %v3749
          %3785 = vmatpush1.msra.mxu0 %v3748
          %3786 = vmatprep.subr.mxu0 %v3741
          %3787 = vmatpush1.msra.mxu0 %v3740
          %3788 = vmatprep.subr.mxu0 %v3733
          %3789 = vmatpush1.msra.mxu0 %v3732
          %3790 = vmatprep.subr.mxu0 %v3725
          %3791 = vmatpush1.msra.mxu0 %v3724
          %3792 = vmatprep.subr.mxu0 %v3717
          %3793 = vmatpush1.msra.mxu0 %v3716
          %3794 = vmatprep.subr.mxu0 %v3709
          %3795 = vmatpush1.msra.mxu0 %v3708
          %3796 = vmatprep.subr.mxu0 %v3701
          %3797 = vmatpush1.msra.mxu0 %v3700
          %3798 = vmatprep.subr.mxu0 %v3693
          %3799 = vmatpush1.msra.mxu0 %v3692
          %3800 = vmatprep.subr.mxu0 %v3685
          %3801 = vmatpush1.msra.mxu0 %v3684
          %3802 = vmatprep.subr.mxu0 %v3677
          %3803 = vmatpush1.msra.mxu0 %v3676
          %3804 = vmatprep.subr.mxu0 %v3669
          %3805 = vmatpush1.msra.mxu0 %v3668
          %3806 = vmatprep.subr.mxu0 %v3661
          %3807 = vmatpush1.msra.mxu0 %v3660
          %3808 = vmatprep.subr.mxu0 %v3653
          %3809 = vmatpush1.msra.mxu0 %v3652
          %3810 = vmatprep.subr.mxu0 %v3645
          %3811 = vmatpush1.msra.mxu0 %v3644
          %3812 = vmatprep.subr.mxu0 0.0
          %3813 = vmatpush2.msra.mxu0 0.0
          %3814 = vmatprep.subr.mxu0 0.0
          %3815 = vmatpush2.msra.mxu0 0.0
          %3816 = vmatprep.subr.mxu0 0.0
          %3817 = vmatpush2.msra.mxu0 0.0
          %3818 = vmatprep.subr.mxu0 0.0
          %3819 = vmatpush2.msra.mxu0 0.0
          %3820 = vmatprep.subr.mxu0 0.0
          %3821 = vmatpush2.msra.mxu0 0.0
          %3822 = vmatprep.subr.mxu0 0.0
          %3823 = vmatpush2.msra.mxu0 0.0
          %3824 = vmatprep.subr.mxu0 0.0
          %3825 = vmatpush2.msra.mxu0 0.0
          %3826 = vmatprep.subr.mxu0 0.0
          %3827 = vmatpush2.msra.mxu0 0.0
          %3828 = vmatprep.subr.mxu0 0.0
          %3829 = vmatpush2.msra.mxu0 0.0
          %3830 = vmatprep.subr.mxu0 0.0
          %3831 = vmatpush2.msra.mxu0 0.0
          %3832 = vmatprep.subr.mxu0 0.0
          %3833 = vmatpush2.msra.mxu0 0.0
          %3834 = vmatprep.subr.mxu0 0.0
          %3835 = vmatpush2.msra.mxu0 0.0
          %3836 = vmatprep.subr.mxu0 0.0
          %3837 = vmatpush2.msra.mxu0 0.0
          %3838 = vmatprep.subr.mxu0 0.0
          %3839 = vmatpush2.msra.mxu0 0.0
          %3840 = vmatprep.subr.mxu0 0.0
          %3841 = vmatpush2.msra.mxu0 0.0
          %3842 = vmatprep.subr.mxu0 0.0
          %3843 = vmatpush2.msra.mxu0 0.0
          %3844 = vmatprep.mubr.f32.mxu0 0.0
          %3845 = vmatmul.mubr.f32.gmra.mxu0 %v3778
          %v3846 = vpop.f32.mrf.mxu0
          %v3847 = vadd.f32 0.0, %v3846
          %v3848 = vpop.f32.mrf.mxu0
          %v3849 = vadd.f32 0.0, %v3848
          %3850 = vdwg.mxu0
          %3851 = vmatprep.subr.mxu0 %v3767
          %3852 = vmatpush1.msra.mxu0 %v3766
          %3853 = vmatprep.subr.mxu0 %v3759
          %3854 = vmatpush1.msra.mxu0 %v3758
          %3855 = vmatprep.subr.mxu0 %v3751
          %3856 = vmatpush1.msra.mxu0 %v3750
          %3857 = vmatprep.subr.mxu0 %v3743
          %3858 = vmatpush1.msra.mxu0 %v3742
          %3859 = vmatprep.subr.mxu0 %v3735
          %3860 = vmatpush1.msra.mxu0 %v3734
          %3861 = vmatprep.subr.mxu0 %v3727
          %3862 = vmatpush1.msra.mxu0 %v3726
          %3863 = vmatprep.subr.mxu0 %v3719
          %3864 = vmatpush1.msra.mxu0 %v3718
          %3865 = vmatprep.subr.mxu0 %v3711
          %3866 = vmatpush1.msra.mxu0 %v3710
          %3867 = vmatprep.subr.mxu0 %v3703
          %3868 = vmatpush1.msra.mxu0 %v3702
          %3869 = vmatprep.subr.mxu0 %v3695
          %3870 = vmatpush1.msra.mxu0 %v3694
          %3871 = vmatprep.subr.mxu0 %v3687
          %3872 = vmatpush1.msra.mxu0 %v3686
          %3873 = vmatprep.subr.mxu0 %v3679
          %3874 = vmatpush1.msra.mxu0 %v3678
          %3875 = vmatprep.subr.mxu0 %v3671
          %3876 = vmatpush1.msra.mxu0 %v3670
          %3877 = vmatprep.subr.mxu0 %v3663
          %3878 = vmatpush1.msra.mxu0 %v3662
          %3879 = vmatprep.subr.mxu0 %v3655
          %3880 = vmatpush1.msra.mxu0 %v3654
          %3881 = vmatprep.subr.mxu0 %v3647
          %3882 = vmatpush1.msra.mxu0 %v3646
          %3883 = vmatprep.subr.mxu0 0.0
          %3884 = vmatpush2.msra.mxu0 0.0
          %3885 = vmatprep.subr.mxu0 0.0
          %3886 = vmatpush2.msra.mxu0 0.0
          %3887 = vmatprep.subr.mxu0 0.0
          %3888 = vmatpush2.msra.mxu0 0.0
          %3889 = vmatprep.subr.mxu0 0.0
          %3890 = vmatpush2.msra.mxu0 0.0
          %3891 = vmatprep.subr.mxu0 0.0
          %3892 = vmatpush2.msra.mxu0 0.0
          %3893 = vmatprep.subr.mxu0 0.0
          %3894 = vmatpush2.msra.mxu0 0.0
          %3895 = vmatprep.subr.mxu0 0.0
          %3896 = vmatpush2.msra.mxu0 0.0
          %3897 = vmatprep.subr.mxu0 0.0
          %3898 = vmatpush2.msra.mxu0 0.0
          %3899 = vmatprep.subr.mxu0 0.0
          %3900 = vmatpush2.msra.mxu0 0.0
          %3901 = vmatprep.subr.mxu0 0.0
          %3902 = vmatpush2.msra.mxu0 0.0
          %3903 = vmatprep.subr.mxu0 0.0
          %3904 = vmatpush2.msra.mxu0 0.0
          %3905 = vmatprep.subr.mxu0 0.0
          %3906 = vmatpush2.msra.mxu0 0.0
          %3907 = vmatprep.subr.mxu0 0.0
          %3908 = vmatpush2.msra.mxu0 0.0
          %3909 = vmatprep.subr.mxu0 0.0
          %3910 = vmatpush2.msra.mxu0 0.0
          %3911 = vmatprep.subr.mxu0 0.0
          %3912 = vmatpush2.msra.mxu0 0.0
          %3913 = vmatprep.subr.mxu0 0.0
          %3914 = vmatpush2.msra.mxu0 0.0
          %3915 = vmatprep.mubr.f32.mxu0 0.0
          %3916 = vmatmul.mubr.f32.gmra.mxu0 %v3778
          %v3917 = vpop.f32.mrf.mxu0
          %v3918 = vadd.f32 0.0, %v3917
          %v3919 = vpop.f32.mrf.mxu0
          %v3920 = vadd.f32 0.0, %v3919
          %3921 = vdwg.mxu0
          %3922 = vmatprep.subr.mxu0 %v3769
          %3923 = vmatpush1.msra.mxu0 %v3768
          %3924 = vmatprep.subr.mxu0 %v3761
          %3925 = vmatpush1.msra.mxu0 %v3760
          %3926 = vmatprep.subr.mxu0 %v3753
          %3927 = vmatpush1.msra.mxu0 %v3752
          %3928 = vmatprep.subr.mxu0 %v3745
          %3929 = vmatpush1.msra.mxu0 %v3744
          %3930 = vmatprep.subr.mxu0 %v3737
          %3931 = vmatpush1.msra.mxu0 %v3736
          %3932 = vmatprep.subr.mxu0 %v3729
          %3933 = vmatpush1.msra.mxu0 %v3728
          %3934 = vmatprep.subr.mxu0 %v3721
          %3935 = vmatpush1.msra.mxu0 %v3720
          %3936 = vmatprep.subr.mxu0 %v3713
          %3937 = vmatpush1.msra.mxu0 %v3712
          %3938 = vmatprep.subr.mxu0 %v3705
          %3939 = vmatpush1.msra.mxu0 %v3704
          %3940 = vmatprep.subr.mxu0 %v3697
          %3941 = vmatpush1.msra.mxu0 %v3696
          %3942 = vmatprep.subr.mxu0 %v3689
          %3943 = vmatpush1.msra.mxu0 %v3688
          %3944 = vmatprep.subr.mxu0 %v3681
          %3945 = vmatpush1.msra.mxu0 %v3680
          %3946 = vmatprep.subr.mxu0 %v3673
          %3947 = vmatpush1.msra.mxu0 %v3672
          %3948 = vmatprep.subr.mxu0 %v3665
          %3949 = vmatpush1.msra.mxu0 %v3664
          %3950 = vmatprep.subr.mxu0 %v3657
          %3951 = vmatpush1.msra.mxu0 %v3656
          %3952 = vmatprep.subr.mxu0 %v3649
          %3953 = vmatpush1.msra.mxu0 %v3648
          %3954 = vmatprep.subr.mxu0 0.0
          %3955 = vmatpush2.msra.mxu0 0.0
          %3956 = vmatprep.subr.mxu0 0.0
          %3957 = vmatpush2.msra.mxu0 0.0
          %3958 = vmatprep.subr.mxu0 0.0
          %3959 = vmatpush2.msra.mxu0 0.0
          %3960 = vmatprep.subr.mxu0 0.0
          %3961 = vmatpush2.msra.mxu0 0.0
          %3962 = vmatprep.subr.mxu0 0.0
          %3963 = vmatpush2.msra.mxu0 0.0
          %3964 = vmatprep.subr.mxu0 0.0
          %3965 = vmatpush2.msra.mxu0 0.0
          %3966 = vmatprep.subr.mxu0 0.0
          %3967 = vmatpush2.msra.mxu0 0.0
          %3968 = vmatprep.subr.mxu0 0.0
          %3969 = vmatpush2.msra.mxu0 0.0
          %3970 = vmatprep.subr.mxu0 0.0
          %3971 = vmatpush2.msra.mxu0 0.0
          %3972 = vmatprep.subr.mxu0 0.0
          %3973 = vmatpush2.msra.mxu0 0.0
          %3974 = vmatprep.subr.mxu0 0.0
          %3975 = vmatpush2.msra.mxu0 0.0
          %3976 = vmatprep.subr.mxu0 0.0
          %3977 = vmatpush2.msra.mxu0 0.0
          %3978 = vmatprep.subr.mxu0 0.0
          %3979 = vmatpush2.msra.mxu0 0.0
          %3980 = vmatprep.subr.mxu0 0.0
          %3981 = vmatpush2.msra.mxu0 0.0
          %3982 = vmatprep.subr.mxu0 0.0
          %3983 = vmatpush2.msra.mxu0 0.0
          %3984 = vmatprep.subr.mxu0 0.0
          %3985 = vmatpush2.msra.mxu0 0.0
          %3986 = vmatprep.mubr.f32.mxu0 0.0
          %3987 = vmatmul.mubr.f32.gmra.mxu0 %v3778
          %v3988 = vpop.f32.mrf.mxu0
          %v3989 = vadd.f32 0.0, %v3988
          %v3990 = vpop.f32.mrf.mxu0
          %v3991 = vadd.f32 0.0, %v3990
          %3992 = vdwg.mxu0
          %3993 = vmatprep.subr.mxu0 %v3771
          %3994 = vmatpush1.msra.mxu0 %v3770
          %3995 = vmatprep.subr.mxu0 %v3763
          %3996 = vmatpush1.msra.mxu0 %v3762
          %3997 = vmatprep.subr.mxu0 %v3755
          %3998 = vmatpush1.msra.mxu0 %v3754
          %3999 = vmatprep.subr.mxu0 %v3747
          %4000 = vmatpush1.msra.mxu0 %v3746
          %4001 = vmatprep.subr.mxu0 %v3739
          %4002 = vmatpush1.msra.mxu0 %v3738
          %4003 = vmatprep.subr.mxu0 %v3731
          %4004 = vmatpush1.msra.mxu0 %v3730
          %4005 = vmatprep.subr.mxu0 %v3723
          %4006 = vmatpush1.msra.mxu0 %v3722
          %4007 = vmatprep.subr.mxu0 %v3715
          %4008 = vmatpush1.msra.mxu0 %v3714
          %4009 = vmatprep.subr.mxu0 %v3707
          %4010 = vmatpush1.msra.mxu0 %v3706
          %4011 = vmatprep.subr.mxu0 %v3699
          %4012 = vmatpush1.msra.mxu0 %v3698
          %4013 = vmatprep.subr.mxu0 %v3691
          %4014 = vmatpush1.msra.mxu0 %v3690
          %4015 = vmatprep.subr.mxu0 %v3683
          %4016 = vmatpush1.msra.mxu0 %v3682
          %4017 = vmatprep.subr.mxu0 %v3675
          %4018 = vmatpush1.msra.mxu0 %v3674
          %4019 = vmatprep.subr.mxu0 %v3667
          %4020 = vmatpush1.msra.mxu0 %v3666
          %4021 = vmatprep.subr.mxu0 %v3659
          %4022 = vmatpush1.msra.mxu0 %v3658
          %4023 = vmatprep.subr.mxu0 %v3651
          %4024 = vmatpush1.msra.mxu0 %v3650
          %4025 = vmatprep.subr.mxu0 0.0
          %4026 = vmatpush2.msra.mxu0 0.0
          %4027 = vmatprep.subr.mxu0 0.0
          %4028 = vmatpush2.msra.mxu0 0.0
          %4029 = vmatprep.subr.mxu0 0.0
          %4030 = vmatpush2.msra.mxu0 0.0
          %4031 = vmatprep.subr.mxu0 0.0
          %4032 = vmatpush2.msra.mxu0 0.0
          %4033 = vmatprep.subr.mxu0 0.0
          %4034 = vmatpush2.msra.mxu0 0.0
          %4035 = vmatprep.subr.mxu0 0.0
          %4036 = vmatpush2.msra.mxu0 0.0
          %4037 = vmatprep.subr.mxu0 0.0
          %4038 = vmatpush2.msra.mxu0 0.0
          %4039 = vmatprep.subr.mxu0 0.0
          %4040 = vmatpush2.msra.mxu0 0.0
          %4041 = vmatprep.subr.mxu0 0.0
          %4042 = vmatpush2.msra.mxu0 0.0
          %4043 = vmatprep.subr.mxu0 0.0
          %4044 = vmatpush2.msra.mxu0 0.0
          %4045 = vmatprep.subr.mxu0 0.0
          %4046 = vmatpush2.msra.mxu0 0.0
          %4047 = vmatprep.subr.mxu0 0.0
          %4048 = vmatpush2.msra.mxu0 0.0
          %4049 = vmatprep.subr.mxu0 0.0
          %4050 = vmatpush2.msra.mxu0 0.0
          %4051 = vmatprep.subr.mxu0 0.0
          %4052 = vmatpush2.msra.mxu0 0.0
          %4053 = vmatprep.subr.mxu0 0.0
          %4054 = vmatpush2.msra.mxu0 0.0
          %4055 = vmatprep.subr.mxu0 0.0
          %4056 = vmatpush2.msra.mxu0 0.0
          %4057 = vmatprep.mubr.f32.mxu0 0.0
          %4058 = vmatmul.mubr.f32.gmra.mxu0 %v3778
          %v4059 = vpop.f32.mrf.mxu0
          %v4060 = vadd.f32 0.0, %v4059
          %v4061 = vpop.f32.mrf.mxu0
          %v4062 = vadd.f32 0.0, %v4061
          %4063 = vdwg.mxu0
          %v4064 = vld [vmem:[#allocation7] sm:$0xff]
          %v4065 = vld [vmem:[#allocation7 + $0x8] sm:$0xff]
          %v4066 = vld [vmem:[#allocation7 + $0x10] sm:$0xff]
          %v4067 = vld [vmem:[#allocation7 + $0x18] sm:$0xff]
          %v4068 = vld [vmem:[#allocation7 + $0x20] sm:$0xff]
          %v4069 = vld [vmem:[#allocation7 + $0x28] sm:$0xff]
          %v4070 = vld [vmem:[#allocation7 + $0x30] sm:$0xff]
          %v4071 = vld [vmem:[#allocation7 + $0x38] sm:$0xff]
          %v4072 = vld [vmem:[#allocation7 + $0x40] sm:$0xff]
          %v4073 = vld [vmem:[#allocation7 + $0x48] sm:$0xff]
          %v4074 = vld [vmem:[#allocation7 + $0x50] sm:$0xff]
          %v4075 = vld [vmem:[#allocation7 + $0x58] sm:$0xff]
          %v4076 = vld [vmem:[#allocation7 + $0x60] sm:$0xff]
          %v4077 = vld [vmem:[#allocation7 + $0x68] sm:$0xff]
          %v4078 = vld [vmem:[#allocation7 + $0x70] sm:$0xff]
          %v4079 = vld [vmem:[#allocation7 + $0x78] sm:$0xff]
          %4080 = vmatprep.subr.mxu0 %v3765
          %4081 = vmatpush1.msra.mxu0 %v3764
          %4082 = vmatprep.subr.mxu0 %v3757
          %4083 = vmatpush1.msra.mxu0 %v3756
          %4084 = vmatprep.subr.mxu0 %v3749
          %4085 = vmatpush1.msra.mxu0 %v3748
          %4086 = vmatprep.subr.mxu0 %v3741
          %4087 = vmatpush1.msra.mxu0 %v3740
          %4088 = vmatprep.subr.mxu0 %v3733
          %4089 = vmatpush1.msra.mxu0 %v3732
          %4090 = vmatprep.subr.mxu0 %v3725
          %4091 = vmatpush1.msra.mxu0 %v3724
          %4092 = vmatprep.subr.mxu0 %v3717
          %4093 = vmatpush1.msra.mxu0 %v3716
          %4094 = vmatprep.subr.mxu0 %v3709
          %4095 = vmatpush1.msra.mxu0 %v3708
          %4096 = vmatprep.subr.mxu0 %v3701
          %4097 = vmatpush1.msra.mxu0 %v3700
          %4098 = vmatprep.subr.mxu0 %v3693
          %4099 = vmatpush1.msra.mxu0 %v3692
          %4100 = vmatprep.subr.mxu0 %v3685
          %4101 = vmatpush1.msra.mxu0 %v3684
          %4102 = vmatprep.subr.mxu0 %v3677
          %4103 = vmatpush1.msra.mxu0 %v3676
          %4104 = vmatprep.subr.mxu0 %v3669
          %4105 = vmatpush1.msra.mxu0 %v3668
          %4106 = vmatprep.subr.mxu0 %v3661
          %4107 = vmatpush1.msra.mxu0 %v3660
          %4108 = vmatprep.subr.mxu0 %v3653
          %4109 = vmatpush1.msra.mxu0 %v3652
          %4110 = vmatprep.subr.mxu0 %v3645
          %4111 = vmatpush1.msra.mxu0 %v3644
          %4112 = vmatprep.subr.mxu0 0.0
          %4113 = vmatpush2.msra.mxu0 0.0
          %4114 = vmatprep.subr.mxu0 0.0
          %4115 = vmatpush2.msra.mxu0 0.0
          %4116 = vmatprep.subr.mxu0 0.0
          %4117 = vmatpush2.msra.mxu0 0.0
          %4118 = vmatprep.subr.mxu0 0.0
          %4119 = vmatpush2.msra.mxu0 0.0
          %4120 = vmatprep.subr.mxu0 0.0
          %4121 = vmatpush2.msra.mxu0 0.0
          %4122 = vmatprep.subr.mxu0 0.0
          %4123 = vmatpush2.msra.mxu0 0.0
          %4124 = vmatprep.subr.mxu0 0.0
          %4125 = vmatpush2.msra.mxu0 0.0
          %4126 = vmatprep.subr.mxu0 0.0
          %4127 = vmatpush2.msra.mxu0 0.0
          %4128 = vmatprep.subr.mxu0 0.0
          %4129 = vmatpush2.msra.mxu0 0.0
          %4130 = vmatprep.subr.mxu0 0.0
          %4131 = vmatpush2.msra.mxu0 0.0
          %4132 = vmatprep.subr.mxu0 0.0
          %4133 = vmatpush2.msra.mxu0 0.0
          %4134 = vmatprep.subr.mxu0 0.0
          %4135 = vmatpush2.msra.mxu0 0.0
          %4136 = vmatprep.subr.mxu0 0.0
          %4137 = vmatpush2.msra.mxu0 0.0
          %4138 = vmatprep.subr.mxu0 0.0
          %4139 = vmatpush2.msra.mxu0 0.0
          %4140 = vmatprep.subr.mxu0 0.0
          %4141 = vmatpush2.msra.mxu0 0.0
          %4142 = vmatprep.subr.mxu0 0.0
          %4143 = vmatpush2.msra.mxu0 0.0
          %4144 = vmatprep.mubr.f32.mxu0 0.0
          %4145 = vmatmul.mubr.f32.gmra.mxu0 %v4064
          %v4146 = vpop.f32.mrf.mxu0
          %v4147 = vadd.f32 0.0, %v4146
          %v4148 = vpop.f32.mrf.mxu0
          %v4149 = vadd.f32 0.0, %v4148
          %4150 = vmatprep.mubr.f32.mxu0 0.0
          %4151 = vmatmul.mubr.f32.gmra.mxu0 %v4065
          %v4152 = vpop.f32.mrf.mxu0
          %v4153 = vadd.f32 0.0, %v4152
          %v4154 = vpop.f32.mrf.mxu0
          %v4155 = vadd.f32 0.0, %v4154
          %4156 = vmatprep.mubr.f32.mxu0 0.0
          %4157 = vmatmul.mubr.f32.gmra.mxu0 %v4066
          %v4158 = vpop.f32.mrf.mxu0
          %v4159 = vadd.f32 0.0, %v4158
          %v4160 = vpop.f32.mrf.mxu0
          %v4161 = vadd.f32 0.0, %v4160
          %4162 = vmatprep.mubr.f32.mxu0 0.0
          %4163 = vmatmul.mubr.f32.gmra.mxu0 %v4067
          %v4164 = vpop.f32.mrf.mxu0
          %v4165 = vadd.f32 0.0, %v4164
          %v4166 = vpop.f32.mrf.mxu0
          %v4167 = vadd.f32 0.0, %v4166
          %4168 = vmatprep.mubr.f32.mxu0 0.0
          %4169 = vmatmul.mubr.f32.gmra.mxu0 %v4068
          %v4170 = vpop.f32.mrf.mxu0
          %v4171 = vadd.f32 0.0, %v4170
          %v4172 = vpop.f32.mrf.mxu0
          %v4173 = vadd.f32 0.0, %v4172
          %4174 = vmatprep.mubr.f32.mxu0 0.0
          %4175 = vmatmul.mubr.f32.gmra.mxu0 %v4069
          %v4176 = vpop.f32.mrf.mxu0
          %v4177 = vadd.f32 0.0, %v4176
          %v4178 = vpop.f32.mrf.mxu0
          %v4179 = vadd.f32 0.0, %v4178
          %4180 = vmatprep.mubr.f32.mxu0 0.0
          %4181 = vmatmul.mubr.f32.gmra.mxu0 %v4070
          %v4182 = vpop.f32.mrf.mxu0
          %v4183 = vadd.f32 0.0, %v4182
          %v4184 = vpop.f32.mrf.mxu0
          %v4185 = vadd.f32 0.0, %v4184
          %4186 = vmatprep.mubr.f32.mxu0 0.0
          %4187 = vmatmul.mubr.f32.gmra.mxu0 %v4071
          %v4188 = vpop.f32.mrf.mxu0
          %v4189 = vadd.f32 0.0, %v4188
          %v4190 = vpop.f32.mrf.mxu0
          %v4191 = vadd.f32 0.0, %v4190
          %4192 = vmatprep.mubr.f32.mxu0 0.0
          %4193 = vmatmul.mubr.f32.gmra.mxu0 %v4072
          %v4194 = vpop.f32.mrf.mxu0
          %v4195 = vadd.f32 0.0, %v4194
          %v4196 = vpop.f32.mrf.mxu0
          %v4197 = vadd.f32 0.0, %v4196
          %4198 = vmatprep.mubr.f32.mxu0 0.0
          %4199 = vmatmul.mubr.f32.gmra.mxu0 %v4073
          %v4200 = vpop.f32.mrf.mxu0
          %v4201 = vadd.f32 0.0, %v4200
          %v4202 = vpop.f32.mrf.mxu0
          %v4203 = vadd.f32 0.0, %v4202
          %4204 = vmatprep.mubr.f32.mxu0 0.0
          %4205 = vmatmul.mubr.f32.gmra.mxu0 %v4074
          %v4206 = vpop.f32.mrf.mxu0
          %v4207 = vadd.f32 0.0, %v4206
          %v4208 = vpop.f32.mrf.mxu0
          %v4209 = vadd.f32 0.0, %v4208
          %4210 = vmatprep.mubr.f32.mxu0 0.0
          %4211 = vmatmul.mubr.f32.gmra.mxu0 %v4075
          %v4212 = vpop.f32.mrf.mxu0
          %v4213 = vadd.f32 0.0, %v4212
          %v4214 = vpop.f32.mrf.mxu0
          %v4215 = vadd.f32 0.0, %v4214
          %4216 = vmatprep.mubr.f32.mxu0 0.0
          %4217 = vmatmul.mubr.f32.gmra.mxu0 %v4076
          %v4218 = vpop.f32.mrf.mxu0
          %v4219 = vadd.f32 0.0, %v4218
          %v4220 = vpop.f32.mrf.mxu0
          %v4221 = vadd.f32 0.0, %v4220
          %4222 = vmatprep.mubr.f32.mxu0 0.0
          %4223 = vmatmul.mubr.f32.gmra.mxu0 %v4077
          %v4224 = vpop.f32.mrf.mxu0
          %v4225 = vadd.f32 0.0, %v4224
          %v4226 = vpop.f32.mrf.mxu0
          %v4227 = vadd.f32 0.0, %v4226
          %4228 = vmatprep.mubr.f32.mxu0 0.0
          %4229 = vmatmul.mubr.f32.gmra.mxu0 %v4078
          %v4230 = vpop.f32.mrf.mxu0
          %v4231 = vadd.f32 0.0, %v4230
          %v4232 = vpop.f32.mrf.mxu0
          %v4233 = vadd.f32 0.0, %v4232
          %4234 = vmatprep.mubr.f32.mxu0 0.0
          %4235 = vmatmul.mubr.f32.gmra.mxu0 %v4079
          %v4236 = vpop.f32.mrf.mxu0
          %v4237 = vadd.f32 0.0, %v4236
          %v4238 = vpop.f32.mrf.mxu0
          %v4239 = vadd.f32 0.0, %v4238
          %4240 = vdwg.mxu0
          %4241 = vmatprep.subr.mxu0 %v3767
          %4242 = vmatpush1.msra.mxu0 %v3766
          %4243 = vmatprep.subr.mxu0 %v3759
          %4244 = vmatpush1.msra.mxu0 %v3758
          %4245 = vmatprep.subr.mxu0 %v3751
          %4246 = vmatpush1.msra.mxu0 %v3750
          %4247 = vmatprep.subr.mxu0 %v3743
          %4248 = vmatpush1.msra.mxu0 %v3742
          %4249 = vmatprep.subr.mxu0 %v3735
          %4250 = vmatpush1.msra.mxu0 %v3734
          %4251 = vmatprep.subr.mxu0 %v3727
          %4252 = vmatpush1.msra.mxu0 %v3726
          %4253 = vmatprep.subr.mxu0 %v3719
          %4254 = vmatpush1.msra.mxu0 %v3718
          %4255 = vmatprep.subr.mxu0 %v3711
          %4256 = vmatpush1.msra.mxu0 %v3710
          %4257 = vmatprep.subr.mxu0 %v3703
          %4258 = vmatpush1.msra.mxu0 %v3702
          %4259 = vmatprep.subr.mxu0 %v3695
          %4260 = vmatpush1.msra.mxu0 %v3694
          %4261 = vmatprep.subr.mxu0 %v3687
          %4262 = vmatpush1.msra.mxu0 %v3686
          %4263 = vmatprep.subr.mxu0 %v3679
          %4264 = vmatpush1.msra.mxu0 %v3678
          %4265 = vmatprep.subr.mxu0 %v3671
          %4266 = vmatpush1.msra.mxu0 %v3670
          %4267 = vmatprep.subr.mxu0 %v3663
          %4268 = vmatpush1.msra.mxu0 %v3662
          %4269 = vmatprep.subr.mxu0 %v3655
          %4270 = vmatpush1.msra.mxu0 %v3654
          %4271 = vmatprep.subr.mxu0 %v3647
          %4272 = vmatpush1.msra.mxu0 %v3646
          %4273 = vmatprep.subr.mxu0 0.0
          %4274 = vmatpush2.msra.mxu0 0.0
          %4275 = vmatprep.subr.mxu0 0.0
          %4276 = vmatpush2.msra.mxu0 0.0
          %4277 = vmatprep.subr.mxu0 0.0
          %4278 = vmatpush2.msra.mxu0 0.0
          %4279 = vmatprep.subr.mxu0 0.0
          %4280 = vmatpush2.msra.mxu0 0.0
          %4281 = vmatprep.subr.mxu0 0.0
          %4282 = vmatpush2.msra.mxu0 0.0
          %4283 = vmatprep.subr.mxu0 0.0
          %4284 = vmatpush2.msra.mxu0 0.0
          %4285 = vmatprep.subr.mxu0 0.0
          %4286 = vmatpush2.msra.mxu0 0.0
          %4287 = vmatprep.subr.mxu0 0.0
          %4288 = vmatpush2.msra.mxu0 0.0
          %4289 = vmatprep.subr.mxu0 0.0
          %4290 = vmatpush2.msra.mxu0 0.0
          %4291 = vmatprep.subr.mxu0 0.0
          %4292 = vmatpush2.msra.mxu0 0.0
          %4293 = vmatprep.subr.mxu0 0.0
          %4294 = vmatpush2.msra.mxu0 0.0
          %4295 = vmatprep.subr.mxu0 0.0
          %4296 = vmatpush2.msra.mxu0 0.0
          %4297 = vmatprep.subr.mxu0 0.0
          %4298 = vmatpush2.msra.mxu0 0.0
          %4299 = vmatprep.subr.mxu0 0.0
          %4300 = vmatpush2.msra.mxu0 0.0
          %4301 = vmatprep.subr.mxu0 0.0
          %4302 = vmatpush2.msra.mxu0 0.0
          %4303 = vmatprep.subr.mxu0 0.0
          %4304 = vmatpush2.msra.mxu0 0.0
          %4305 = vmatprep.mubr.f32.mxu0 0.0
          %4306 = vmatmul.mubr.f32.gmra.mxu0 %v4064
          %v4307 = vpop.f32.mrf.mxu0
          %v4308 = vadd.f32 0.0, %v4307
          %v4309 = vpop.f32.mrf.mxu0
          %v4310 = vadd.f32 0.0, %v4309
          %4311 = vmatprep.mubr.f32.mxu0 0.0
          %4312 = vmatmul.mubr.f32.gmra.mxu0 %v4065
          %v4313 = vpop.f32.mrf.mxu0
          %v4314 = vadd.f32 0.0, %v4313
          %v4315 = vpop.f32.mrf.mxu0
          %v4316 = vadd.f32 0.0, %v4315
          %4317 = vmatprep.mubr.f32.mxu0 0.0
          %4318 = vmatmul.mubr.f32.gmra.mxu0 %v4066
          %v4319 = vpop.f32.mrf.mxu0
          %v4320 = vadd.f32 0.0, %v4319
          %v4321 = vpop.f32.mrf.mxu0
          %v4322 = vadd.f32 0.0, %v4321
          %4323 = vmatprep.mubr.f32.mxu0 0.0
          %4324 = vmatmul.mubr.f32.gmra.mxu0 %v4067
          %v4325 = vpop.f32.mrf.mxu0
          %v4326 = vadd.f32 0.0, %v4325
          %v4327 = vpop.f32.mrf.mxu0
          %v4328 = vadd.f32 0.0, %v4327
          %4329 = vmatprep.mubr.f32.mxu0 0.0
          %4330 = vmatmul.mubr.f32.gmra.mxu0 %v4068
          %v4331 = vpop.f32.mrf.mxu0
          %v4332 = vadd.f32 0.0, %v4331
          %v4333 = vpop.f32.mrf.mxu0
          %v4334 = vadd.f32 0.0, %v4333
          %4335 = vmatprep.mubr.f32.mxu0 0.0
          %4336 = vmatmul.mubr.f32.gmra.mxu0 %v4069
          %v4337 = vpop.f32.mrf.mxu0
          %v4338 = vadd.f32 0.0, %v4337
          %v4339 = vpop.f32.mrf.mxu0
          %v4340 = vadd.f32 0.0, %v4339
          %4341 = vmatprep.mubr.f32.mxu0 0.0
          %4342 = vmatmul.mubr.f32.gmra.mxu0 %v4070
          %v4343 = vpop.f32.mrf.mxu0
          %v4344 = vadd.f32 0.0, %v4343
          %v4345 = vpop.f32.mrf.mxu0
          %v4346 = vadd.f32 0.0, %v4345
          %4347 = vmatprep.mubr.f32.mxu0 0.0
          %4348 = vmatmul.mubr.f32.gmra.mxu0 %v4071
          %v4349 = vpop.f32.mrf.mxu0
          %v4350 = vadd.f32 0.0, %v4349
          %v4351 = vpop.f32.mrf.mxu0
          %v4352 = vadd.f32 0.0, %v4351
          %4353 = vmatprep.mubr.f32.mxu0 0.0
          %4354 = vmatmul.mubr.f32.gmra.mxu0 %v4072
          %v4355 = vpop.f32.mrf.mxu0
          %v4356 = vadd.f32 0.0, %v4355
          %v4357 = vpop.f32.mrf.mxu0
          %v4358 = vadd.f32 0.0, %v4357
          %4359 = vmatprep.mubr.f32.mxu0 0.0
          %4360 = vmatmul.mubr.f32.gmra.mxu0 %v4073
          %v4361 = vpop.f32.mrf.mxu0
          %v4362 = vadd.f32 0.0, %v4361
          %v4363 = vpop.f32.mrf.mxu0
          %v4364 = vadd.f32 0.0, %v4363
          %4365 = vmatprep.mubr.f32.mxu0 0.0
          %4366 = vmatmul.mubr.f32.gmra.mxu0 %v4074
          %v4367 = vpop.f32.mrf.mxu0
          %v4368 = vadd.f32 0.0, %v4367
          %v4369 = vpop.f32.mrf.mxu0
          %v4370 = vadd.f32 0.0, %v4369
          %4371 = vmatprep.mubr.f32.mxu0 0.0
          %4372 = vmatmul.mubr.f32.gmra.mxu0 %v4075
          %v4373 = vpop.f32.mrf.mxu0
          %v4374 = vadd.f32 0.0, %v4373
          %v4375 = vpop.f32.mrf.mxu0
          %v4376 = vadd.f32 0.0, %v4375
          %4377 = vmatprep.mubr.f32.mxu0 0.0
          %4378 = vmatmul.mubr.f32.gmra.mxu0 %v4076
          %v4379 = vpop.f32.mrf.mxu0
          %v4380 = vadd.f32 0.0, %v4379
          %v4381 = vpop.f32.mrf.mxu0
          %v4382 = vadd.f32 0.0, %v4381
          %4383 = vmatprep.mubr.f32.mxu0 0.0
          %4384 = vmatmul.mubr.f32.gmra.mxu0 %v4077
          %v4385 = vpop.f32.mrf.mxu0
          %v4386 = vadd.f32 0.0, %v4385
          %v4387 = vpop.f32.mrf.mxu0
          %v4388 = vadd.f32 0.0, %v4387
          %4389 = vmatprep.mubr.f32.mxu0 0.0
          %4390 = vmatmul.mubr.f32.gmra.mxu0 %v4078
          %v4391 = vpop.f32.mrf.mxu0
          %v4392 = vadd.f32 0.0, %v4391
          %v4393 = vpop.f32.mrf.mxu0
          %v4394 = vadd.f32 0.0, %v4393
          %4395 = vmatprep.mubr.f32.mxu0 0.0
          %4396 = vmatmul.mubr.f32.gmra.mxu0 %v4079
          %v4397 = vpop.f32.mrf.mxu0
          %v4398 = vadd.f32 0.0, %v4397
          %v4399 = vpop.f32.mrf.mxu0
          %v4400 = vadd.f32 0.0, %v4399
          %4401 = vdwg.mxu0
          %4402 = vmatprep.subr.mxu0 %v3769
          %4403 = vmatpush1.msra.mxu0 %v3768
          %4404 = vmatprep.subr.mxu0 %v3761
          %4405 = vmatpush1.msra.mxu0 %v3760
          %4406 = vmatprep.subr.mxu0 %v3753
          %4407 = vmatpush1.msra.mxu0 %v3752
          %4408 = vmatprep.subr.mxu0 %v3745
          %4409 = vmatpush1.msra.mxu0 %v3744
          %4410 = vmatprep.subr.mxu0 %v3737
          %4411 = vmatpush1.msra.mxu0 %v3736
          %4412 = vmatprep.subr.mxu0 %v3729
          %4413 = vmatpush1.msra.mxu0 %v3728
          %4414 = vmatprep.subr.mxu0 %v3721
          %4415 = vmatpush1.msra.mxu0 %v3720
          %4416 = vmatprep.subr.mxu0 %v3713
          %4417 = vmatpush1.msra.mxu0 %v3712
          %4418 = vmatprep.subr.mxu0 %v3705
          %4419 = vmatpush1.msra.mxu0 %v3704
          %4420 = vmatprep.subr.mxu0 %v3697
          %4421 = vmatpush1.msra.mxu0 %v3696
          %4422 = vmatprep.subr.mxu0 %v3689
          %4423 = vmatpush1.msra.mxu0 %v3688
          %4424 = vmatprep.subr.mxu0 %v3681
          %4425 = vmatpush1.msra.mxu0 %v3680
          %4426 = vmatprep.subr.mxu0 %v3673
          %4427 = vmatpush1.msra.mxu0 %v3672
          %4428 = vmatprep.subr.mxu0 %v3665
          %4429 = vmatpush1.msra.mxu0 %v3664
          %4430 = vmatprep.subr.mxu0 %v3657
          %4431 = vmatpush1.msra.mxu0 %v3656
          %4432 = vmatprep.subr.mxu0 %v3649
          %4433 = vmatpush1.msra.mxu0 %v3648
          %4434 = vmatprep.subr.mxu0 0.0
          %4435 = vmatpush2.msra.mxu0 0.0
          %4436 = vmatprep.subr.mxu0 0.0
          %4437 = vmatpush2.msra.mxu0 0.0
          %4438 = vmatprep.subr.mxu0 0.0
          %4439 = vmatpush2.msra.mxu0 0.0
          %4440 = vmatprep.subr.mxu0 0.0
          %4441 = vmatpush2.msra.mxu0 0.0
          %4442 = vmatprep.subr.mxu0 0.0
          %4443 = vmatpush2.msra.mxu0 0.0
          %4444 = vmatprep.subr.mxu0 0.0
          %4445 = vmatpush2.msra.mxu0 0.0
          %4446 = vmatprep.subr.mxu0 0.0
          %4447 = vmatpush2.msra.mxu0 0.0
          %4448 = vmatprep.subr.mxu0 0.0
          %4449 = vmatpush2.msra.mxu0 0.0
          %4450 = vmatprep.subr.mxu0 0.0
          %4451 = vmatpush2.msra.mxu0 0.0
          %4452 = vmatprep.subr.mxu0 0.0
          %4453 = vmatpush2.msra.mxu0 0.0
          %4454 = vmatprep.subr.mxu0 0.0
          %4455 = vmatpush2.msra.mxu0 0.0
          %4456 = vmatprep.subr.mxu0 0.0
          %4457 = vmatpush2.msra.mxu0 0.0
          %4458 = vmatprep.subr.mxu0 0.0
          %4459 = vmatpush2.msra.mxu0 0.0
          %4460 = vmatprep.subr.mxu0 0.0
          %4461 = vmatpush2.msra.mxu0 0.0
          %4462 = vmatprep.subr.mxu0 0.0
          %4463 = vmatpush2.msra.mxu0 0.0
          %4464 = vmatprep.subr.mxu0 0.0
          %4465 = vmatpush2.msra.mxu0 0.0
          %4466 = vmatprep.mubr.f32.mxu0 0.0
          %4467 = vmatmul.mubr.f32.gmra.mxu0 %v4064
          %v4468 = vpop.f32.mrf.mxu0
          %v4469 = vadd.f32 0.0, %v4468
          %v4470 = vpop.f32.mrf.mxu0
          %v4471 = vadd.f32 0.0, %v4470
          %4472 = vmatprep.mubr.f32.mxu0 0.0
          %4473 = vmatmul.mubr.f32.gmra.mxu0 %v4065
          %v4474 = vpop.f32.mrf.mxu0
          %v4475 = vadd.f32 0.0, %v4474
          %v4476 = vpop.f32.mrf.mxu0
          %v4477 = vadd.f32 0.0, %v4476
          %4478 = vmatprep.mubr.f32.mxu0 0.0
          %4479 = vmatmul.mubr.f32.gmra.mxu0 %v4066
          %v4480 = vpop.f32.mrf.mxu0
          %v4481 = vadd.f32 0.0, %v4480
          %v4482 = vpop.f32.mrf.mxu0
          %v4483 = vadd.f32 0.0, %v4482
          %4484 = vmatprep.mubr.f32.mxu0 0.0
          %4485 = vmatmul.mubr.f32.gmra.mxu0 %v4067
          %v4486 = vpop.f32.mrf.mxu0
          %v4487 = vadd.f32 0.0, %v4486
          %v4488 = vpop.f32.mrf.mxu0
          %v4489 = vadd.f32 0.0, %v4488
          %4490 = vmatprep.mubr.f32.mxu0 0.0
          %4491 = vmatmul.mubr.f32.gmra.mxu0 %v4068
          %v4492 = vpop.f32.mrf.mxu0
          %v4493 = vadd.f32 0.0, %v4492
          %v4494 = vpop.f32.mrf.mxu0
          %v4495 = vadd.f32 0.0, %v4494
          %4496 = vmatprep.mubr.f32.mxu0 0.0
          %4497 = vmatmul.mubr.f32.gmra.mxu0 %v4069
          %v4498 = vpop.f32.mrf.mxu0
          %v4499 = vadd.f32 0.0, %v4498
          %v4500 = vpop.f32.mrf.mxu0
          %v4501 = vadd.f32 0.0, %v4500
          %4502 = vmatprep.mubr.f32.mxu0 0.0
          %4503 = vmatmul.mubr.f32.gmra.mxu0 %v4070
          %v4504 = vpop.f32.mrf.mxu0
          %v4505 = vadd.f32 0.0, %v4504
          %v4506 = vpop.f32.mrf.mxu0
          %v4507 = vadd.f32 0.0, %v4506
          %4508 = vmatprep.mubr.f32.mxu0 0.0
          %4509 = vmatmul.mubr.f32.gmra.mxu0 %v4071
          %v4510 = vpop.f32.mrf.mxu0
          %v4511 = vadd.f32 0.0, %v4510
          %v4512 = vpop.f32.mrf.mxu0
          %v4513 = vadd.f32 0.0, %v4512
          %4514 = vmatprep.mubr.f32.mxu0 0.0
          %4515 = vmatmul.mubr.f32.gmra.mxu0 %v4072
          %v4516 = vpop.f32.mrf.mxu0
          %v4517 = vadd.f32 0.0, %v4516
          %v4518 = vpop.f32.mrf.mxu0
          %v4519 = vadd.f32 0.0, %v4518
          %4520 = vmatprep.mubr.f32.mxu0 0.0
          %4521 = vmatmul.mubr.f32.gmra.mxu0 %v4073
          %v4522 = vpop.f32.mrf.mxu0
          %v4523 = vadd.f32 0.0, %v4522
          %v4524 = vpop.f32.mrf.mxu0
          %v4525 = vadd.f32 0.0, %v4524
          %4526 = vmatprep.mubr.f32.mxu0 0.0
          %4527 = vmatmul.mubr.f32.gmra.mxu0 %v4074
          %v4528 = vpop.f32.mrf.mxu0
          %v4529 = vadd.f32 0.0, %v4528
          %v4530 = vpop.f32.mrf.mxu0
          %v4531 = vadd.f32 0.0, %v4530
          %4532 = vmatprep.mubr.f32.mxu0 0.0
          %4533 = vmatmul.mubr.f32.gmra.mxu0 %v4075
          %v4534 = vpop.f32.mrf.mxu0
          %v4535 = vadd.f32 0.0, %v4534
          %v4536 = vpop.f32.mrf.mxu0
          %v4537 = vadd.f32 0.0, %v4536
          %4538 = vmatprep.mubr.f32.mxu0 0.0
          %4539 = vmatmul.mubr.f32.gmra.mxu0 %v4076
          %v4540 = vpop.f32.mrf.mxu0
          %v4541 = vadd.f32 0.0, %v4540
          %v4542 = vpop.f32.mrf.mxu0
          %v4543 = vadd.f32 0.0, %v4542
          %4544 = vmatprep.mubr.f32.mxu0 0.0
          %4545 = vmatmul.mubr.f32.gmra.mxu0 %v4077
          %v4546 = vpop.f32.mrf.mxu0
          %v4547 = vadd.f32 0.0, %v4546
          %v4548 = vpop.f32.mrf.mxu0
          %v4549 = vadd.f32 0.0, %v4548
          %4550 = vmatprep.mubr.f32.mxu0 0.0
          %4551 = vmatmul.mubr.f32.gmra.mxu0 %v4078
          %v4552 = vpop.f32.mrf.mxu0
          %v4553 = vadd.f32 0.0, %v4552
          %v4554 = vpop.f32.mrf.mxu0
          %v4555 = vadd.f32 0.0, %v4554
          %4556 = vmatprep.mubr.f32.mxu0 0.0
          %4557 = vmatmul.mubr.f32.gmra.mxu0 %v4079
          %v4558 = vpop.f32.mrf.mxu0
          %v4559 = vadd.f32 0.0, %v4558
          %v4560 = vpop.f32.mrf.mxu0
          %v4561 = vadd.f32 0.0, %v4560
          %4562 = vdwg.mxu0
          %4563 = vmatprep.subr.mxu0 %v3771
          %4564 = vmatpush1.msra.mxu0 %v3770
          %4565 = vmatprep.subr.mxu0 %v3763
          %4566 = vmatpush1.msra.mxu0 %v3762
          %4567 = vmatprep.subr.mxu0 %v3755
          %4568 = vmatpush1.msra.mxu0 %v3754
          %4569 = vmatprep.subr.mxu0 %v3747
          %4570 = vmatpush1.msra.mxu0 %v3746
          %4571 = vmatprep.subr.mxu0 %v3739
          %4572 = vmatpush1.msra.mxu0 %v3738
          %4573 = vmatprep.subr.mxu0 %v3731
          %4574 = vmatpush1.msra.mxu0 %v3730
          %4575 = vmatprep.subr.mxu0 %v3723
          %4576 = vmatpush1.msra.mxu0 %v3722
          %4577 = vmatprep.subr.mxu0 %v3715
          %4578 = vmatpush1.msra.mxu0 %v3714
          %4579 = vmatprep.subr.mxu0 %v3707
          %4580 = vmatpush1.msra.mxu0 %v3706
          %4581 = vmatprep.subr.mxu0 %v3699
          %4582 = vmatpush1.msra.mxu0 %v3698
          %4583 = vmatprep.subr.mxu0 %v3691
          %4584 = vmatpush1.msra.mxu0 %v3690
          %4585 = vmatprep.subr.mxu0 %v3683
          %4586 = vmatpush1.msra.mxu0 %v3682
          %4587 = vmatprep.subr.mxu0 %v3675
          %4588 = vmatpush1.msra.mxu0 %v3674
          %4589 = vmatprep.subr.mxu0 %v3667
          %4590 = vmatpush1.msra.mxu0 %v3666
          %4591 = vmatprep.subr.mxu0 %v3659
          %4592 = vmatpush1.msra.mxu0 %v3658
          %4593 = vmatprep.subr.mxu0 %v3651
          %4594 = vmatpush1.msra.mxu0 %v3650
          %4595 = vmatprep.subr.mxu0 0.0
          %4596 = vmatpush2.msra.mxu0 0.0
          %4597 = vmatprep.subr.mxu0 0.0
          %4598 = vmatpush2.msra.mxu0 0.0
          %4599 = vmatprep.subr.mxu0 0.0
          %4600 = vmatpush2.msra.mxu0 0.0
          %4601 = vmatprep.subr.mxu0 0.0
          %4602 = vmatpush2.msra.mxu0 0.0
          %4603 = vmatprep.subr.mxu0 0.0
          %4604 = vmatpush2.msra.mxu0 0.0
          %4605 = vmatprep.subr.mxu0 0.0
          %4606 = vmatpush2.msra.mxu0 0.0
          %4607 = vmatprep.subr.mxu0 0.0
          %4608 = vmatpush2.msra.mxu0 0.0
          %4609 = vmatprep.subr.mxu0 0.0
          %4610 = vmatpush2.msra.mxu0 0.0
          %4611 = vmatprep.subr.mxu0 0.0
          %4612 = vmatpush2.msra.mxu0 0.0
          %4613 = vmatprep.subr.mxu0 0.0
          %4614 = vmatpush2.msra.mxu0 0.0
          %4615 = vmatprep.subr.mxu0 0.0
          %4616 = vmatpush2.msra.mxu0 0.0
          %4617 = vmatprep.subr.mxu0 0.0
          %4618 = vmatpush2.msra.mxu0 0.0
          %4619 = vmatprep.subr.mxu0 0.0
          %4620 = vmatpush2.msra.mxu0 0.0
          %4621 = vmatprep.subr.mxu0 0.0
          %4622 = vmatpush2.msra.mxu0 0.0
          %4623 = vmatprep.subr.mxu0 0.0
          %4624 = vmatpush2.msra.mxu0 0.0
          %4625 = vmatprep.subr.mxu0 0.0
          %4626 = vmatpush2.msra.mxu0 0.0
          %4627 = vmatprep.mubr.f32.mxu0 0.0
          %4628 = vmatmul.mubr.f32.gmra.mxu0 %v4064
          %v4629 = vpop.f32.mrf.mxu0
          %v4630 = vadd.f32 0.0, %v4629
          %v4631 = vpop.f32.mrf.mxu0
          %v4632 = vadd.f32 0.0, %v4631
          %4633 = vmatprep.mubr.f32.mxu0 0.0
          %4634 = vmatmul.mubr.f32.gmra.mxu0 %v4065
          %v4635 = vpop.f32.mrf.mxu0
          %v4636 = vadd.f32 0.0, %v4635
          %v4637 = vpop.f32.mrf.mxu0
          %v4638 = vadd.f32 0.0, %v4637
          %4639 = vmatprep.mubr.f32.mxu0 0.0
          %4640 = vmatmul.mubr.f32.gmra.mxu0 %v4066
          %v4641 = vpop.f32.mrf.mxu0
          %v4642 = vadd.f32 0.0, %v4641
          %v4643 = vpop.f32.mrf.mxu0
          %v4644 = vadd.f32 0.0, %v4643
          %4645 = vmatprep.mubr.f32.mxu0 0.0
          %4646 = vmatmul.mubr.f32.gmra.mxu0 %v4067
          %v4647 = vpop.f32.mrf.mxu0
          %v4648 = vadd.f32 0.0, %v4647
          %v4649 = vpop.f32.mrf.mxu0
          %v4650 = vadd.f32 0.0, %v4649
          %4651 = vmatprep.mubr.f32.mxu0 0.0
          %4652 = vmatmul.mubr.f32.gmra.mxu0 %v4068
          %v4653 = vpop.f32.mrf.mxu0
          %v4654 = vadd.f32 0.0, %v4653
          %v4655 = vpop.f32.mrf.mxu0
          %v4656 = vadd.f32 0.0, %v4655
          %4657 = vmatprep.mubr.f32.mxu0 0.0
          %4658 = vmatmul.mubr.f32.gmra.mxu0 %v4069
          %v4659 = vpop.f32.mrf.mxu0
          %v4660 = vadd.f32 0.0, %v4659
          %v4661 = vpop.f32.mrf.mxu0
          %v4662 = vadd.f32 0.0, %v4661
          %4663 = vmatprep.mubr.f32.mxu0 0.0
          %4664 = vmatmul.mubr.f32.gmra.mxu0 %v4070
          %v4665 = vpop.f32.mrf.mxu0
          %v4666 = vadd.f32 0.0, %v4665
          %v4667 = vpop.f32.mrf.mxu0
          %v4668 = vadd.f32 0.0, %v4667
          %4669 = vmatprep.mubr.f32.mxu0 0.0
          %4670 = vmatmul.mubr.f32.gmra.mxu0 %v4071
          %v4671 = vpop.f32.mrf.mxu0
          %v4672 = vadd.f32 0.0, %v4671
          %v4673 = vpop.f32.mrf.mxu0
          %v4674 = vadd.f32 0.0, %v4673
          %4675 = vmatprep.mubr.f32.mxu0 0.0
          %4676 = vmatmul.mubr.f32.gmra.mxu0 %v4072
          %v4677 = vpop.f32.mrf.mxu0
          %v4678 = vadd.f32 0.0, %v4677
          %v4679 = vpop.f32.mrf.mxu0
          %v4680 = vadd.f32 0.0, %v4679
          %4681 = vmatprep.mubr.f32.mxu0 0.0
          %4682 = vmatmul.mubr.f32.gmra.mxu0 %v4073
          %v4683 = vpop.f32.mrf.mxu0
          %v4684 = vadd.f32 0.0, %v4683
          %v4685 = vpop.f32.mrf.mxu0
          %v4686 = vadd.f32 0.0, %v4685
          %4687 = vmatprep.mubr.f32.mxu0 0.0
          %4688 = vmatmul.mubr.f32.gmra.mxu0 %v4074
          %v4689 = vpop.f32.mrf.mxu0
          %v4690 = vadd.f32 0.0, %v4689
          %v4691 = vpop.f32.mrf.mxu0
          %v4692 = vadd.f32 0.0, %v4691
          %4693 = vmatprep.mubr.f32.mxu0 0.0
          %4694 = vmatmul.mubr.f32.gmra.mxu0 %v4075
          %v4695 = vpop.f32.mrf.mxu0
          %v4696 = vadd.f32 0.0, %v4695
          %v4697 = vpop.f32.mrf.mxu0
          %v4698 = vadd.f32 0.0, %v4697
          %4699 = vmatprep.mubr.f32.mxu0 0.0
          %4700 = vmatmul.mubr.f32.gmra.mxu0 %v4076
          %v4701 = vpop.f32.mrf.mxu0
          %v4702 = vadd.f32 0.0, %v4701
          %v4703 = vpop.f32.mrf.mxu0
          %v4704 = vadd.f32 0.0, %v4703
          %4705 = vmatprep.mubr.f32.mxu0 0.0
          %4706 = vmatmul.mubr.f32.gmra.mxu0 %v4077
          %v4707 = vpop.f32.mrf.mxu0
          %v4708 = vadd.f32 0.0, %v4707
          %v4709 = vpop.f32.mrf.mxu0
          %v4710 = vadd.f32 0.0, %v4709
          %4711 = vmatprep.mubr.f32.mxu0 0.0
          %4712 = vmatmul.mubr.f32.gmra.mxu0 %v4078
          %v4713 = vpop.f32.mrf.mxu0
          %v4714 = vadd.f32 0.0, %v4713
          %v4715 = vpop.f32.mrf.mxu0
          %v4716 = vadd.f32 0.0, %v4715
          %4717 = vmatprep.mubr.f32.mxu0 0.0
          %4718 = vmatmul.mubr.f32.gmra.mxu0 %v4079
          %v4719 = vpop.f32.mrf.mxu0
          %v4720 = vadd.f32 0.0, %v4719
          %v4721 = vpop.f32.mrf.mxu0
          %v4722 = vadd.f32 0.0, %v4721
          %4723 = vdwg.mxu0
          %v4724 = vmul.f32 %v3644, %v4147
          %v4725 = vmul.f32 %v3645, %v4149
          %v4726 = vmul.f32 %v3646, %v4308
          %v4727 = vmul.f32 %v3647, %v4310
          %v4728 = vmul.f32 %v3648, %v4469
          %v4729 = vmul.f32 %v3649, %v4471
          %v4730 = vmul.f32 %v3650, %v4630
          %v4731 = vmul.f32 %v3651, %v4632
          %v4732 = vmul.f32 %v3652, %v4153
          %v4733 = vmul.f32 %v3653, %v4155
          %v4734 = vmul.f32 %v3654, %v4314
          %v4735 = vmul.f32 %v3655, %v4316
          %v4736 = vmul.f32 %v3656, %v4475
          %v4737 = vmul.f32 %v3657, %v4477
          %v4738 = vmul.f32 %v3658, %v4636
          %v4739 = vmul.f32 %v3659, %v4638
          %v4740 = vmul.f32 %v3660, %v4159
          %v4741 = vmul.f32 %v3661, %v4161
          %v4742 = vmul.f32 %v3662, %v4320
          %v4743 = vmul.f32 %v3663, %v4322
          %v4744 = vmul.f32 %v3664, %v4481
          %v4745 = vmul.f32 %v3665, %v4483
          %v4746 = vmul.f32 %v3666, %v4642
          %v4747 = vmul.f32 %v3667, %v4644
          %v4748 = vmul.f32 %v3668, %v4165
          %v4749 = vmul.f32 %v3669, %v4167
          %v4750 = vmul.f32 %v3670, %v4326
          %v4751 = vmul.f32 %v3671, %v4328
          %v4752 = vmul.f32 %v3672, %v4487
          %v4753 = vmul.f32 %v3673, %v4489
          %v4754 = vmul.f32 %v3674, %v4648
          %v4755 = vmul.f32 %v3675, %v4650
          %v4756 = vmul.f32 %v3676, %v4171
          %v4757 = vmul.f32 %v3677, %v4173
          %v4758 = vmul.f32 %v3678, %v4332
          %v4759 = vmul.f32 %v3679, %v4334
          %v4760 = vmul.f32 %v3680, %v4493
          %v4761 = vmul.f32 %v3681, %v4495
          %v4762 = vmul.f32 %v3682, %v4654
          %v4763 = vmul.f32 %v3683, %v4656
          %v4764 = vmul.f32 %v3684, %v4177
          %v4765 = vmul.f32 %v3685, %v4179
          %v4766 = vmul.f32 %v3686, %v4338
          %v4767 = vmul.f32 %v3687, %v4340
          %v4768 = vmul.f32 %v3688, %v4499
          %v4769 = vmul.f32 %v3689, %v4501
          %v4770 = vmul.f32 %v3690, %v4660
          %v4771 = vmul.f32 %v3691, %v4662
          %v4772 = vmul.f32 %v3692, %v4183
          %v4773 = vmul.f32 %v3693, %v4185
          %v4774 = vmul.f32 %v3694, %v4344
          %v4775 = vmul.f32 %v3695, %v4346
          %v4776 = vmul.f32 %v3696, %v4505
          %v4777 = vmul.f32 %v3697, %v4507
          %v4778 = vmul.f32 %v3698, %v4666
          %v4779 = vmul.f32 %v3699, %v4668
          %v4780 = vmul.f32 %v3700, %v4189
          %v4781 = vmul.f32 %v3701, %v4191
          %v4782 = vmul.f32 %v3702, %v4350
          %v4783 = vmul.f32 %v3703, %v4352
          %v4784 = vmul.f32 %v3704, %v4511
          %v4785 = vmul.f32 %v3705, %v4513
          %v4786 = vmul.f32 %v3706, %v4672
          %v4787 = vmul.f32 %v3707, %v4674
          %v4788 = vmul.f32 %v3708, %v4195
          %v4789 = vmul.f32 %v3709, %v4197
          %v4790 = vmul.f32 %v3710, %v4356
          %v4791 = vmul.f32 %v3711, %v4358
          %v4792 = vmul.f32 %v3712, %v4517
          %v4793 = vmul.f32 %v3713, %v4519
          %v4794 = vmul.f32 %v3714, %v4678
          %v4795 = vmul.f32 %v3715, %v4680
          %v4796 = vmul.f32 %v3716, %v4201
          %v4797 = vmul.f32 %v3717, %v4203
          %v4798 = vmul.f32 %v3718, %v4362
          %v4799 = vmul.f32 %v3719, %v4364
          %v4800 = vmul.f32 %v3720, %v4523
          %v4801 = vmul.f32 %v3721, %v4525
          %v4802 = vmul.f32 %v3722, %v4684
          %v4803 = vmul.f32 %v3723, %v4686
          %v4804 = vmul.f32 %v3724, %v4207
          %v4805 = vmul.f32 %v3725, %v4209
          %v4806 = vmul.f32 %v3726, %v4368
          %v4807 = vmul.f32 %v3727, %v4370
          %v4808 = vmul.f32 %v3728, %v4529
          %v4809 = vmul.f32 %v3729, %v4531
          %v4810 = vmul.f32 %v3730, %v4690
          %v4811 = vmul.f32 %v3731, %v4692
          %v4812 = vmul.f32 %v3732, %v4213
          %v4813 = vmul.f32 %v3733, %v4215
          %v4814 = vmul.f32 %v3734, %v4374
          %v4815 = vmul.f32 %v3735, %v4376
          %v4816 = vmul.f32 %v3736, %v4535
          %v4817 = vmul.f32 %v3737, %v4537
          %v4818 = vmul.f32 %v3738, %v4696
          %v4819 = vmul.f32 %v3739, %v4698
          %v4820 = vmul.f32 %v3740, %v4219
          %v4821 = vmul.f32 %v3741, %v4221
          %v4822 = vmul.f32 %v3742, %v4380
          %v4823 = vmul.f32 %v3743, %v4382
          %v4824 = vmul.f32 %v3744, %v4541
          %v4825 = vmul.f32 %v3745, %v4543
          %v4826 = vmul.f32 %v3746, %v4702
          %v4827 = vmul.f32 %v3747, %v4704
          %v4828 = vmul.f32 %v3748, %v4225
          %v4829 = vmul.f32 %v3749, %v4227
          %v4830 = vmul.f32 %v3750, %v4386
          %v4831 = vmul.f32 %v3751, %v4388
          %v4832 = vmul.f32 %v3752, %v4547
          %v4833 = vmul.f32 %v3753, %v4549
          %v4834 = vmul.f32 %v3754, %v4708
          %v4835 = vmul.f32 %v3755, %v4710
          %v4836 = vmul.f32 %v3756, %v4231
          %v4837 = vmul.f32 %v3757, %v4233
          %v4838 = vmul.f32 %v3758, %v4392
          %v4839 = vmul.f32 %v3759, %v4394
          %v4840 = vmul.f32 %v3760, %v4553
          %v4841 = vmul.f32 %v3761, %v4555
          %v4842 = vmul.f32 %v3762, %v4714
          %v4843 = vmul.f32 %v3763, %v4716
          %v4844 = vmul.f32 %v3764, %v4237
          %v4845 = vmul.f32 %v3765, %v4239
          %v4846 = vmul.f32 %v3766, %v4398
          %v4847 = vmul.f32 %v3767, %v4400
          %v4848 = vmul.f32 %v3768, %v4559
          %v4849 = vmul.f32 %v3769, %v4561
          %v4850 = vmul.f32 %v3770, %v4720
          %v4851 = vmul.f32 %v3771, %v4722
          %v4852 = vadd.f32 %v4724, %v4732
          %v4853 = vadd.f32 %v4852, %v4740
          %v4854 = vadd.f32 %v4853, %v4748
          %v4855 = vadd.f32 %v4854, %v4756
          %v4856 = vadd.f32 %v4855, %v4764
          %v4857 = vadd.f32 %v4856, %v4772
          %v4858 = vadd.f32 %v4857, %v4780
          %v4859 = vadd.f32 %v4858, %v4788
          %v4860 = vadd.f32 %v4859, %v4796
          %v4861 = vadd.f32 %v4860, %v4804
          %v4862 = vadd.f32 %v4861, %v4812
          %v4863 = vadd.f32 %v4862, %v4820
          %v4864 = vadd.f32 %v4863, %v4828
          %v4865 = vadd.f32 %v4864, %v4836
          %v4866 = vadd.f32 %v4865, %v4844
          %v4867 = vrot.slane %v4866, 4
          %v4868 = vadd.f32 %v4866, %v4867
          %v4869 = vrot.slane %v4868, 2
          %v4870 = vadd.f32 %v4868, %v4869
          %v4871 = vrot.slane %v4870, 1
          %v4872 = vadd.f32 %v4870, %v4871
          %v4873 = vadd.f32 %v4725, %v4733
          %v4874 = vadd.f32 %v4873, %v4741
          %v4875 = vadd.f32 %v4874, %v4749
          %v4876 = vadd.f32 %v4875, %v4757
          %v4877 = vadd.f32 %v4876, %v4765
          %v4878 = vadd.f32 %v4877, %v4773
          %v4879 = vadd.f32 %v4878, %v4781
          %v4880 = vadd.f32 %v4879, %v4789
          %v4881 = vadd.f32 %v4880, %v4797
          %v4882 = vadd.f32 %v4881, %v4805
          %v4883 = vadd.f32 %v4882, %v4813
          %v4884 = vadd.f32 %v4883, %v4821
          %v4885 = vadd.f32 %v4884, %v4829
          %v4886 = vadd.f32 %v4885, %v4837
          %v4887 = vadd.f32 %v4886, %v4845
          %v4888 = vrot.slane %v4887, 4
          %v4889 = vadd.f32 %v4887, %v4888
          %v4890 = vrot.slane %v4889, 2
          %v4891 = vadd.f32 %v4889, %v4890
          %v4892 = vrot.slane %v4891, 1
          %v4893 = vadd.f32 %v4891, %v4892
          %v4894 = vadd.f32 %v4726, %v4734
          %v4895 = vadd.f32 %v4894, %v4742
          %v4896 = vadd.f32 %v4895, %v4750
          %v4897 = vadd.f32 %v4896, %v4758
          %v4898 = vadd.f32 %v4897, %v4766
          %v4899 = vadd.f32 %v4898, %v4774
          %v4900 = vadd.f32 %v4899, %v4782
          %v4901 = vadd.f32 %v4900, %v4790
          %v4902 = vadd.f32 %v4901, %v4798
          %v4903 = vadd.f32 %v4902, %v4806
          %v4904 = vadd.f32 %v4903, %v4814
          %v4905 = vadd.f32 %v4904, %v4822
          %v4906 = vadd.f32 %v4905, %v4830
          %v4907 = vadd.f32 %v4906, %v4838
          %v4908 = vadd.f32 %v4907, %v4846
          %v4909 = vrot.slane %v4908, 4
          %v4910 = vadd.f32 %v4908, %v4909
          %v4911 = vrot.slane %v4910, 2
          %v4912 = vadd.f32 %v4910, %v4911
          %v4913 = vrot.slane %v4912, 1
          %v4914 = vadd.f32 %v4912, %v4913
          %v4915 = vadd.f32 %v4727, %v4735
          %v4916 = vadd.f32 %v4915, %v4743
          %v4917 = vadd.f32 %v4916, %v4751
          %v4918 = vadd.f32 %v4917, %v4759
          %v4919 = vadd.f32 %v4918, %v4767
          %v4920 = vadd.f32 %v4919, %v4775
          %v4921 = vadd.f32 %v4920, %v4783
          %v4922 = vadd.f32 %v4921, %v4791
          %v4923 = vadd.f32 %v4922, %v4799
          %v4924 = vadd.f32 %v4923, %v4807
          %v4925 = vadd.f32 %v4924, %v4815
          %v4926 = vadd.f32 %v4925, %v4823
          %v4927 = vadd.f32 %v4926, %v4831
          %v4928 = vadd.f32 %v4927, %v4839
          %v4929 = vadd.f32 %v4928, %v4847
          %v4930 = vrot.slane %v4929, 4
          %v4931 = vadd.f32 %v4929, %v4930
          %v4932 = vrot.slane %v4931, 2
          %v4933 = vadd.f32 %v4931, %v4932
          %v4934 = vrot.slane %v4933, 1
          %v4935 = vadd.f32 %v4933, %v4934
          %v4936 = vadd.f32 %v4728, %v4736
          %v4937 = vadd.f32 %v4936, %v4744
          %v4938 = vadd.f32 %v4937, %v4752
          %v4939 = vadd.f32 %v4938, %v4760
          %v4940 = vadd.f32 %v4939, %v4768
          %v4941 = vadd.f32 %v4940, %v4776
          %v4942 = vadd.f32 %v4941, %v4784
          %v4943 = vadd.f32 %v4942, %v4792
          %v4944 = vadd.f32 %v4943, %v4800
          %v4945 = vadd.f32 %v4944, %v4808
          %v4946 = vadd.f32 %v4945, %v4816
          %v4947 = vadd.f32 %v4946, %v4824
          %v4948 = vadd.f32 %v4947, %v4832
          %v4949 = vadd.f32 %v4948, %v4840
          %v4950 = vadd.f32 %v4949, %v4848
          %v4951 = vrot.slane %v4950, 4
          %v4952 = vadd.f32 %v4950, %v4951
          %v4953 = vrot.slane %v4952, 2
          %v4954 = vadd.f32 %v4952, %v4953
          %v4955 = vrot.slane %v4954, 1
          %v4956 = vadd.f32 %v4954, %v4955
          %v4957 = vadd.f32 %v4729, %v4737
          %v4958 = vadd.f32 %v4957, %v4745
          %v4959 = vadd.f32 %v4958, %v4753
          %v4960 = vadd.f32 %v4959, %v4761
          %v4961 = vadd.f32 %v4960, %v4769
          %v4962 = vadd.f32 %v4961, %v4777
          %v4963 = vadd.f32 %v4962, %v4785
          %v4964 = vadd.f32 %v4963, %v4793
          %v4965 = vadd.f32 %v4964, %v4801
          %v4966 = vadd.f32 %v4965, %v4809
          %v4967 = vadd.f32 %v4966, %v4817
          %v4968 = vadd.f32 %v4967, %v4825
          %v4969 = vadd.f32 %v4968, %v4833
          %v4970 = vadd.f32 %v4969, %v4841
          %v4971 = vadd.f32 %v4970, %v4849
          %v4972 = vrot.slane %v4971, 4
          %v4973 = vadd.f32 %v4971, %v4972
          %v4974 = vrot.slane %v4973, 2
          %v4975 = vadd.f32 %v4973, %v4974
          %v4976 = vrot.slane %v4975, 1
          %v4977 = vadd.f32 %v4975, %v4976
          %v4978 = vadd.f32 %v4730, %v4738
          %v4979 = vadd.f32 %v4978, %v4746
          %v4980 = vadd.f32 %v4979, %v4754
          %v4981 = vadd.f32 %v4980, %v4762
          %v4982 = vadd.f32 %v4981, %v4770
          %v4983 = vadd.f32 %v4982, %v4778
          %v4984 = vadd.f32 %v4983, %v4786
          %v4985 = vadd.f32 %v4984, %v4794
          %v4986 = vadd.f32 %v4985, %v4802
          %v4987 = vadd.f32 %v4986, %v4810
          %v4988 = vadd.f32 %v4987, %v4818
          %v4989 = vadd.f32 %v4988, %v4826
          %v4990 = vadd.f32 %v4989, %v4834
          %v4991 = vadd.f32 %v4990, %v4842
          %v4992 = vadd.f32 %v4991, %v4850
          %v4993 = vrot.slane %v4992, 4
          %v4994 = vadd.f32 %v4992, %v4993
          %v4995 = vrot.slane %v4994, 2
          %v4996 = vadd.f32 %v4994, %v4995
          %v4997 = vrot.slane %v4996, 1
          %v4998 = vadd.f32 %v4996, %v4997
          %v4999 = vadd.f32 %v4731, %v4739
          %v5000 = vadd.f32 %v4999, %v4747
          %v5001 = vadd.f32 %v5000, %v4755
          %v5002 = vadd.f32 %v5001, %v4763
          %v5003 = vadd.f32 %v5002, %v4771
          %v5004 = vadd.f32 %v5003, %v4779
          %v5005 = vadd.f32 %v5004, %v4787
          %v5006 = vadd.f32 %v5005, %v4795
          %v5007 = vadd.f32 %v5006, %v4803
          %v5008 = vadd.f32 %v5007, %v4811
          %v5009 = vadd.f32 %v5008, %v4819
          %v5010 = vadd.f32 %v5009, %v4827
          %v5011 = vadd.f32 %v5010, %v4835
          %v5012 = vadd.f32 %v5011, %v4843
          %v5013 = vadd.f32 %v5012, %v4851
          %v5014 = vrot.slane %v5013, 4
          %v5015 = vadd.f32 %v5013, %v5014
          %v5016 = vrot.slane %v5015, 2
          %v5017 = vadd.f32 %v5015, %v5016
          %v5018 = vrot.slane %v5017, 1
          %v5019 = vadd.f32 %v5017, %v5018
          %v5020 = vmul.f32 %v4872, 0.0009765625
          %v5021 = vmul.f32 %v4893, 0.0009765625
          %v5022 = vmul.f32 %v4914, 0.0009765625
          %v5023 = vmul.f32 %v4935, 0.0009765625
          %v5024 = vmul.f32 %v4956, 0.0009765625
          %v5025 = vmul.f32 %v4977, 0.0009765625
          %v5026 = vmul.f32 %v4998, 0.0009765625
          %v5027 = vmul.f32 %v5019, 0.0009765625
          %v5028 = vmul.f32 %v3847, %v3847
          %v5029 = vmul.f32 %v3849, %v3849
          %v5030 = vmul.f32 %v3918, %v3918
          %v5031 = vmul.f32 %v3920, %v3920
          %v5032 = vmul.f32 %v3989, %v3989
          %v5033 = vmul.f32 %v3991, %v3991
          %v5034 = vmul.f32 %v4060, %v4060
          %v5035 = vmul.f32 %v4062, %v4062
          %v5036 = vsub.f32 %v5020, %v5028
          %v5037 = vsub.f32 %v5021, %v5029
          %v5038 = vsub.f32 %v5022, %v5030
          %v5039 = vsub.f32 %v5023, %v5031
          %v5040 = vsub.f32 %v5024, %v5032
          %v5041 = vsub.f32 %v5025, %v5033
          %v5042 = vsub.f32 %v5026, %v5034
          %v5043 = vsub.f32 %v5027, %v5035
          %v5044 = vmax.f32 %v5036, 0.0
          %v5045 = vmax.f32 %v5037, 0.0
          %v5046 = vmax.f32 %v5038, 0.0
          %v5047 = vmax.f32 %v5039, 0.0
          %v5048 = vmax.f32 %v5040, 0.0
          %v5049 = vmax.f32 %v5041, 0.0
          %v5050 = vmax.f32 %v5042, 0.0
          %v5051 = vmax.f32 %v5043, 0.0
          %v5052 = vld [vmem:[%s8] sm:$0xff]
          %v5053 = vadd.f32 %v5044, 1e-05
          %v5054 = vadd.f32 %v5045, 1e-05
          %v5055 = vadd.f32 %v5046, 1e-05
          %v5056 = vadd.f32 %v5047, 1e-05
          %v5057 = vadd.f32 %v5048, 1e-05
          %v5058 = vadd.f32 %v5049, 1e-05
          %v5059 = vadd.f32 %v5050, 1e-05
          %v5060 = vadd.f32 %v5051, 1e-05
          %v5061 = vrsqrt.pop %v5053
          %v5062 = vrsqrt.pop %v5054
          %v5063 = vrsqrt.pop %v5055
          %v5064 = vrsqrt.pop %v5056
          %v5065 = vrsqrt.pop %v5057
          %v5066 = vrsqrt.pop %v5058
          %v5067 = vrsqrt.pop %v5059
          %v5068 = vrsqrt.pop %v5060
          %v5077 = vcombine.low %v5061, %v5062
          %v5078 = vcombine.low %v5063, %v5064
          %v5079 = vcombine.low %v5065, %v5066
          %v5080 = vcombine.low %v5067, %v5068
          %v5082 = vunpack.c.l.s4 1966171168
          %v5083 = vunpack.c.0.s8 %v5082
          %v5084 = vlaneseq
          %v5085 = vshrl.u32 %v5084, 7
          %v5086 = vsub.s32 %v5083, %v5085
          %v5087 = vrot.slane %v5077, %v5086
          %v5089 = vunpack.c.l.s4 1966171168
          %v5090 = vunpack.c.0.s8 %v5089
          %v5091 = vlaneseq
          %v5092 = vshrl.u32 %v5091, 7
          %v5093 = vsub.s32 %v5090, %v5092
          %v5094 = vrot.slane %v5078, %v5093
          %v5096 = vunpack.c.l.s4 1966171168
          %v5097 = vunpack.c.0.s8 %v5096
          %v5098 = vlaneseq
          %v5099 = vshrl.u32 %v5098, 7
          %v5100 = vsub.s32 %v5097, %v5099
          %v5101 = vrot.slane %v5079, %v5100
          %v5103 = vunpack.c.l.s4 1966171168
          %v5104 = vunpack.c.0.s8 %v5103
          %v5105 = vlaneseq
          %v5106 = vshrl.u32 %v5105, 7
          %v5107 = vsub.s32 %v5104, %v5106
          %v5108 = vrot.slane %v5080, %v5107
          %v5109 = vcombine.low %v5087, %v5094
          %v5110 = vcombine.low %v5101, %v5108
          %v5112 = vunpack.c.l.s4 1966171168
          %v5113 = vunpack.c.0.s8 %v5112
          %v5114 = vlaneseq
          %v5115 = vshrl.u32 %v5114, 7
          %v5116 = vsub.s32 %v5113, %v5115
          %v5117 = vrot.slane %v5109, %v5116
          %v5119 = vunpack.c.l.s4 1966171168
          %v5120 = vunpack.c.0.s8 %v5119
          %v5121 = vlaneseq
          %v5122 = vshrl.u32 %v5121, 7
          %v5123 = vsub.s32 %v5120, %v5122
          %v5124 = vrot.slane %v5110, %v5123
          %v5125 = vcombine.low %v5117, %v5124
          %v5127 = vmul.f32 %v5052, %v5125
          %v5128 = vld [vmem:[%s9] sm:$0xff]
          %v5130 = vlaneseq
          %v5131 = vshrl.u32 %v5130, 7
          %v5132 = vsub.s32 0, %v5131
          %v5133 = vrot.slane %v5127, %v5132
          %v5134 = vlaneseq
          %v5135 = vshrl.u32 %v5134, 7
          %v5136 = vsub.s32 1, %v5135
          %v5137 = vrot.slane %v5127, %v5136
          %v5138 = vlaneseq
          %v5139 = vshrl.u32 %v5138, 7
          %v5140 = vsub.s32 2, %v5139
          %v5141 = vrot.slane %v5127, %v5140
          %v5142 = vlaneseq
          %v5143 = vshrl.u32 %v5142, 7
          %v5144 = vsub.s32 3, %v5143
          %v5145 = vrot.slane %v5127, %v5144
          %v5146 = vlaneseq
          %v5147 = vshrl.u32 %v5146, 7
          %v5148 = vsub.s32 4, %v5147
          %v5149 = vrot.slane %v5127, %v5148
          %v5150 = vlaneseq
          %v5151 = vshrl.u32 %v5150, 7
          %v5152 = vsub.s32 5, %v5151
          %v5153 = vrot.slane %v5127, %v5152
          %v5154 = vlaneseq
          %v5155 = vshrl.u32 %v5154, 7
          %v5156 = vsub.s32 6, %v5155
          %v5157 = vrot.slane %v5127, %v5156
          %v5158 = vlaneseq
          %v5159 = vshrl.u32 %v5158, 7
          %v5160 = vsub.s32 7, %v5159
          %v5161 = vrot.slane %v5127, %v5160
          %v5170 = vmul.f32 %v3847, %v5133
          %v5171 = vmul.f32 %v3849, %v5137
          %v5172 = vmul.f32 %v3918, %v5141
          %v5173 = vmul.f32 %v3920, %v5145
          %v5174 = vmul.f32 %v3989, %v5149
          %v5175 = vmul.f32 %v3991, %v5153
          %v5176 = vmul.f32 %v4060, %v5157
          %v5177 = vmul.f32 %v4062, %v5161
          %v5186 = vcombine.low %v5170, %v5171
          %v5187 = vcombine.low %v5172, %v5173
          %v5188 = vcombine.low %v5174, %v5175
          %v5189 = vcombine.low %v5176, %v5177
          %v5191 = vunpack.c.l.s4 1966171168
          %v5192 = vunpack.c.0.s8 %v5191
          %v5193 = vlaneseq
          %v5194 = vshrl.u32 %v5193, 7
          %v5195 = vsub.s32 %v5192, %v5194
          %v5196 = vrot.slane %v5186, %v5195
          %v5198 = vunpack.c.l.s4 1966171168
          %v5199 = vunpack.c.0.s8 %v5198
          %v5200 = vlaneseq
          %v5201 = vshrl.u32 %v5200, 7
          %v5202 = vsub.s32 %v5199, %v5201
          %v5203 = vrot.slane %v5187, %v5202
          %v5205 = vunpack.c.l.s4 1966171168
          %v5206 = vunpack.c.0.s8 %v5205
          %v5207 = vlaneseq
          %v5208 = vshrl.u32 %v5207, 7
          %v5209 = vsub.s32 %v5206, %v5208
          %v5210 = vrot.slane %v5188, %v5209
          %v5212 = vunpack.c.l.s4 1966171168
          %v5213 = vunpack.c.0.s8 %v5212
          %v5214 = vlaneseq
          %v5215 = vshrl.u32 %v5214, 7
          %v5216 = vsub.s32 %v5213, %v5215
          %v5217 = vrot.slane %v5189, %v5216
          %v5218 = vcombine.low %v5196, %v5203
          %v5219 = vcombine.low %v5210, %v5217
          %v5221 = vunpack.c.l.s4 1966171168
          %v5222 = vunpack.c.0.s8 %v5221
          %v5223 = vlaneseq
          %v5224 = vshrl.u32 %v5223, 7
          %v5225 = vsub.s32 %v5222, %v5224
          %v5226 = vrot.slane %v5218, %v5225
          %v5228 = vunpack.c.l.s4 1966171168
          %v5229 = vunpack.c.0.s8 %v5228
          %v5230 = vlaneseq
          %v5231 = vshrl.u32 %v5230, 7
          %v5232 = vsub.s32 %v5229, %v5231
          %v5233 = vrot.slane %v5219, %v5232
          %v5234 = vcombine.low %v5226, %v5233
          %v5236 = vsub.f32 %v5128, %v5234
          %v5237 = vld [vmem:[#allocation12] sm:$0xff]
          %v5238 = vld [vmem:[#allocation12 + $0x8] sm:$0xff]
          %v5239 = vcombine.low %v5133, %v5137
          %v5240 = vcombine.low %v5141, %v5145
          %v5242 = vunpack.c.l.s4 1983009808
          %v5243 = vunpack.c.0.s8 %v5242
          %v5244 = vlaneseq
          %v5245 = vshrl.u32 %v5244, 7
          %v5246 = vsub.s32 %v5243, %v5245
          %v5247 = vrot.slane %v5239, %v5246
          %v5249 = vunpack.c.l.s4 1983009808
          %v5250 = vunpack.c.0.s8 %v5249
          %v5251 = vlaneseq
          %v5252 = vshrl.u32 %v5251, 7
          %v5253 = vsub.s32 %v5250, %v5252
          %v5254 = vrot.slane %v5240, %v5253
          %v5255 = vcombine.low %v5247, %v5254
          %v5256 = vcombine.low %v5149, %v5153
          %v5257 = vcombine.low %v5157, %v5161
          %v5259 = vunpack.c.l.s4 1983009808
          %v5260 = vunpack.c.0.s8 %v5259
          %v5261 = vlaneseq
          %v5262 = vshrl.u32 %v5261, 7
          %v5263 = vsub.s32 %v5260, %v5262
          %v5264 = vrot.slane %v5256, %v5263
          %v5266 = vunpack.c.l.s4 1983009808
          %v5267 = vunpack.c.0.s8 %v5266
          %v5268 = vlaneseq
          %v5269 = vshrl.u32 %v5268, 7
          %v5270 = vsub.s32 %v5267, %v5269
          %v5271 = vrot.slane %v5257, %v5270
          %v5272 = vcombine.low %v5264, %v5271
          %v5275 = vmul.f32 %v5237, %v5255
          %v5276 = vmul.f32 %v5238, %v5272
          %v5278 = vlaneseq
          %v5279 = vshrl.u32 %v5278, 7
          %v5280 = vsub.s32 0, %v5279
          %v5281 = vrot.slane %v5236, %v5280
          %v5282 = vlaneseq
          %v5283 = vshrl.u32 %v5282, 7
          %v5284 = vsub.s32 1, %v5283
          %v5285 = vrot.slane %v5236, %v5284
          %v5286 = vlaneseq
          %v5287 = vshrl.u32 %v5286, 7
          %v5288 = vsub.s32 2, %v5287
          %v5289 = vrot.slane %v5236, %v5288
          %v5290 = vlaneseq
          %v5291 = vshrl.u32 %v5290, 7
          %v5292 = vsub.s32 3, %v5291
          %v5293 = vrot.slane %v5236, %v5292
          %v5294 = vlaneseq
          %v5295 = vshrl.u32 %v5294, 7
          %v5296 = vsub.s32 4, %v5295
          %v5297 = vrot.slane %v5236, %v5296
          %v5298 = vlaneseq
          %v5299 = vshrl.u32 %v5298, 7
          %v5300 = vsub.s32 5, %v5299
          %v5301 = vrot.slane %v5236, %v5300
          %v5302 = vlaneseq
          %v5303 = vshrl.u32 %v5302, 7
          %v5304 = vsub.s32 6, %v5303
          %v5305 = vrot.slane %v5236, %v5304
          %v5306 = vlaneseq
          %v5307 = vshrl.u32 %v5306, 7
          %v5308 = vsub.s32 7, %v5307
          %v5309 = vrot.slane %v5236, %v5308
          %v5310 = vcombine.low %v5281, %v5285
          %v5311 = vcombine.low %v5289, %v5293
          %v5313 = vunpack.c.l.s4 1983009808
          %v5314 = vunpack.c.0.s8 %v5313
          %v5315 = vlaneseq
          %v5316 = vshrl.u32 %v5315, 7
          %v5317 = vsub.s32 %v5314, %v5316
          %v5318 = vrot.slane %v5310, %v5317
          %v5320 = vunpack.c.l.s4 1983009808
          %v5321 = vunpack.c.0.s8 %v5320
          %v5322 = vlaneseq
          %v5323 = vshrl.u32 %v5322, 7
          %v5324 = vsub.s32 %v5321, %v5323
          %v5325 = vrot.slane %v5311, %v5324
          %v5326 = vcombine.low %v5318, %v5325
          %v5327 = vcombine.low %v5297, %v5301
          %v5328 = vcombine.low %v5305, %v5309
          %v5330 = vunpack.c.l.s4 1983009808
          %v5331 = vunpack.c.0.s8 %v5330
          %v5332 = vlaneseq
          %v5333 = vshrl.u32 %v5332, 7
          %v5334 = vsub.s32 %v5331, %v5333
          %v5335 = vrot.slane %v5327, %v5334
          %v5337 = vunpack.c.l.s4 1983009808
          %v5338 = vunpack.c.0.s8 %v5337
          %v5339 = vlaneseq
          %v5340 = vshrl.u32 %v5339, 7
          %v5341 = vsub.s32 %v5338, %v5340
          %v5342 = vrot.slane %v5328, %v5341
          %v5343 = vcombine.low %v5335, %v5342
          %v5346 = vadd.f32 %v5275, %v5326
          %v5347 = vadd.f32 %v5276, %v5343
          %5348 = vst [vmem:[#allocation13] sm:$0xff] %v5346
          %5349 = vst [vmem:[#allocation13 + $0x8] sm:$0xff] %v5347
        $region88: #{tpu_custom_call.1} parent=59 // pred_fallthru
          _
        // Predicated region
        $region89: #{tpu_custom_call.1} parent=59 // pred_check
          %p5350 = pneg %p273
        $region90: #{tpu_custom_call.1} parent=59 // pred_check_branch
          %5352 = sbr.rel (%p5350) target = $region92
        $region91: #{tpu_custom_call.1} parent=59 // pred_region
          %s5354 = ssub.s32 256, 256
          %5355 = vsyncadd [#allocation14], %s5354
          %s5357 = sshll.u32 [#allocation13], 4
          %s5358 = int_to_ptr.vmem [resolvable:$true] %s5357
          %5360 = dma.vmem_to_hbm [thread:$0]  %s5358, 256, %s10, [#allocation14]
        $region92: #{tpu_custom_call.1} parent=59 // pred_fallthru
          _
        // Predicated region
        $region93: #{tpu_custom_call.1} parent=59 // pred_check
          %p5361 = pneg %p273
        $region94: #{tpu_custom_call.1} parent=59 // pred_check_branch
          %5363 = sbr.rel (%p5361) target = $region96
        $region95: #{tpu_custom_call.1} parent=59 // pred_region
          %5364 = dma.done [#allocation14], 256
        $region96: #{tpu_custom_call.1} parent=59 // pred_fallthru
          _
      $region60: #{tpu_custom_call.1} parent=5 // pred_fallthru
        _
      %p5365 = scmp.le.s32.totalorder 2, %s17
      // Predicated region
      $region97: #{tpu_custom_call.1} parent=5 // pred_check
        %p5366 = pneg %p5365
      $region98: #{tpu_custom_call.1} parent=5 // pred_check_branch
        %5368 = sbr.rel (%p5366) target = $region100
      $region99: #{tpu_custom_call.1} parent=5 // pred_region
        %s5369 = ssub.s32 %s17, 2
      $region100: #{tpu_custom_call.1} parent=5 // pred_fallthru
        _
    $region6: #{tpu_custom_call.1} parent=1 // loop_footer
      %s21 = sadd.s32 1, %s17
    $region7: #{tpu_custom_call.1} parent=1 // loop_footer_branch
      %16 = sbr.rel target = $region3
    $region8: #{tpu_custom_call.1} parent=1 // loop_exit
      _
    %5370 = vsyncpa [#allocation14], 1
    %s5371 = scalar_lea.sflag [#allocation14], 1
    %5372 = vsyncpa %s5371, 1

</llo_original>
